<compile_context>
chip_gen: v7x
topology: tpu7x:2x2x1
jax: 0.10.0
libtpu: 0.0.40
codegen_flags: <defaults>
</compile_context>

<pallas_src>
import jax
import jax.numpy as jnp
from jax.experimental import pallas as pl
from jax.experimental.pallas import tpu as pltpu


# ----------------------------- Pallas kernel ------------------------------ #
def _conv3x3_pass(xpad_ref, w_ref, b_ref, pass_idx, C, H):
    """One folded 3x3 conv + bias + ReLU over the padded scratch.

    xpad_ref : VMEM ref, (C, H+2, Lp) f32.  Lp = NB*(W+2); each sample owns a
               (W+2)-wide lane slot whose first/last lane (and rows 0, H+1)
               are zero -> conv 'SAME' padding and sample isolation for free.
    w_ref    : SMEM ref, flat f32 weights [((p*C+co)*C+ci)*9 + ky*3 + kx].
    b_ref    : SMEM ref, flat f32 biases  [p*C + co].
    Returns C planes of shape (H, Lp), post bias+ReLU.  Halo-lane positions
    hold garbage that callers must never read back.
    """
    Lp = xpad_ref.shape[-1]
    w_base = pass_idx * C * C * 9
    accs = [None] * C
    for ci in range(C):                           # ci-outer: small live set
        for ky in range(3):
            # Sublane-aligned, full-lane-width row slab (ky = dy shift).
            slab = xpad_ref[ci, ky:ky + H, :]
            # dx shifts via XLU lane rolls (halo lanes provide the zeros,
            # so no masks are needed; shift Lp-1 == roll by -1).
            for kx, shift in ((0, 1), (1, 0), (2, Lp - 1)):
                tap = slab if shift == 0 else pltpu.roll(slab, shift=shift, axis=1)
                k = ky * 3 + kx
                for co in range(C):
                    w = w_ref[w_base + (co * C + ci) * 9 + k]   # SMEM scalar
                    term = w * tap                               # scalar*plane (VPU)
                    accs[co] = term if accs[co] is None else accs[co] + term
    outs = []
    for co in range(C):
        b = b_ref[pass_idx * C + co]
        outs.append(jnp.maximum(accs[co] + b, 0.0))              # bias fused w/ ReLU
    return outs


def _recurrent_block_kernel(x_ref, w_ref, b_ref, out_ref, xpad_ref):
    NB, C, H, W = x_ref.shape
    WS = W + 2
    Lp = xpad_ref.shape[-1]

    # ---- Stage the samples into the padded scratch; zero only the halo
    # strips (the interior is fully overwritten every step).
    zrow = jnp.zeros((C, 1, Lp), jnp.float32)
    xpad_ref[:, 0:1, :] = zrow                                   # top halo row
    xpad_ref[:, H + 1:H + 2, :] = zrow                           # bottom halo row
    zcol = jnp.zeros((C, H + 2, 1), jnp.float32)
    for s in range(NB):
        base = s * WS
        xpad_ref[:, :, base:base + 1] = zcol                     # left halo col
        xpad_ref[:, :, base + W + 1:base + W + 2] = zcol         # right halo col
        xpad_ref[:, 1:H + 1, base + 1:base + 1 + W] = x_ref[s].astype(jnp.float32)

    # ---- Pass 1: x1 = relu(BN(conv(x)))  (BN folded into w/b).
    y1 = _conv3x3_pass(xpad_ref, w_ref, b_ref, 0, C, H)

    # ---- Pass-2 staging: input is (x1 + x1); the factor 2 is folded into the
    # pass-2 weights, so write x1 back to the interior rows with one fat
    # full-width store per channel, then restore the per-sample halo columns
    # so the rolled taps stay mask-free.
    for co in range(C):
        xpad_ref[co, 1:H + 1, :] = y1[co]
    zcol_i = jnp.zeros((C, H, 1), jnp.float32)
    for s in range(NB):
        base = s * WS
        xpad_ref[:, 1:H + 1, base:base + 1] = zcol_i
        xpad_ref[:, 1:H + 1, base + W + 1:base + W + 2] = zcol_i

    # ---- Pass 2 + store at full padded lane width (wrapper strips halos).
    y2 = _conv3x3_pass(xpad_ref, w_ref, b_ref, 1, C, H)
    for co in range(C):
        out_ref[0, co] = y2[co].astype(out_ref.dtype)


def _samples_per_step(n):
    # Pack several samples per grid step (lane axis = nb*(W+2)) to amortize
    # per-step overhead and fatten every vector op / store.  At the demo size
    # (N=2) the whole batch is one step; at larger N this gives nb=8 and a
    # grid >= 2 so both v7x TensorCores get work.
    for nb in (8, 4, 2, 1):
        if n % nb == 0:
            return nb
    return 1


def _recurrent_block_pallas(x, w_flat, b_flat):
    N, C, H, W = x.shape
    nb = _samples_per_step(N)
    WS = W + 2
    Lp = nb * WS
    G = N // nb

    y_pad = pl.pallas_call(
        _recurrent_block_kernel,
        out_shape=jax.ShapeDtypeStruct((G, C, H, Lp), x.dtype),
        grid_spec=pltpu.PrefetchScalarGridSpec(
            num_scalar_prefetch=0,
            grid=(G,),
            in_specs=[
                pl.BlockSpec((nb, C, H, W), lambda g: (g, 0, 0, 0)),   # samples
                pl.BlockSpec(memory_space=pltpu.MemorySpace.SMEM),     # weights
                pl.BlockSpec(memory_space=pltpu.MemorySpace.SMEM),     # biases
            ],
            out_specs=pl.BlockSpec((1, C, H, Lp), lambda g: (g, 0, 0, 0)),
            scratch_shapes=[pltpu.VMEM((C, H + 2, Lp), jnp.float32)],
        ),
        compiler_params=pltpu.CompilerParams(
            dimension_semantics=("parallel",)),
    )(x, w_flat, b_flat)

    # Strip the per-sample halo lanes and unpack samples (cheap XLA reshapes).
    y = y_pad.reshape(G, C, H, nb, WS)[..., 1:W + 1]         # (G, C, H, nb, W)
    y = jnp.transpose(y, (0, 3, 1, 2, 4)).reshape(N, C, H, W)
    return y


# ------------------------------ Module glue ------------------------------- #
def make_params(key, out_ch):
    """Deterministic synthetic params matching Recurrent_block's conv block."""
    ks = jax.random.split(key, 6)
    p = {
        "conv_w": jax.random.normal(ks[0], (out_ch, out_ch, 3, 3)) * 0.2,
        "conv_b": jax.random.normal(ks[1], (out_ch,)) * 0.1,
        "bn_gamma": 1.0 + 0.1 * jax.random.normal(ks[2], (out_ch,)),
        "bn_beta": 0.05 * jax.random.normal(ks[3], (out_ch,)),
        "bn_mean": 0.1 * jax.random.normal(ks[4], (out_ch,)),
        "bn_var": 1.0 + 0.1 * jax.random.uniform(ks[5], (out_ch,)),
    }
    return jax.tree.map(lambda a: jnp.asarray(a, jnp.float32), p)


def fold_params(p, eps=1e-5):
    """Fold conv bias + eval-mode BatchNorm into effective weights/bias."""
    s = p["bn_gamma"] / jnp.sqrt(p["bn_var"] + eps)        # per-out-channel scale
    w_eff = p["conv_w"] * s[:, None, None, None]           # (O, I, 3, 3)
    b_eff = (p["conv_b"] - p["bn_mean"]) * s + p["bn_beta"]
    return w_eff, b_eff


@jax.jit
def recurrent_block(x, params):
    """Forward pass matching Recurrent_block.forward (t>=1, BN eval mode)."""
    w_eff, b_eff = fold_params(params)
    # Pass-1 weights, then pass-2 weights with the (x1 + x1) factor 2 folded in.
    w_flat = jnp.concatenate([w_eff.reshape(-1), (2.0 * w_eff).reshape(-1)])
    b_flat = jnp.concatenate([b_eff, b_eff])
    return _recurrent_block_pallas(x, w_flat, b_flat)


def recurrent_block_ref(x, params):
    """Pure-JAX reference for validation."""
    w_eff, b_eff = fold_params(params)

    def conv_bn_relu(z):
        y = jax.lax.conv_general_dilated(
            z, w_eff, window_strides=(1, 1), padding="SAME",
            dimension_numbers=("NCHW", "OIHW", "NCHW"))
        return jnp.maximum(y + b_eff[None, :, None, None], 0.0)

    x1 = conv_bn_relu(x)
    return conv_bn_relu(x1 + x1)


if __name__ == "__main__":
    # Small shapes consistent with the module: N=2, out_ch=4, H=W=16, t=2.
    N, C, H, W = 2, 4, 16, 16

    key = jax.random.PRNGKey(0)
    kx, kp = jax.random.split(key)
    x = jax.random.normal(kx, (N, C, H, W), jnp.float32)
    params = make_params(kp, C)

    out = jax.block_until_ready(recurrent_block(x, params))

    ref = recurrent_block_ref(x, params)
    assert out.shape == (N, C, H, W)
    assert jnp.allclose(out, ref, atol=1e-4, rtol=1e-4), "mismatch vs reference"

    print("KERNEL_OK")
</pallas_src>

<mosaic_0001>
module attributes {stable_mosaic.version = 11 : i64} {
  func.func @_recurrent_block_kernel(%arg0: i32, %arg1: memref<2x4x16x16xf32, #tpu.memory_space<vmem>>, %arg2: memref<288xf32, #tpu.memory_space<smem>>, %arg3: memref<8xf32, #tpu.memory_space<smem>>, %arg4: memref<1x4x16x36xf32, #tpu.memory_space<vmem>>, %arg5: memref<4x18x36xf32, #tpu.memory_space<vmem>>) attributes {dimension_semantics = [#tpu.dimension_semantics<parallel>], iteration_bounds = array<i64: 1>, scalar_prefetch = 0 : i64, scratch_operands = 1 : i64, tpu.core_type = #tpu.core_type<tc>, window_params = [{transform_indices = @transform_0, window_bounds = array<i64: 2, 4, 16, 16>}, {transform_indices = @transform_1, window_bounds = array<i64: 288>}, {transform_indices = @transform_2, window_bounds = array<i64: 8>}, {transform_indices = @transform_3, window_bounds = array<i64: 1, 4, 16, 36>}]} {
    %cst = arith.constant 0.000000e+00 : f32
    %0 = vector.broadcast %cst : f32 to vector<4x1x36xf32>
    %c0 = arith.constant 0 : index
    %c0_0 = arith.constant 0 : index
    %c0_1 = arith.constant 0 : index
    %1 = vector.load %arg5[%c0, %c0_0, %c0_1] : memref<4x18x36xf32, #tpu.memory_space<vmem>>, vector<4x1x36xf32>
    tpu.vector_store %arg5[%c0, %c0_0, %c0_1], %0 {strides = array<i32>} : memref<4x18x36xf32, #tpu.memory_space<vmem>>, vector<4x1x36xf32>,
    %c0_2 = arith.constant 0 : index
    %c17 = arith.constant 17 : index
    %c0_3 = arith.constant 0 : index
    %2 = vector.load %arg5[%c0_2, %c17, %c0_3] : memref<4x18x36xf32, #tpu.memory_space<vmem>>, vector<4x1x36xf32>
    tpu.vector_store %arg5[%c0_2, %c17, %c0_3], %0 {strides = array<i32>} : memref<4x18x36xf32, #tpu.memory_space<vmem>>, vector<4x1x36xf32>,
    %cst_4 = arith.constant 0.000000e+00 : f32
    %3 = vector.broadcast %cst_4 : f32 to vector<4x18x1xf32>
    %c0_5 = arith.constant 0 : index
    %c0_6 = arith.constant 0 : index
    %c0_7 = arith.constant 0 : index
    %4 = vector.load %arg5[%c0_5, %c0_6, %c0_7] : memref<4x18x36xf32, #tpu.memory_space<vmem>>, vector<4x18x1xf32>
    tpu.vector_store %arg5[%c0_5, %c0_6, %c0_7], %3 {strides = array<i32>} : memref<4x18x36xf32, #tpu.memory_space<vmem>>, vector<4x18x1xf32>,
    %c0_8 = arith.constant 0 : index
    %c0_9 = arith.constant 0 : index
    %c17_10 = arith.constant 17 : index
    %5 = vector.load %arg5[%c0_8, %c0_9, %c17_10] : memref<4x18x36xf32, #tpu.memory_space<vmem>>, vector<4x18x1xf32>
    tpu.vector_store %arg5[%c0_8, %c0_9, %c17_10], %3 {strides = array<i32>} : memref<4x18x36xf32, #tpu.memory_space<vmem>>, vector<4x18x1xf32>,
    %c0_11 = arith.constant 0 : index
    %c0_12 = arith.constant 0 : index
    %c0_13 = arith.constant 0 : index
    %c0_14 = arith.constant 0 : index
    %6 = vector.load %arg1[%c0_11, %c0_12, %c0_13, %c0_14] : memref<2x4x16x16xf32, #tpu.memory_space<vmem>>, vector<1x4x16x16xf32>
    %7 = vector.shape_cast %6 : vector<1x4x16x16xf32> to vector<4x16x16xf32>
    %c0_15 = arith.constant 0 : index
    %c1 = arith.constant 1 : index
    %c1_16 = arith.constant 1 : index
    %8 = vector.load %arg5[%c0_15, %c1, %c1_16] : memref<4x18x36xf32, #tpu.memory_space<vmem>>, vector<4x16x16xf32>
    tpu.vector_store %arg5[%c0_15, %c1, %c1_16], %7 {strides = array<i32>} : memref<4x18x36xf32, #tpu.memory_space<vmem>>, vector<4x16x16xf32>,
    %c0_17 = arith.constant 0 : index
    %c0_18 = arith.constant 0 : index
    %c18 = arith.constant 18 : index
    %9 = vector.load %arg5[%c0_17, %c0_18, %c18] : memref<4x18x36xf32, #tpu.memory_space<vmem>>, vector<4x18x1xf32>
    tpu.vector_store %arg5[%c0_17, %c0_18, %c18], %3 {strides = array<i32>} : memref<4x18x36xf32, #tpu.memory_space<vmem>>, vector<4x18x1xf32>,
    %c0_19 = arith.constant 0 : index
    %c0_20 = arith.constant 0 : index
    %c35 = arith.constant 35 : index
    %10 = vector.load %arg5[%c0_19, %c0_20, %c35] : memref<4x18x36xf32, #tpu.memory_space<vmem>>, vector<4x18x1xf32>
    tpu.vector_store %arg5[%c0_19, %c0_20, %c35], %3 {strides = array<i32>} : memref<4x18x36xf32, #tpu.memory_space<vmem>>, vector<4x18x1xf32>,
    %c1_21 = arith.constant 1 : index
    %c0_22 = arith.constant 0 : index
    %c0_23 = arith.constant 0 : index
    %c0_24 = arith.constant 0 : index
    %11 = vector.load %arg1[%c1_21, %c0_22, %c0_23, %c0_24] : memref<2x4x16x16xf32, #tpu.memory_space<vmem>>, vector<1x4x16x16xf32>
    %12 = vector.shape_cast %11 : vector<1x4x16x16xf32> to vector<4x16x16xf32>
    %c0_25 = arith.constant 0 : index
    %c1_26 = arith.constant 1 : index
    %c19 = arith.constant 19 : index
    %13 = vector.load %arg5[%c0_25, %c1_26, %c19] : memref<4x18x36xf32, #tpu.memory_space<vmem>>, vector<4x16x16xf32>
    tpu.vector_store %arg5[%c0_25, %c1_26, %c19], %12 {strides = array<i32>} : memref<4x18x36xf32, #tpu.memory_space<vmem>>, vector<4x16x16xf32>,
    %c0_27 = arith.constant 0 : index
    %c0_28 = arith.constant 0 : index
    %c0_29 = arith.constant 0 : index
    %14 = vector.load %arg5[%c0_27, %c0_28, %c0_29] : memref<4x18x36xf32, #tpu.memory_space<vmem>>, vector<1x16x36xf32>
    %15 = vector.shape_cast %14 : vector<1x16x36xf32> to vector<16x36xf32>
    %c1_i32 = arith.constant 1 : i32
    %16 = tpu.dynamic_rotate %15 by %c1_i32 dim 1 : vector<16x36xf32>, i32 -> vector<16x36xf32>
    %c0_30 = arith.constant 0 : index
    %17 = memref.load %arg2[%c0_30] : memref<288xf32, #tpu.memory_space<smem>>
    %18 = vector.broadcast %17 : f32 to vector<16x36xf32>
    %19 = arith.mulf %18, %16 : vector<16x36xf32>
    %c36 = arith.constant 36 : index
    %20 = memref.load %arg2[%c36] : memref<288xf32, #tpu.memory_space<smem>>
    %21 = vector.broadcast %20 : f32 to vector<16x36xf32>
    %22 = arith.mulf %21, %16 : vector<16x36xf32>
    %c72 = arith.constant 72 : index
    %23 = memref.load %arg2[%c72] : memref<288xf32, #tpu.memory_space<smem>>
    %24 = vector.broadcast %23 : f32 to vector<16x36xf32>
    %25 = arith.mulf %24, %16 : vector<16x36xf32>
    %c108 = arith.constant 108 : index
    %26 = memref.load %arg2[%c108] : memref<288xf32, #tpu.memory_space<smem>>
    %27 = vector.broadcast %26 : f32 to vector<16x36xf32>
    %28 = arith.mulf %27, %16 : vector<16x36xf32>
    %c1_31 = arith.constant 1 : index
    %29 = memref.load %arg2[%c1_31] : memref<288xf32, #tpu.memory_space<smem>>
    %30 = vector.broadcast %29 : f32 to vector<16x36xf32>
    %31 = arith.mulf %30, %15 : vector<16x36xf32>
    %32 = arith.addf %19, %31 : vector<16x36xf32>
    %c37 = arith.constant 37 : index
    %33 = memref.load %arg2[%c37] : memref<288xf32, #tpu.memory_space<smem>>
    %34 = vector.broadcast %33 : f32 to vector<16x36xf32>
    %35 = arith.mulf %34, %15 : vector<16x36xf32>
    %36 = arith.addf %22, %35 : vector<16x36xf32>
    %c73 = arith.constant 73 : index
    %37 = memref.load %arg2[%c73] : memref<288xf32, #tpu.memory_space<smem>>
    %38 = vector.broadcast %37 : f32 to vector<16x36xf32>
    %39 = arith.mulf %38, %15 : vector<16x36xf32>
    %40 = arith.addf %25, %39 : vector<16x36xf32>
    %c109 = arith.constant 109 : index
    %41 = memref.load %arg2[%c109] : memref<288xf32, #tpu.memory_space<smem>>
    %42 = vector.broadcast %41 : f32 to vector<16x36xf32>
    %43 = arith.mulf %42, %15 : vector<16x36xf32>
    %44 = arith.addf %28, %43 : vector<16x36xf32>
    %c35_i32 = arith.constant 35 : i32
    %45 = tpu.dynamic_rotate %15 by %c35_i32 dim 1 : vector<16x36xf32>, i32 -> vector<16x36xf32>
    %c2 = arith.constant 2 : index
    %46 = memref.load %arg2[%c2] : memref<288xf32, #tpu.memory_space<smem>>
    %47 = vector.broadcast %46 : f32 to vector<16x36xf32>
    %48 = arith.mulf %47, %45 : vector<16x36xf32>
    %49 = arith.addf %32, %48 : vector<16x36xf32>
    %c38 = arith.constant 38 : index
    %50 = memref.load %arg2[%c38] : memref<288xf32, #tpu.memory_space<smem>>
    %51 = vector.broadcast %50 : f32 to vector<16x36xf32>
    %52 = arith.mulf %51, %45 : vector<16x36xf32>
    %53 = arith.addf %36, %52 : vector<16x36xf32>
    %c74 = arith.constant 74 : index
    %54 = memref.load %arg2[%c74] : memref<288xf32, #tpu.memory_space<smem>>
    %55 = vector.broadcast %54 : f32 to vector<16x36xf32>
    %56 = arith.mulf %55, %45 : vector<16x36xf32>
    %57 = arith.addf %40, %56 : vector<16x36xf32>
    %c110 = arith.constant 110 : index
    %58 = memref.load %arg2[%c110] : memref<288xf32, #tpu.memory_space<smem>>
    %59 = vector.broadcast %58 : f32 to vector<16x36xf32>
    %60 = arith.mulf %59, %45 : vector<16x36xf32>
    %61 = arith.addf %44, %60 : vector<16x36xf32>
    %c0_32 = arith.constant 0 : index
    %c1_33 = arith.constant 1 : index
    %c0_34 = arith.constant 0 : index
    %62 = vector.load %arg5[%c0_32, %c1_33, %c0_34] : memref<4x18x36xf32, #tpu.memory_space<vmem>>, vector<1x16x36xf32>
    %63 = vector.shape_cast %62 : vector<1x16x36xf32> to vector<16x36xf32>
    %c1_i32_35 = arith.constant 1 : i32
    %64 = tpu.dynamic_rotate %63 by %c1_i32_35 dim 1 : vector<16x36xf32>, i32 -> vector<16x36xf32>
    %c3 = arith.constant 3 : index
    %65 = memref.load %arg2[%c3] : memref<288xf32, #tpu.memory_space<smem>>
    %66 = vector.broadcast %65 : f32 to vector<16x36xf32>
    %67 = arith.mulf %66, %64 : vector<16x36xf32>
    %68 = arith.addf %49, %67 : vector<16x36xf32>
    %c39 = arith.constant 39 : index
    %69 = memref.load %arg2[%c39] : memref<288xf32, #tpu.memory_space<smem>>
    %70 = vector.broadcast %69 : f32 to vector<16x36xf32>
    %71 = arith.mulf %70, %64 : vector<16x36xf32>
    %72 = arith.addf %53, %71 : vector<16x36xf32>
    %c75 = arith.constant 75 : index
    %73 = memref.load %arg2[%c75] : memref<288xf32, #tpu.memory_space<smem>>
    %74 = vector.broadcast %73 : f32 to vector<16x36xf32>
    %75 = arith.mulf %74, %64 : vector<16x36xf32>
    %76 = arith.addf %57, %75 : vector<16x36xf32>
    %c111 = arith.constant 111 : index
    %77 = memref.load %arg2[%c111] : memref<288xf32, #tpu.memory_space<smem>>
    %78 = vector.broadcast %77 : f32 to vector<16x36xf32>
    %79 = arith.mulf %78, %64 : vector<16x36xf32>
    %80 = arith.addf %61, %79 : vector<16x36xf32>
    %c4 = arith.constant 4 : index
    %81 = memref.load %arg2[%c4] : memref<288xf32, #tpu.memory_space<smem>>
    %82 = vector.broadcast %81 : f32 to vector<16x36xf32>
    %83 = arith.mulf %82, %63 : vector<16x36xf32>
    %84 = arith.addf %68, %83 : vector<16x36xf32>
    %c40 = arith.constant 40 : index
    %85 = memref.load %arg2[%c40] : memref<288xf32, #tpu.memory_space<smem>>
    %86 = vector.broadcast %85 : f32 to vector<16x36xf32>
    %87 = arith.mulf %86, %63 : vector<16x36xf32>
    %88 = arith.addf %72, %87 : vector<16x36xf32>
    %c76 = arith.constant 76 : index
    %89 = memref.load %arg2[%c76] : memref<288xf32, #tpu.memory_space<smem>>
    %90 = vector.broadcast %89 : f32 to vector<16x36xf32>
    %91 = arith.mulf %90, %63 : vector<16x36xf32>
    %92 = arith.addf %76, %91 : vector<16x36xf32>
    %c112 = arith.constant 112 : index
    %93 = memref.load %arg2[%c112] : memref<288xf32, #tpu.memory_space<smem>>
    %94 = vector.broadcast %93 : f32 to vector<16x36xf32>
    %95 = arith.mulf %94, %63 : vector<16x36xf32>
    %96 = arith.addf %80, %95 : vector<16x36xf32>
    %c35_i32_36 = arith.constant 35 : i32
    %97 = tpu.dynamic_rotate %63 by %c35_i32_36 dim 1 : vector<16x36xf32>, i32 -> vector<16x36xf32>
    %c5 = arith.constant 5 : index
    %98 = memref.load %arg2[%c5] : memref<288xf32, #tpu.memory_space<smem>>
    %99 = vector.broadcast %98 : f32 to vector<16x36xf32>
    %100 = arith.mulf %99, %97 : vector<16x36xf32>
    %101 = arith.addf %84, %100 : vector<16x36xf32>
    %c41 = arith.constant 41 : index
    %102 = memref.load %arg2[%c41] : memref<288xf32, #tpu.memory_space<smem>>
    %103 = vector.broadcast %102 : f32 to vector<16x36xf32>
    %104 = arith.mulf %103, %97 : vector<16x36xf32>
    %105 = arith.addf %88, %104 : vector<16x36xf32>
    %c77 = arith.constant 77 : index
    %106 = memref.load %arg2[%c77] : memref<288xf32, #tpu.memory_space<smem>>
    %107 = vector.broadcast %106 : f32 to vector<16x36xf32>
    %108 = arith.mulf %107, %97 : vector<16x36xf32>
    %109 = arith.addf %92, %108 : vector<16x36xf32>
    %c113 = arith.constant 113 : index
    %110 = memref.load %arg2[%c113] : memref<288xf32, #tpu.memory_space<smem>>
    %111 = vector.broadcast %110 : f32 to vector<16x36xf32>
    %112 = arith.mulf %111, %97 : vector<16x36xf32>
    %113 = arith.addf %96, %112 : vector<16x36xf32>
    %c0_37 = arith.constant 0 : index
    %c2_38 = arith.constant 2 : index
    %c0_39 = arith.constant 0 : index
    %114 = vector.load %arg5[%c0_37, %c2_38, %c0_39] : memref<4x18x36xf32, #tpu.memory_space<vmem>>, vector<1x16x36xf32>
    %115 = vector.shape_cast %114 : vector<1x16x36xf32> to vector<16x36xf32>
    %c1_i32_40 = arith.constant 1 : i32
    %116 = tpu.dynamic_rotate %115 by %c1_i32_40 dim 1 : vector<16x36xf32>, i32 -> vector<16x36xf32>
    %c6 = arith.constant 6 : index
    %117 = memref.load %arg2[%c6] : memref<288xf32, #tpu.memory_space<smem>>
    %118 = vector.broadcast %117 : f32 to vector<16x36xf32>
    %119 = arith.mulf %118, %116 : vector<16x36xf32>
    %120 = arith.addf %101, %119 : vector<16x36xf32>
    %c42 = arith.constant 42 : index
    %121 = memref.load %arg2[%c42] : memref<288xf32, #tpu.memory_space<smem>>
    %122 = vector.broadcast %121 : f32 to vector<16x36xf32>
    %123 = arith.mulf %122, %116 : vector<16x36xf32>
    %124 = arith.addf %105, %123 : vector<16x36xf32>
    %c78 = arith.constant 78 : index
    %125 = memref.load %arg2[%c78] : memref<288xf32, #tpu.memory_space<smem>>
    %126 = vector.broadcast %125 : f32 to vector<16x36xf32>
    %127 = arith.mulf %126, %116 : vector<16x36xf32>
    %128 = arith.addf %109, %127 : vector<16x36xf32>
    %c114 = arith.constant 114 : index
    %129 = memref.load %arg2[%c114] : memref<288xf32, #tpu.memory_space<smem>>
    %130 = vector.broadcast %129 : f32 to vector<16x36xf32>
    %131 = arith.mulf %130, %116 : vector<16x36xf32>
    %132 = arith.addf %113, %131 : vector<16x36xf32>
    %c7 = arith.constant 7 : index
    %133 = memref.load %arg2[%c7] : memref<288xf32, #tpu.memory_space<smem>>
    %134 = vector.broadcast %133 : f32 to vector<16x36xf32>
    %135 = arith.mulf %134, %115 : vector<16x36xf32>
    %136 = arith.addf %120, %135 : vector<16x36xf32>
    %c43 = arith.constant 43 : index
    %137 = memref.load %arg2[%c43] : memref<288xf32, #tpu.memory_space<smem>>
    %138 = vector.broadcast %137 : f32 to vector<16x36xf32>
    %139 = arith.mulf %138, %115 : vector<16x36xf32>
    %140 = arith.addf %124, %139 : vector<16x36xf32>
    %c79 = arith.constant 79 : index
    %141 = memref.load %arg2[%c79] : memref<288xf32, #tpu.memory_space<smem>>
    %142 = vector.broadcast %141 : f32 to vector<16x36xf32>
    %143 = arith.mulf %142, %115 : vector<16x36xf32>
    %144 = arith.addf %128, %143 : vector<16x36xf32>
    %c115 = arith.constant 115 : index
    %145 = memref.load %arg2[%c115] : memref<288xf32, #tpu.memory_space<smem>>
    %146 = vector.broadcast %145 : f32 to vector<16x36xf32>
    %147 = arith.mulf %146, %115 : vector<16x36xf32>
    %148 = arith.addf %132, %147 : vector<16x36xf32>
    %c35_i32_41 = arith.constant 35 : i32
    %149 = tpu.dynamic_rotate %115 by %c35_i32_41 dim 1 : vector<16x36xf32>, i32 -> vector<16x36xf32>
    %c8 = arith.constant 8 : index
    %150 = memref.load %arg2[%c8] : memref<288xf32, #tpu.memory_space<smem>>
    %151 = vector.broadcast %150 : f32 to vector<16x36xf32>
    %152 = arith.mulf %151, %149 : vector<16x36xf32>
    %153 = arith.addf %136, %152 : vector<16x36xf32>
    %c44 = arith.constant 44 : index
    %154 = memref.load %arg2[%c44] : memref<288xf32, #tpu.memory_space<smem>>
    %155 = vector.broadcast %154 : f32 to vector<16x36xf32>
    %156 = arith.mulf %155, %149 : vector<16x36xf32>
    %157 = arith.addf %140, %156 : vector<16x36xf32>
    %c80 = arith.constant 80 : index
    %158 = memref.load %arg2[%c80] : memref<288xf32, #tpu.memory_space<smem>>
    %159 = vector.broadcast %158 : f32 to vector<16x36xf32>
    %160 = arith.mulf %159, %149 : vector<16x36xf32>
    %161 = arith.addf %144, %160 : vector<16x36xf32>
    %c116 = arith.constant 116 : index
    %162 = memref.load %arg2[%c116] : memref<288xf32, #tpu.memory_space<smem>>
    %163 = vector.broadcast %162 : f32 to vector<16x36xf32>
    %164 = arith.mulf %163, %149 : vector<16x36xf32>
    %165 = arith.addf %148, %164 : vector<16x36xf32>
    %c1_42 = arith.constant 1 : index
    %c0_43 = arith.constant 0 : index
    %c0_44 = arith.constant 0 : index
    %166 = vector.load %arg5[%c1_42, %c0_43, %c0_44] : memref<4x18x36xf32, #tpu.memory_space<vmem>>, vector<1x16x36xf32>
    %167 = vector.shape_cast %166 : vector<1x16x36xf32> to vector<16x36xf32>
    %c1_i32_45 = arith.constant 1 : i32
    %168 = tpu.dynamic_rotate %167 by %c1_i32_45 dim 1 : vector<16x36xf32>, i32 -> vector<16x36xf32>
    %c9 = arith.constant 9 : index
    %169 = memref.load %arg2[%c9] : memref<288xf32, #tpu.memory_space<smem>>
    %170 = vector.broadcast %169 : f32 to vector<16x36xf32>
    %171 = arith.mulf %170, %168 : vector<16x36xf32>
    %172 = arith.addf %153, %171 : vector<16x36xf32>
    %c45 = arith.constant 45 : index
    %173 = memref.load %arg2[%c45] : memref<288xf32, #tpu.memory_space<smem>>
    %174 = vector.broadcast %173 : f32 to vector<16x36xf32>
    %175 = arith.mulf %174, %168 : vector<16x36xf32>
    %176 = arith.addf %157, %175 : vector<16x36xf32>
    %c81 = arith.constant 81 : index
    %177 = memref.load %arg2[%c81] : memref<288xf32, #tpu.memory_space<smem>>
    %178 = vector.broadcast %177 : f32 to vector<16x36xf32>
    %179 = arith.mulf %178, %168 : vector<16x36xf32>
    %180 = arith.addf %161, %179 : vector<16x36xf32>
    %c117 = arith.constant 117 : index
    %181 = memref.load %arg2[%c117] : memref<288xf32, #tpu.memory_space<smem>>
    %182 = vector.broadcast %181 : f32 to vector<16x36xf32>
    %183 = arith.mulf %182, %168 : vector<16x36xf32>
    %184 = arith.addf %165, %183 : vector<16x36xf32>
    %c10 = arith.constant 10 : index
    %185 = memref.load %arg2[%c10] : memref<288xf32, #tpu.memory_space<smem>>
    %186 = vector.broadcast %185 : f32 to vector<16x36xf32>
    %187 = arith.mulf %186, %167 : vector<16x36xf32>
    %188 = arith.addf %172, %187 : vector<16x36xf32>
    %c46 = arith.constant 46 : index
    %189 = memref.load %arg2[%c46] : memref<288xf32, #tpu.memory_space<smem>>
    %190 = vector.broadcast %189 : f32 to vector<16x36xf32>
    %191 = arith.mulf %190, %167 : vector<16x36xf32>
    %192 = arith.addf %176, %191 : vector<16x36xf32>
    %c82 = arith.constant 82 : index
    %193 = memref.load %arg2[%c82] : memref<288xf32, #tpu.memory_space<smem>>
    %194 = vector.broadcast %193 : f32 to vector<16x36xf32>
    %195 = arith.mulf %194, %167 : vector<16x36xf32>
    %196 = arith.addf %180, %195 : vector<16x36xf32>
    %c118 = arith.constant 118 : index
    %197 = memref.load %arg2[%c118] : memref<288xf32, #tpu.memory_space<smem>>
    %198 = vector.broadcast %197 : f32 to vector<16x36xf32>
    %199 = arith.mulf %198, %167 : vector<16x36xf32>
    %200 = arith.addf %184, %199 : vector<16x36xf32>
    %c35_i32_46 = arith.constant 35 : i32
    %201 = tpu.dynamic_rotate %167 by %c35_i32_46 dim 1 : vector<16x36xf32>, i32 -> vector<16x36xf32>
    %c11 = arith.constant 11 : index
    %202 = memref.load %arg2[%c11] : memref<288xf32, #tpu.memory_space<smem>>
    %203 = vector.broadcast %202 : f32 to vector<16x36xf32>
    %204 = arith.mulf %203, %201 : vector<16x36xf32>
    %205 = arith.addf %188, %204 : vector<16x36xf32>
    %c47 = arith.constant 47 : index
    %206 = memref.load %arg2[%c47] : memref<288xf32, #tpu.memory_space<smem>>
    %207 = vector.broadcast %206 : f32 to vector<16x36xf32>
    %208 = arith.mulf %207, %201 : vector<16x36xf32>
    %209 = arith.addf %192, %208 : vector<16x36xf32>
    %c83 = arith.constant 83 : index
    %210 = memref.load %arg2[%c83] : memref<288xf32, #tpu.memory_space<smem>>
    %211 = vector.broadcast %210 : f32 to vector<16x36xf32>
    %212 = arith.mulf %211, %201 : vector<16x36xf32>
    %213 = arith.addf %196, %212 : vector<16x36xf32>
    %c119 = arith.constant 119 : index
    %214 = memref.load %arg2[%c119] : memref<288xf32, #tpu.memory_space<smem>>
    %215 = vector.broadcast %214 : f32 to vector<16x36xf32>
    %216 = arith.mulf %215, %201 : vector<16x36xf32>
    %217 = arith.addf %200, %216 : vector<16x36xf32>
    %c1_47 = arith.constant 1 : index
    %c1_48 = arith.constant 1 : index
    %c0_49 = arith.constant 0 : index
    %218 = vector.load %arg5[%c1_47, %c1_48, %c0_49] : memref<4x18x36xf32, #tpu.memory_space<vmem>>, vector<1x16x36xf32>
    %219 = vector.shape_cast %218 : vector<1x16x36xf32> to vector<16x36xf32>
    %c1_i32_50 = arith.constant 1 : i32
    %220 = tpu.dynamic_rotate %219 by %c1_i32_50 dim 1 : vector<16x36xf32>, i32 -> vector<16x36xf32>
    %c12 = arith.constant 12 : index
    %221 = memref.load %arg2[%c12] : memref<288xf32, #tpu.memory_space<smem>>
    %222 = vector.broadcast %221 : f32 to vector<16x36xf32>
    %223 = arith.mulf %222, %220 : vector<16x36xf32>
    %224 = arith.addf %205, %223 : vector<16x36xf32>
    %c48 = arith.constant 48 : index
    %225 = memref.load %arg2[%c48] : memref<288xf32, #tpu.memory_space<smem>>
    %226 = vector.broadcast %225 : f32 to vector<16x36xf32>
    %227 = arith.mulf %226, %220 : vector<16x36xf32>
    %228 = arith.addf %209, %227 : vector<16x36xf32>
    %c84 = arith.constant 84 : index
    %229 = memref.load %arg2[%c84] : memref<288xf32, #tpu.memory_space<smem>>
    %230 = vector.broadcast %229 : f32 to vector<16x36xf32>
    %231 = arith.mulf %230, %220 : vector<16x36xf32>
    %232 = arith.addf %213, %231 : vector<16x36xf32>
    %c120 = arith.constant 120 : index
    %233 = memref.load %arg2[%c120] : memref<288xf32, #tpu.memory_space<smem>>
    %234 = vector.broadcast %233 : f32 to vector<16x36xf32>
    %235 = arith.mulf %234, %220 : vector<16x36xf32>
    %236 = arith.addf %217, %235 : vector<16x36xf32>
    %c13 = arith.constant 13 : index
    %237 = memref.load %arg2[%c13] : memref<288xf32, #tpu.memory_space<smem>>
    %238 = vector.broadcast %237 : f32 to vector<16x36xf32>
    %239 = arith.mulf %238, %219 : vector<16x36xf32>
    %240 = arith.addf %224, %239 : vector<16x36xf32>
    %c49 = arith.constant 49 : index
    %241 = memref.load %arg2[%c49] : memref<288xf32, #tpu.memory_space<smem>>
    %242 = vector.broadcast %241 : f32 to vector<16x36xf32>
    %243 = arith.mulf %242, %219 : vector<16x36xf32>
    %244 = arith.addf %228, %243 : vector<16x36xf32>
    %c85 = arith.constant 85 : index
    %245 = memref.load %arg2[%c85] : memref<288xf32, #tpu.memory_space<smem>>
    %246 = vector.broadcast %245 : f32 to vector<16x36xf32>
    %247 = arith.mulf %246, %219 : vector<16x36xf32>
    %248 = arith.addf %232, %247 : vector<16x36xf32>
    %c121 = arith.constant 121 : index
    %249 = memref.load %arg2[%c121] : memref<288xf32, #tpu.memory_space<smem>>
    %250 = vector.broadcast %249 : f32 to vector<16x36xf32>
    %251 = arith.mulf %250, %219 : vector<16x36xf32>
    %252 = arith.addf %236, %251 : vector<16x36xf32>
    %c35_i32_51 = arith.constant 35 : i32
    %253 = tpu.dynamic_rotate %219 by %c35_i32_51 dim 1 : vector<16x36xf32>, i32 -> vector<16x36xf32>
    %c14 = arith.constant 14 : index
    %254 = memref.load %arg2[%c14] : memref<288xf32, #tpu.memory_space<smem>>
    %255 = vector.broadcast %254 : f32 to vector<16x36xf32>
    %256 = arith.mulf %255, %253 : vector<16x36xf32>
    %257 = arith.addf %240, %256 : vector<16x36xf32>
    %c50 = arith.constant 50 : index
    %258 = memref.load %arg2[%c50] : memref<288xf32, #tpu.memory_space<smem>>
    %259 = vector.broadcast %258 : f32 to vector<16x36xf32>
    %260 = arith.mulf %259, %253 : vector<16x36xf32>
    %261 = arith.addf %244, %260 : vector<16x36xf32>
    %c86 = arith.constant 86 : index
    %262 = memref.load %arg2[%c86] : memref<288xf32, #tpu.memory_space<smem>>
    %263 = vector.broadcast %262 : f32 to vector<16x36xf32>
    %264 = arith.mulf %263, %253 : vector<16x36xf32>
    %265 = arith.addf %248, %264 : vector<16x36xf32>
    %c122 = arith.constant 122 : index
    %266 = memref.load %arg2[%c122] : memref<288xf32, #tpu.memory_space<smem>>
    %267 = vector.broadcast %266 : f32 to vector<16x36xf32>
    %268 = arith.mulf %267, %253 : vector<16x36xf32>
    %269 = arith.addf %252, %268 : vector<16x36xf32>
    %c1_52 = arith.constant 1 : index
    %c2_53 = arith.constant 2 : index
    %c0_54 = arith.constant 0 : index
    %270 = vector.load %arg5[%c1_52, %c2_53, %c0_54] : memref<4x18x36xf32, #tpu.memory_space<vmem>>, vector<1x16x36xf32>
    %271 = vector.shape_cast %270 : vector<1x16x36xf32> to vector<16x36xf32>
    %c1_i32_55 = arith.constant 1 : i32
    %272 = tpu.dynamic_rotate %271 by %c1_i32_55 dim 1 : vector<16x36xf32>, i32 -> vector<16x36xf32>
    %c15 = arith.constant 15 : index
    %273 = memref.load %arg2[%c15] : memref<288xf32, #tpu.memory_space<smem>>
    %274 = vector.broadcast %273 : f32 to vector<16x36xf32>
    %275 = arith.mulf %274, %272 : vector<16x36xf32>
    %276 = arith.addf %257, %275 : vector<16x36xf32>
    %c51 = arith.constant 51 : index
    %277 = memref.load %arg2[%c51] : memref<288xf32, #tpu.memory_space<smem>>
    %278 = vector.broadcast %277 : f32 to vector<16x36xf32>
    %279 = arith.mulf %278, %272 : vector<16x36xf32>
    %280 = arith.addf %261, %279 : vector<16x36xf32>
    %c87 = arith.constant 87 : index
    %281 = memref.load %arg2[%c87] : memref<288xf32, #tpu.memory_space<smem>>
    %282 = vector.broadcast %281 : f32 to vector<16x36xf32>
    %283 = arith.mulf %282, %272 : vector<16x36xf32>
    %284 = arith.addf %265, %283 : vector<16x36xf32>
    %c123 = arith.constant 123 : index
    %285 = memref.load %arg2[%c123] : memref<288xf32, #tpu.memory_space<smem>>
    %286 = vector.broadcast %285 : f32 to vector<16x36xf32>
    %287 = arith.mulf %286, %272 : vector<16x36xf32>
    %288 = arith.addf %269, %287 : vector<16x36xf32>
    %c16 = arith.constant 16 : index
    %289 = memref.load %arg2[%c16] : memref<288xf32, #tpu.memory_space<smem>>
    %290 = vector.broadcast %289 : f32 to vector<16x36xf32>
    %291 = arith.mulf %290, %271 : vector<16x36xf32>
    %292 = arith.addf %276, %291 : vector<16x36xf32>
    %c52 = arith.constant 52 : index
    %293 = memref.load %arg2[%c52] : memref<288xf32, #tpu.memory_space<smem>>
    %294 = vector.broadcast %293 : f32 to vector<16x36xf32>
    %295 = arith.mulf %294, %271 : vector<16x36xf32>
    %296 = arith.addf %280, %295 : vector<16x36xf32>
    %c88 = arith.constant 88 : index
    %297 = memref.load %arg2[%c88] : memref<288xf32, #tpu.memory_space<smem>>
    %298 = vector.broadcast %297 : f32 to vector<16x36xf32>
    %299 = arith.mulf %298, %271 : vector<16x36xf32>
    %300 = arith.addf %284, %299 : vector<16x36xf32>
    %c124 = arith.constant 124 : index
    %301 = memref.load %arg2[%c124] : memref<288xf32, #tpu.memory_space<smem>>
    %302 = vector.broadcast %301 : f32 to vector<16x36xf32>
    %303 = arith.mulf %302, %271 : vector<16x36xf32>
    %304 = arith.addf %288, %303 : vector<16x36xf32>
    %c35_i32_56 = arith.constant 35 : i32
    %305 = tpu.dynamic_rotate %271 by %c35_i32_56 dim 1 : vector<16x36xf32>, i32 -> vector<16x36xf32>
    %c17_57 = arith.constant 17 : index
    %306 = memref.load %arg2[%c17_57] : memref<288xf32, #tpu.memory_space<smem>>
    %307 = vector.broadcast %306 : f32 to vector<16x36xf32>
    %308 = arith.mulf %307, %305 : vector<16x36xf32>
    %309 = arith.addf %292, %308 : vector<16x36xf32>
    %c53 = arith.constant 53 : index
    %310 = memref.load %arg2[%c53] : memref<288xf32, #tpu.memory_space<smem>>
    %311 = vector.broadcast %310 : f32 to vector<16x36xf32>
    %312 = arith.mulf %311, %305 : vector<16x36xf32>
    %313 = arith.addf %296, %312 : vector<16x36xf32>
    %c89 = arith.constant 89 : index
    %314 = memref.load %arg2[%c89] : memref<288xf32, #tpu.memory_space<smem>>
    %315 = vector.broadcast %314 : f32 to vector<16x36xf32>
    %316 = arith.mulf %315, %305 : vector<16x36xf32>
    %317 = arith.addf %300, %316 : vector<16x36xf32>
    %c125 = arith.constant 125 : index
    %318 = memref.load %arg2[%c125] : memref<288xf32, #tpu.memory_space<smem>>
    %319 = vector.broadcast %318 : f32 to vector<16x36xf32>
    %320 = arith.mulf %319, %305 : vector<16x36xf32>
    %321 = arith.addf %304, %320 : vector<16x36xf32>
    %c2_58 = arith.constant 2 : index
    %c0_59 = arith.constant 0 : index
    %c0_60 = arith.constant 0 : index
    %322 = vector.load %arg5[%c2_58, %c0_59, %c0_60] : memref<4x18x36xf32, #tpu.memory_space<vmem>>, vector<1x16x36xf32>
    %323 = vector.shape_cast %322 : vector<1x16x36xf32> to vector<16x36xf32>
    %c1_i32_61 = arith.constant 1 : i32
    %324 = tpu.dynamic_rotate %323 by %c1_i32_61 dim 1 : vector<16x36xf32>, i32 -> vector<16x36xf32>
    %c18_62 = arith.constant 18 : index
    %325 = memref.load %arg2[%c18_62] : memref<288xf32, #tpu.memory_space<smem>>
    %326 = vector.broadcast %325 : f32 to vector<16x36xf32>
    %327 = arith.mulf %326, %324 : vector<16x36xf32>
    %328 = arith.addf %309, %327 : vector<16x36xf32>
    %c54 = arith.constant 54 : index
    %329 = memref.load %arg2[%c54] : memref<288xf32, #tpu.memory_space<smem>>
    %330 = vector.broadcast %329 : f32 to vector<16x36xf32>
    %331 = arith.mulf %330, %324 : vector<16x36xf32>
    %332 = arith.addf %313, %331 : vector<16x36xf32>
    %c90 = arith.constant 90 : index
    %333 = memref.load %arg2[%c90] : memref<288xf32, #tpu.memory_space<smem>>
    %334 = vector.broadcast %333 : f32 to vector<16x36xf32>
    %335 = arith.mulf %334, %324 : vector<16x36xf32>
    %336 = arith.addf %317, %335 : vector<16x36xf32>
    %c126 = arith.constant 126 : index
    %337 = memref.load %arg2[%c126] : memref<288xf32, #tpu.memory_space<smem>>
    %338 = vector.broadcast %337 : f32 to vector<16x36xf32>
    %339 = arith.mulf %338, %324 : vector<16x36xf32>
    %340 = arith.addf %321, %339 : vector<16x36xf32>
    %c19_63 = arith.constant 19 : index
    %341 = memref.load %arg2[%c19_63] : memref<288xf32, #tpu.memory_space<smem>>
    %342 = vector.broadcast %341 : f32 to vector<16x36xf32>
    %343 = arith.mulf %342, %323 : vector<16x36xf32>
    %344 = arith.addf %328, %343 : vector<16x36xf32>
    %c55 = arith.constant 55 : index
    %345 = memref.load %arg2[%c55] : memref<288xf32, #tpu.memory_space<smem>>
    %346 = vector.broadcast %345 : f32 to vector<16x36xf32>
    %347 = arith.mulf %346, %323 : vector<16x36xf32>
    %348 = arith.addf %332, %347 : vector<16x36xf32>
    %c91 = arith.constant 91 : index
    %349 = memref.load %arg2[%c91] : memref<288xf32, #tpu.memory_space<smem>>
    %350 = vector.broadcast %349 : f32 to vector<16x36xf32>
    %351 = arith.mulf %350, %323 : vector<16x36xf32>
    %352 = arith.addf %336, %351 : vector<16x36xf32>
    %c127 = arith.constant 127 : index
    %353 = memref.load %arg2[%c127] : memref<288xf32, #tpu.memory_space<smem>>
    %354 = vector.broadcast %353 : f32 to vector<16x36xf32>
    %355 = arith.mulf %354, %323 : vector<16x36xf32>
    %356 = arith.addf %340, %355 : vector<16x36xf32>
    %c35_i32_64 = arith.constant 35 : i32
    %357 = tpu.dynamic_rotate %323 by %c35_i32_64 dim 1 : vector<16x36xf32>, i32 -> vector<16x36xf32>
    %c20 = arith.constant 20 : index
    %358 = memref.load %arg2[%c20] : memref<288xf32, #tpu.memory_space<smem>>
    %359 = vector.broadcast %358 : f32 to vector<16x36xf32>
    %360 = arith.mulf %359, %357 : vector<16x36xf32>
    %361 = arith.addf %344, %360 : vector<16x36xf32>
    %c56 = arith.constant 56 : index
    %362 = memref.load %arg2[%c56] : memref<288xf32, #tpu.memory_space<smem>>
    %363 = vector.broadcast %362 : f32 to vector<16x36xf32>
    %364 = arith.mulf %363, %357 : vector<16x36xf32>
    %365 = arith.addf %348, %364 : vector<16x36xf32>
    %c92 = arith.constant 92 : index
    %366 = memref.load %arg2[%c92] : memref<288xf32, #tpu.memory_space<smem>>
    %367 = vector.broadcast %366 : f32 to vector<16x36xf32>
    %368 = arith.mulf %367, %357 : vector<16x36xf32>
    %369 = arith.addf %352, %368 : vector<16x36xf32>
    %c128 = arith.constant 128 : index
    %370 = memref.load %arg2[%c128] : memref<288xf32, #tpu.memory_space<smem>>
    %371 = vector.broadcast %370 : f32 to vector<16x36xf32>
    %372 = arith.mulf %371, %357 : vector<16x36xf32>
    %373 = arith.addf %356, %372 : vector<16x36xf32>
    %c2_65 = arith.constant 2 : index
    %c1_66 = arith.constant 1 : index
    %c0_67 = arith.constant 0 : index
    %374 = vector.load %arg5[%c2_65, %c1_66, %c0_67] : memref<4x18x36xf32, #tpu.memory_space<vmem>>, vector<1x16x36xf32>
    %375 = vector.shape_cast %374 : vector<1x16x36xf32> to vector<16x36xf32>
    %c1_i32_68 = arith.constant 1 : i32
    %376 = tpu.dynamic_rotate %375 by %c1_i32_68 dim 1 : vector<16x36xf32>, i32 -> vector<16x36xf32>
    %c21 = arith.constant 21 : index
    %377 = memref.load %arg2[%c21] : memref<288xf32, #tpu.memory_space<smem>>
    %378 = vector.broadcast %377 : f32 to vector<16x36xf32>
    %379 = arith.mulf %378, %376 : vector<16x36xf32>
    %380 = arith.addf %361, %379 : vector<16x36xf32>
    %c57 = arith.constant 57 : index
    %381 = memref.load %arg2[%c57] : memref<288xf32, #tpu.memory_space<smem>>
    %382 = vector.broadcast %381 : f32 to vector<16x36xf32>
    %383 = arith.mulf %382, %376 : vector<16x36xf32>
    %384 = arith.addf %365, %383 : vector<16x36xf32>
    %c93 = arith.constant 93 : index
    %385 = memref.load %arg2[%c93] : memref<288xf32, #tpu.memory_space<smem>>
    %386 = vector.broadcast %385 : f32 to vector<16x36xf32>
    %387 = arith.mulf %386, %376 : vector<16x36xf32>
    %388 = arith.addf %369, %387 : vector<16x36xf32>
    %c129 = arith.constant 129 : index
    %389 = memref.load %arg2[%c129] : memref<288xf32, #tpu.memory_space<smem>>
    %390 = vector.broadcast %389 : f32 to vector<16x36xf32>
    %391 = arith.mulf %390, %376 : vector<16x36xf32>
    %392 = arith.addf %373, %391 : vector<16x36xf32>
    %c22 = arith.constant 22 : index
    %393 = memref.load %arg2[%c22] : memref<288xf32, #tpu.memory_space<smem>>
    %394 = vector.broadcast %393 : f32 to vector<16x36xf32>
    %395 = arith.mulf %394, %375 : vector<16x36xf32>
    %396 = arith.addf %380, %395 : vector<16x36xf32>
    %c58 = arith.constant 58 : index
    %397 = memref.load %arg2[%c58] : memref<288xf32, #tpu.memory_space<smem>>
    %398 = vector.broadcast %397 : f32 to vector<16x36xf32>
    %399 = arith.mulf %398, %375 : vector<16x36xf32>
    %400 = arith.addf %384, %399 : vector<16x36xf32>
    %c94 = arith.constant 94 : index
    %401 = memref.load %arg2[%c94] : memref<288xf32, #tpu.memory_space<smem>>
    %402 = vector.broadcast %401 : f32 to vector<16x36xf32>
    %403 = arith.mulf %402, %375 : vector<16x36xf32>
    %404 = arith.addf %388, %403 : vector<16x36xf32>
    %c130 = arith.constant 130 : index
    %405 = memref.load %arg2[%c130] : memref<288xf32, #tpu.memory_space<smem>>
    %406 = vector.broadcast %405 : f32 to vector<16x36xf32>
    %407 = arith.mulf %406, %375 : vector<16x36xf32>
    %408 = arith.addf %392, %407 : vector<16x36xf32>
    %c35_i32_69 = arith.constant 35 : i32
    %409 = tpu.dynamic_rotate %375 by %c35_i32_69 dim 1 : vector<16x36xf32>, i32 -> vector<16x36xf32>
    %c23 = arith.constant 23 : index
    %410 = memref.load %arg2[%c23] : memref<288xf32, #tpu.memory_space<smem>>
    %411 = vector.broadcast %410 : f32 to vector<16x36xf32>
    %412 = arith.mulf %411, %409 : vector<16x36xf32>
    %413 = arith.addf %396, %412 : vector<16x36xf32>
    %c59 = arith.constant 59 : index
    %414 = memref.load %arg2[%c59] : memref<288xf32, #tpu.memory_space<smem>>
    %415 = vector.broadcast %414 : f32 to vector<16x36xf32>
    %416 = arith.mulf %415, %409 : vector<16x36xf32>
    %417 = arith.addf %400, %416 : vector<16x36xf32>
    %c95 = arith.constant 95 : index
    %418 = memref.load %arg2[%c95] : memref<288xf32, #tpu.memory_space<smem>>
    %419 = vector.broadcast %418 : f32 to vector<16x36xf32>
    %420 = arith.mulf %419, %409 : vector<16x36xf32>
    %421 = arith.addf %404, %420 : vector<16x36xf32>
    %c131 = arith.constant 131 : index
    %422 = memref.load %arg2[%c131] : memref<288xf32, #tpu.memory_space<smem>>
    %423 = vector.broadcast %422 : f32 to vector<16x36xf32>
    %424 = arith.mulf %423, %409 : vector<16x36xf32>
    %425 = arith.addf %408, %424 : vector<16x36xf32>
    %c2_70 = arith.constant 2 : index
    %c2_71 = arith.constant 2 : index
    %c0_72 = arith.constant 0 : index
    %426 = vector.load %arg5[%c2_70, %c2_71, %c0_72] : memref<4x18x36xf32, #tpu.memory_space<vmem>>, vector<1x16x36xf32>
    %427 = vector.shape_cast %426 : vector<1x16x36xf32> to vector<16x36xf32>
    %c1_i32_73 = arith.constant 1 : i32
    %428 = tpu.dynamic_rotate %427 by %c1_i32_73 dim 1 : vector<16x36xf32>, i32 -> vector<16x36xf32>
    %c24 = arith.constant 24 : index
    %429 = memref.load %arg2[%c24] : memref<288xf32, #tpu.memory_space<smem>>
    %430 = vector.broadcast %429 : f32 to vector<16x36xf32>
    %431 = arith.mulf %430, %428 : vector<16x36xf32>
    %432 = arith.addf %413, %431 : vector<16x36xf32>
    %c60 = arith.constant 60 : index
    %433 = memref.load %arg2[%c60] : memref<288xf32, #tpu.memory_space<smem>>
    %434 = vector.broadcast %433 : f32 to vector<16x36xf32>
    %435 = arith.mulf %434, %428 : vector<16x36xf32>
    %436 = arith.addf %417, %435 : vector<16x36xf32>
    %c96 = arith.constant 96 : index
    %437 = memref.load %arg2[%c96] : memref<288xf32, #tpu.memory_space<smem>>
    %438 = vector.broadcast %437 : f32 to vector<16x36xf32>
    %439 = arith.mulf %438, %428 : vector<16x36xf32>
    %440 = arith.addf %421, %439 : vector<16x36xf32>
    %c132 = arith.constant 132 : index
    %441 = memref.load %arg2[%c132] : memref<288xf32, #tpu.memory_space<smem>>
    %442 = vector.broadcast %441 : f32 to vector<16x36xf32>
    %443 = arith.mulf %442, %428 : vector<16x36xf32>
    %444 = arith.addf %425, %443 : vector<16x36xf32>
    %c25 = arith.constant 25 : index
    %445 = memref.load %arg2[%c25] : memref<288xf32, #tpu.memory_space<smem>>
    %446 = vector.broadcast %445 : f32 to vector<16x36xf32>
    %447 = arith.mulf %446, %427 : vector<16x36xf32>
    %448 = arith.addf %432, %447 : vector<16x36xf32>
    %c61 = arith.constant 61 : index
    %449 = memref.load %arg2[%c61] : memref<288xf32, #tpu.memory_space<smem>>
    %450 = vector.broadcast %449 : f32 to vector<16x36xf32>
    %451 = arith.mulf %450, %427 : vector<16x36xf32>
    %452 = arith.addf %436, %451 : vector<16x36xf32>
    %c97 = arith.constant 97 : index
    %453 = memref.load %arg2[%c97] : memref<288xf32, #tpu.memory_space<smem>>
    %454 = vector.broadcast %453 : f32 to vector<16x36xf32>
    %455 = arith.mulf %454, %427 : vector<16x36xf32>
    %456 = arith.addf %440, %455 : vector<16x36xf32>
    %c133 = arith.constant 133 : index
    %457 = memref.load %arg2[%c133] : memref<288xf32, #tpu.memory_space<smem>>
    %458 = vector.broadcast %457 : f32 to vector<16x36xf32>
    %459 = arith.mulf %458, %427 : vector<16x36xf32>
    %460 = arith.addf %444, %459 : vector<16x36xf32>
    %c35_i32_74 = arith.constant 35 : i32
    %461 = tpu.dynamic_rotate %427 by %c35_i32_74 dim 1 : vector<16x36xf32>, i32 -> vector<16x36xf32>
    %c26 = arith.constant 26 : index
    %462 = memref.load %arg2[%c26] : memref<288xf32, #tpu.memory_space<smem>>
    %463 = vector.broadcast %462 : f32 to vector<16x36xf32>
    %464 = arith.mulf %463, %461 : vector<16x36xf32>
    %465 = arith.addf %448, %464 : vector<16x36xf32>
    %c62 = arith.constant 62 : index
    %466 = memref.load %arg2[%c62] : memref<288xf32, #tpu.memory_space<smem>>
    %467 = vector.broadcast %466 : f32 to vector<16x36xf32>
    %468 = arith.mulf %467, %461 : vector<16x36xf32>
    %469 = arith.addf %452, %468 : vector<16x36xf32>
    %c98 = arith.constant 98 : index
    %470 = memref.load %arg2[%c98] : memref<288xf32, #tpu.memory_space<smem>>
    %471 = vector.broadcast %470 : f32 to vector<16x36xf32>
    %472 = arith.mulf %471, %461 : vector<16x36xf32>
    %473 = arith.addf %456, %472 : vector<16x36xf32>
    %c134 = arith.constant 134 : index
    %474 = memref.load %arg2[%c134] : memref<288xf32, #tpu.memory_space<smem>>
    %475 = vector.broadcast %474 : f32 to vector<16x36xf32>
    %476 = arith.mulf %475, %461 : vector<16x36xf32>
    %477 = arith.addf %460, %476 : vector<16x36xf32>
    %c3_75 = arith.constant 3 : index
    %c0_76 = arith.constant 0 : index
    %c0_77 = arith.constant 0 : index
    %478 = vector.load %arg5[%c3_75, %c0_76, %c0_77] : memref<4x18x36xf32, #tpu.memory_space<vmem>>, vector<1x16x36xf32>
    %479 = vector.shape_cast %478 : vector<1x16x36xf32> to vector<16x36xf32>
    %c1_i32_78 = arith.constant 1 : i32
    %480 = tpu.dynamic_rotate %479 by %c1_i32_78 dim 1 : vector<16x36xf32>, i32 -> vector<16x36xf32>
    %c27 = arith.constant 27 : index
    %481 = memref.load %arg2[%c27] : memref<288xf32, #tpu.memory_space<smem>>
    %482 = vector.broadcast %481 : f32 to vector<16x36xf32>
    %483 = arith.mulf %482, %480 : vector<16x36xf32>
    %484 = arith.addf %465, %483 : vector<16x36xf32>
    %c63 = arith.constant 63 : index
    %485 = memref.load %arg2[%c63] : memref<288xf32, #tpu.memory_space<smem>>
    %486 = vector.broadcast %485 : f32 to vector<16x36xf32>
    %487 = arith.mulf %486, %480 : vector<16x36xf32>
    %488 = arith.addf %469, %487 : vector<16x36xf32>
    %c99 = arith.constant 99 : index
    %489 = memref.load %arg2[%c99] : memref<288xf32, #tpu.memory_space<smem>>
    %490 = vector.broadcast %489 : f32 to vector<16x36xf32>
    %491 = arith.mulf %490, %480 : vector<16x36xf32>
    %492 = arith.addf %473, %491 : vector<16x36xf32>
    %c135 = arith.constant 135 : index
    %493 = memref.load %arg2[%c135] : memref<288xf32, #tpu.memory_space<smem>>
    %494 = vector.broadcast %493 : f32 to vector<16x36xf32>
    %495 = arith.mulf %494, %480 : vector<16x36xf32>
    %496 = arith.addf %477, %495 : vector<16x36xf32>
    %c28 = arith.constant 28 : index
    %497 = memref.load %arg2[%c28] : memref<288xf32, #tpu.memory_space<smem>>
    %498 = vector.broadcast %497 : f32 to vector<16x36xf32>
    %499 = arith.mulf %498, %479 : vector<16x36xf32>
    %500 = arith.addf %484, %499 : vector<16x36xf32>
    %c64 = arith.constant 64 : index
    %501 = memref.load %arg2[%c64] : memref<288xf32, #tpu.memory_space<smem>>
    %502 = vector.broadcast %501 : f32 to vector<16x36xf32>
    %503 = arith.mulf %502, %479 : vector<16x36xf32>
    %504 = arith.addf %488, %503 : vector<16x36xf32>
    %c100 = arith.constant 100 : index
    %505 = memref.load %arg2[%c100] : memref<288xf32, #tpu.memory_space<smem>>
    %506 = vector.broadcast %505 : f32 to vector<16x36xf32>
    %507 = arith.mulf %506, %479 : vector<16x36xf32>
    %508 = arith.addf %492, %507 : vector<16x36xf32>
    %c136 = arith.constant 136 : index
    %509 = memref.load %arg2[%c136] : memref<288xf32, #tpu.memory_space<smem>>
    %510 = vector.broadcast %509 : f32 to vector<16x36xf32>
    %511 = arith.mulf %510, %479 : vector<16x36xf32>
    %512 = arith.addf %496, %511 : vector<16x36xf32>
    %c35_i32_79 = arith.constant 35 : i32
    %513 = tpu.dynamic_rotate %479 by %c35_i32_79 dim 1 : vector<16x36xf32>, i32 -> vector<16x36xf32>
    %c29 = arith.constant 29 : index
    %514 = memref.load %arg2[%c29] : memref<288xf32, #tpu.memory_space<smem>>
    %515 = vector.broadcast %514 : f32 to vector<16x36xf32>
    %516 = arith.mulf %515, %513 : vector<16x36xf32>
    %517 = arith.addf %500, %516 : vector<16x36xf32>
    %c65 = arith.constant 65 : index
    %518 = memref.load %arg2[%c65] : memref<288xf32, #tpu.memory_space<smem>>
    %519 = vector.broadcast %518 : f32 to vector<16x36xf32>
    %520 = arith.mulf %519, %513 : vector<16x36xf32>
    %521 = arith.addf %504, %520 : vector<16x36xf32>
    %c101 = arith.constant 101 : index
    %522 = memref.load %arg2[%c101] : memref<288xf32, #tpu.memory_space<smem>>
    %523 = vector.broadcast %522 : f32 to vector<16x36xf32>
    %524 = arith.mulf %523, %513 : vector<16x36xf32>
    %525 = arith.addf %508, %524 : vector<16x36xf32>
    %c137 = arith.constant 137 : index
    %526 = memref.load %arg2[%c137] : memref<288xf32, #tpu.memory_space<smem>>
    %527 = vector.broadcast %526 : f32 to vector<16x36xf32>
    %528 = arith.mulf %527, %513 : vector<16x36xf32>
    %529 = arith.addf %512, %528 : vector<16x36xf32>
    %c3_80 = arith.constant 3 : index
    %c1_81 = arith.constant 1 : index
    %c0_82 = arith.constant 0 : index
    %530 = vector.load %arg5[%c3_80, %c1_81, %c0_82] : memref<4x18x36xf32, #tpu.memory_space<vmem>>, vector<1x16x36xf32>
    %531 = vector.shape_cast %530 : vector<1x16x36xf32> to vector<16x36xf32>
    %c1_i32_83 = arith.constant 1 : i32
    %532 = tpu.dynamic_rotate %531 by %c1_i32_83 dim 1 : vector<16x36xf32>, i32 -> vector<16x36xf32>
    %c30 = arith.constant 30 : index
    %533 = memref.load %arg2[%c30] : memref<288xf32, #tpu.memory_space<smem>>
    %534 = vector.broadcast %533 : f32 to vector<16x36xf32>
    %535 = arith.mulf %534, %532 : vector<16x36xf32>
    %536 = arith.addf %517, %535 : vector<16x36xf32>
    %c66 = arith.constant 66 : index
    %537 = memref.load %arg2[%c66] : memref<288xf32, #tpu.memory_space<smem>>
    %538 = vector.broadcast %537 : f32 to vector<16x36xf32>
    %539 = arith.mulf %538, %532 : vector<16x36xf32>
    %540 = arith.addf %521, %539 : vector<16x36xf32>
    %c102 = arith.constant 102 : index
    %541 = memref.load %arg2[%c102] : memref<288xf32, #tpu.memory_space<smem>>
    %542 = vector.broadcast %541 : f32 to vector<16x36xf32>
    %543 = arith.mulf %542, %532 : vector<16x36xf32>
    %544 = arith.addf %525, %543 : vector<16x36xf32>
    %c138 = arith.constant 138 : index
    %545 = memref.load %arg2[%c138] : memref<288xf32, #tpu.memory_space<smem>>
    %546 = vector.broadcast %545 : f32 to vector<16x36xf32>
    %547 = arith.mulf %546, %532 : vector<16x36xf32>
    %548 = arith.addf %529, %547 : vector<16x36xf32>
    %c31 = arith.constant 31 : index
    %549 = memref.load %arg2[%c31] : memref<288xf32, #tpu.memory_space<smem>>
    %550 = vector.broadcast %549 : f32 to vector<16x36xf32>
    %551 = arith.mulf %550, %531 : vector<16x36xf32>
    %552 = arith.addf %536, %551 : vector<16x36xf32>
    %c67 = arith.constant 67 : index
    %553 = memref.load %arg2[%c67] : memref<288xf32, #tpu.memory_space<smem>>
    %554 = vector.broadcast %553 : f32 to vector<16x36xf32>
    %555 = arith.mulf %554, %531 : vector<16x36xf32>
    %556 = arith.addf %540, %555 : vector<16x36xf32>
    %c103 = arith.constant 103 : index
    %557 = memref.load %arg2[%c103] : memref<288xf32, #tpu.memory_space<smem>>
    %558 = vector.broadcast %557 : f32 to vector<16x36xf32>
    %559 = arith.mulf %558, %531 : vector<16x36xf32>
    %560 = arith.addf %544, %559 : vector<16x36xf32>
    %c139 = arith.constant 139 : index
    %561 = memref.load %arg2[%c139] : memref<288xf32, #tpu.memory_space<smem>>
    %562 = vector.broadcast %561 : f32 to vector<16x36xf32>
    %563 = arith.mulf %562, %531 : vector<16x36xf32>
    %564 = arith.addf %548, %563 : vector<16x36xf32>
    %c35_i32_84 = arith.constant 35 : i32
    %565 = tpu.dynamic_rotate %531 by %c35_i32_84 dim 1 : vector<16x36xf32>, i32 -> vector<16x36xf32>
    %c32 = arith.constant 32 : index
    %566 = memref.load %arg2[%c32] : memref<288xf32, #tpu.memory_space<smem>>
    %567 = vector.broadcast %566 : f32 to vector<16x36xf32>
    %568 = arith.mulf %567, %565 : vector<16x36xf32>
    %569 = arith.addf %552, %568 : vector<16x36xf32>
    %c68 = arith.constant 68 : index
    %570 = memref.load %arg2[%c68] : memref<288xf32, #tpu.memory_space<smem>>
    %571 = vector.broadcast %570 : f32 to vector<16x36xf32>
    %572 = arith.mulf %571, %565 : vector<16x36xf32>
    %573 = arith.addf %556, %572 : vector<16x36xf32>
    %c104 = arith.constant 104 : index
    %574 = memref.load %arg2[%c104] : memref<288xf32, #tpu.memory_space<smem>>
    %575 = vector.broadcast %574 : f32 to vector<16x36xf32>
    %576 = arith.mulf %575, %565 : vector<16x36xf32>
    %577 = arith.addf %560, %576 : vector<16x36xf32>
    %c140 = arith.constant 140 : index
    %578 = memref.load %arg2[%c140] : memref<288xf32, #tpu.memory_space<smem>>
    %579 = vector.broadcast %578 : f32 to vector<16x36xf32>
    %580 = arith.mulf %579, %565 : vector<16x36xf32>
    %581 = arith.addf %564, %580 : vector<16x36xf32>
    %c3_85 = arith.constant 3 : index
    %c2_86 = arith.constant 2 : index
    %c0_87 = arith.constant 0 : index
    %582 = vector.load %arg5[%c3_85, %c2_86, %c0_87] : memref<4x18x36xf32, #tpu.memory_space<vmem>>, vector<1x16x36xf32>
    %583 = vector.shape_cast %582 : vector<1x16x36xf32> to vector<16x36xf32>
    %c1_i32_88 = arith.constant 1 : i32
    %584 = tpu.dynamic_rotate %583 by %c1_i32_88 dim 1 : vector<16x36xf32>, i32 -> vector<16x36xf32>
    %c33 = arith.constant 33 : index
    %585 = memref.load %arg2[%c33] : memref<288xf32, #tpu.memory_space<smem>>
    %586 = vector.broadcast %585 : f32 to vector<16x36xf32>
    %587 = arith.mulf %586, %584 : vector<16x36xf32>
    %588 = arith.addf %569, %587 : vector<16x36xf32>
    %c69 = arith.constant 69 : index
    %589 = memref.load %arg2[%c69] : memref<288xf32, #tpu.memory_space<smem>>
    %590 = vector.broadcast %589 : f32 to vector<16x36xf32>
    %591 = arith.mulf %590, %584 : vector<16x36xf32>
    %592 = arith.addf %573, %591 : vector<16x36xf32>
    %c105 = arith.constant 105 : index
    %593 = memref.load %arg2[%c105] : memref<288xf32, #tpu.memory_space<smem>>
    %594 = vector.broadcast %593 : f32 to vector<16x36xf32>
    %595 = arith.mulf %594, %584 : vector<16x36xf32>
    %596 = arith.addf %577, %595 : vector<16x36xf32>
    %c141 = arith.constant 141 : index
    %597 = memref.load %arg2[%c141] : memref<288xf32, #tpu.memory_space<smem>>
    %598 = vector.broadcast %597 : f32 to vector<16x36xf32>
    %599 = arith.mulf %598, %584 : vector<16x36xf32>
    %600 = arith.addf %581, %599 : vector<16x36xf32>
    %c34 = arith.constant 34 : index
    %601 = memref.load %arg2[%c34] : memref<288xf32, #tpu.memory_space<smem>>
    %602 = vector.broadcast %601 : f32 to vector<16x36xf32>
    %603 = arith.mulf %602, %583 : vector<16x36xf32>
    %604 = arith.addf %588, %603 : vector<16x36xf32>
    %c70 = arith.constant 70 : index
    %605 = memref.load %arg2[%c70] : memref<288xf32, #tpu.memory_space<smem>>
    %606 = vector.broadcast %605 : f32 to vector<16x36xf32>
    %607 = arith.mulf %606, %583 : vector<16x36xf32>
    %608 = arith.addf %592, %607 : vector<16x36xf32>
    %c106 = arith.constant 106 : index
    %609 = memref.load %arg2[%c106] : memref<288xf32, #tpu.memory_space<smem>>
    %610 = vector.broadcast %609 : f32 to vector<16x36xf32>
    %611 = arith.mulf %610, %583 : vector<16x36xf32>
    %612 = arith.addf %596, %611 : vector<16x36xf32>
    %c142 = arith.constant 142 : index
    %613 = memref.load %arg2[%c142] : memref<288xf32, #tpu.memory_space<smem>>
    %614 = vector.broadcast %613 : f32 to vector<16x36xf32>
    %615 = arith.mulf %614, %583 : vector<16x36xf32>
    %616 = arith.addf %600, %615 : vector<16x36xf32>
    %c35_i32_89 = arith.constant 35 : i32
    %617 = tpu.dynamic_rotate %583 by %c35_i32_89 dim 1 : vector<16x36xf32>, i32 -> vector<16x36xf32>
    %c35_90 = arith.constant 35 : index
    %618 = memref.load %arg2[%c35_90] : memref<288xf32, #tpu.memory_space<smem>>
    %619 = vector.broadcast %618 : f32 to vector<16x36xf32>
    %620 = arith.mulf %619, %617 : vector<16x36xf32>
    %621 = arith.addf %604, %620 : vector<16x36xf32>
    %c71 = arith.constant 71 : index
    %622 = memref.load %arg2[%c71] : memref<288xf32, #tpu.memory_space<smem>>
    %623 = vector.broadcast %622 : f32 to vector<16x36xf32>
    %624 = arith.mulf %623, %617 : vector<16x36xf32>
    %625 = arith.addf %608, %624 : vector<16x36xf32>
    %c107 = arith.constant 107 : index
    %626 = memref.load %arg2[%c107] : memref<288xf32, #tpu.memory_space<smem>>
    %627 = vector.broadcast %626 : f32 to vector<16x36xf32>
    %628 = arith.mulf %627, %617 : vector<16x36xf32>
    %629 = arith.addf %612, %628 : vector<16x36xf32>
    %c143 = arith.constant 143 : index
    %630 = memref.load %arg2[%c143] : memref<288xf32, #tpu.memory_space<smem>>
    %631 = vector.broadcast %630 : f32 to vector<16x36xf32>
    %632 = arith.mulf %631, %617 : vector<16x36xf32>
    %633 = arith.addf %616, %632 : vector<16x36xf32>
    %c0_91 = arith.constant 0 : index
    %634 = memref.load %arg3[%c0_91] : memref<8xf32, #tpu.memory_space<smem>>
    %635 = vector.broadcast %634 : f32 to vector<16x36xf32>
    %636 = arith.addf %621, %635 : vector<16x36xf32>
    %cst_92 = arith.constant 0.000000e+00 : f32
    %637 = vector.broadcast %cst_92 : f32 to vector<16x36xf32>
    %638 = arith.maximumf %636, %637 : vector<16x36xf32>
    %c1_93 = arith.constant 1 : index
    %639 = memref.load %arg3[%c1_93] : memref<8xf32, #tpu.memory_space<smem>>
    %640 = vector.broadcast %639 : f32 to vector<16x36xf32>
    %641 = arith.addf %625, %640 : vector<16x36xf32>
    %cst_94 = arith.constant 0.000000e+00 : f32
    %642 = vector.broadcast %cst_94 : f32 to vector<16x36xf32>
    %643 = arith.maximumf %641, %642 : vector<16x36xf32>
    %c2_95 = arith.constant 2 : index
    %644 = memref.load %arg3[%c2_95] : memref<8xf32, #tpu.memory_space<smem>>
    %645 = vector.broadcast %644 : f32 to vector<16x36xf32>
    %646 = arith.addf %629, %645 : vector<16x36xf32>
    %cst_96 = arith.constant 0.000000e+00 : f32
    %647 = vector.broadcast %cst_96 : f32 to vector<16x36xf32>
    %648 = arith.maximumf %646, %647 : vector<16x36xf32>
    %c3_97 = arith.constant 3 : index
    %649 = memref.load %arg3[%c3_97] : memref<8xf32, #tpu.memory_space<smem>>
    %650 = vector.broadcast %649 : f32 to vector<16x36xf32>
    %651 = arith.addf %633, %650 : vector<16x36xf32>
    %cst_98 = arith.constant 0.000000e+00 : f32
    %652 = vector.broadcast %cst_98 : f32 to vector<16x36xf32>
    %653 = arith.maximumf %651, %652 : vector<16x36xf32>
    %c0_99 = arith.constant 0 : index
    %c1_100 = arith.constant 1 : index
    %c0_101 = arith.constant 0 : index
    %654 = vector.load %arg5[%c0_99, %c1_100, %c0_101] : memref<4x18x36xf32, #tpu.memory_space<vmem>>, vector<1x16x36xf32>
    %655 = vector.shape_cast %654 : vector<1x16x36xf32> to vector<16x36xf32>
    %656 = vector.shape_cast %638 : vector<16x36xf32> to vector<1x16x36xf32>
    tpu.vector_store %arg5[%c0_99, %c1_100, %c0_101], %656 {strides = array<i32>} : memref<4x18x36xf32, #tpu.memory_space<vmem>>, vector<1x16x36xf32>,
    %c1_102 = arith.constant 1 : index
    %c1_103 = arith.constant 1 : index
    %c0_104 = arith.constant 0 : index
    %657 = vector.load %arg5[%c1_102, %c1_103, %c0_104] : memref<4x18x36xf32, #tpu.memory_space<vmem>>, vector<1x16x36xf32>
    %658 = vector.shape_cast %657 : vector<1x16x36xf32> to vector<16x36xf32>
    %659 = vector.shape_cast %643 : vector<16x36xf32> to vector<1x16x36xf32>
    tpu.vector_store %arg5[%c1_102, %c1_103, %c0_104], %659 {strides = array<i32>} : memref<4x18x36xf32, #tpu.memory_space<vmem>>, vector<1x16x36xf32>,
    %c2_105 = arith.constant 2 : index
    %c1_106 = arith.constant 1 : index
    %c0_107 = arith.constant 0 : index
    %660 = vector.load %arg5[%c2_105, %c1_106, %c0_107] : memref<4x18x36xf32, #tpu.memory_space<vmem>>, vector<1x16x36xf32>
    %661 = vector.shape_cast %660 : vector<1x16x36xf32> to vector<16x36xf32>
    %662 = vector.shape_cast %648 : vector<16x36xf32> to vector<1x16x36xf32>
    tpu.vector_store %arg5[%c2_105, %c1_106, %c0_107], %662 {strides = array<i32>} : memref<4x18x36xf32, #tpu.memory_space<vmem>>, vector<1x16x36xf32>,
    %c3_108 = arith.constant 3 : index
    %c1_109 = arith.constant 1 : index
    %c0_110 = arith.constant 0 : index
    %663 = vector.load %arg5[%c3_108, %c1_109, %c0_110] : memref<4x18x36xf32, #tpu.memory_space<vmem>>, vector<1x16x36xf32>
    %664 = vector.shape_cast %663 : vector<1x16x36xf32> to vector<16x36xf32>
    %665 = vector.shape_cast %653 : vector<16x36xf32> to vector<1x16x36xf32>
    tpu.vector_store %arg5[%c3_108, %c1_109, %c0_110], %665 {strides = array<i32>} : memref<4x18x36xf32, #tpu.memory_space<vmem>>, vector<1x16x36xf32>,
    %cst_111 = arith.constant 0.000000e+00 : f32
    %666 = vector.broadcast %cst_111 : f32 to vector<4x16x1xf32>
    %c0_112 = arith.constant 0 : index
    %c1_113 = arith.constant 1 : index
    %c0_114 = arith.constant 0 : index
    %667 = vector.load %arg5[%c0_112, %c1_113, %c0_114] : memref<4x18x36xf32, #tpu.memory_space<vmem>>, vector<4x16x1xf32>
    tpu.vector_store %arg5[%c0_112, %c1_113, %c0_114], %666 {strides = array<i32>} : memref<4x18x36xf32, #tpu.memory_space<vmem>>, vector<4x16x1xf32>,
    %c0_115 = arith.constant 0 : index
    %c1_116 = arith.constant 1 : index
    %c17_117 = arith.constant 17 : index
    %668 = vector.load %arg5[%c0_115, %c1_116, %c17_117] : memref<4x18x36xf32, #tpu.memory_space<vmem>>, vector<4x16x1xf32>
    tpu.vector_store %arg5[%c0_115, %c1_116, %c17_117], %666 {strides = array<i32>} : memref<4x18x36xf32, #tpu.memory_space<vmem>>, vector<4x16x1xf32>,
    %c0_118 = arith.constant 0 : index
    %c1_119 = arith.constant 1 : index
    %c18_120 = arith.constant 18 : index
    %669 = vector.load %arg5[%c0_118, %c1_119, %c18_120] : memref<4x18x36xf32, #tpu.memory_space<vmem>>, vector<4x16x1xf32>
    tpu.vector_store %arg5[%c0_118, %c1_119, %c18_120], %666 {strides = array<i32>} : memref<4x18x36xf32, #tpu.memory_space<vmem>>, vector<4x16x1xf32>,
    %c0_121 = arith.constant 0 : index
    %c1_122 = arith.constant 1 : index
    %c35_123 = arith.constant 35 : index
    %670 = vector.load %arg5[%c0_121, %c1_122, %c35_123] : memref<4x18x36xf32, #tpu.memory_space<vmem>>, vector<4x16x1xf32>
    tpu.vector_store %arg5[%c0_121, %c1_122, %c35_123], %666 {strides = array<i32>} : memref<4x18x36xf32, #tpu.memory_space<vmem>>, vector<4x16x1xf32>,
    %c0_124 = arith.constant 0 : index
    %c0_125 = arith.constant 0 : index
    %c0_126 = arith.constant 0 : index
    %671 = vector.load %arg5[%c0_124, %c0_125, %c0_126] : memref<4x18x36xf32, #tpu.memory_space<vmem>>, vector<1x16x36xf32>
    %672 = vector.shape_cast %671 : vector<1x16x36xf32> to vector<16x36xf32>
    %c1_i32_127 = arith.constant 1 : i32
    %673 = tpu.dynamic_rotate %672 by %c1_i32_127 dim 1 : vector<16x36xf32>, i32 -> vector<16x36xf32>
    %c144 = arith.constant 144 : index
    %674 = memref.load %arg2[%c144] : memref<288xf32, #tpu.memory_space<smem>>
    %675 = vector.broadcast %674 : f32 to vector<16x36xf32>
    %676 = arith.mulf %675, %673 : vector<16x36xf32>
    %c180 = arith.constant 180 : index
    %677 = memref.load %arg2[%c180] : memref<288xf32, #tpu.memory_space<smem>>
    %678 = vector.broadcast %677 : f32 to vector<16x36xf32>
    %679 = arith.mulf %678, %673 : vector<16x36xf32>
    %c216 = arith.constant 216 : index
    %680 = memref.load %arg2[%c216] : memref<288xf32, #tpu.memory_space<smem>>
    %681 = vector.broadcast %680 : f32 to vector<16x36xf32>
    %682 = arith.mulf %681, %673 : vector<16x36xf32>
    %c252 = arith.constant 252 : index
    %683 = memref.load %arg2[%c252] : memref<288xf32, #tpu.memory_space<smem>>
    %684 = vector.broadcast %683 : f32 to vector<16x36xf32>
    %685 = arith.mulf %684, %673 : vector<16x36xf32>
    %c145 = arith.constant 145 : index
    %686 = memref.load %arg2[%c145] : memref<288xf32, #tpu.memory_space<smem>>
    %687 = vector.broadcast %686 : f32 to vector<16x36xf32>
    %688 = arith.mulf %687, %672 : vector<16x36xf32>
    %689 = arith.addf %676, %688 : vector<16x36xf32>
    %c181 = arith.constant 181 : index
    %690 = memref.load %arg2[%c181] : memref<288xf32, #tpu.memory_space<smem>>
    %691 = vector.broadcast %690 : f32 to vector<16x36xf32>
    %692 = arith.mulf %691, %672 : vector<16x36xf32>
    %693 = arith.addf %679, %692 : vector<16x36xf32>
    %c217 = arith.constant 217 : index
    %694 = memref.load %arg2[%c217] : memref<288xf32, #tpu.memory_space<smem>>
    %695 = vector.broadcast %694 : f32 to vector<16x36xf32>
    %696 = arith.mulf %695, %672 : vector<16x36xf32>
    %697 = arith.addf %682, %696 : vector<16x36xf32>
    %c253 = arith.constant 253 : index
    %698 = memref.load %arg2[%c253] : memref<288xf32, #tpu.memory_space<smem>>
    %699 = vector.broadcast %698 : f32 to vector<16x36xf32>
    %700 = arith.mulf %699, %672 : vector<16x36xf32>
    %701 = arith.addf %685, %700 : vector<16x36xf32>
    %c35_i32_128 = arith.constant 35 : i32
    %702 = tpu.dynamic_rotate %672 by %c35_i32_128 dim 1 : vector<16x36xf32>, i32 -> vector<16x36xf32>
    %c146 = arith.constant 146 : index
    %703 = memref.load %arg2[%c146] : memref<288xf32, #tpu.memory_space<smem>>
    %704 = vector.broadcast %703 : f32 to vector<16x36xf32>
    %705 = arith.mulf %704, %702 : vector<16x36xf32>
    %706 = arith.addf %689, %705 : vector<16x36xf32>
    %c182 = arith.constant 182 : index
    %707 = memref.load %arg2[%c182] : memref<288xf32, #tpu.memory_space<smem>>
    %708 = vector.broadcast %707 : f32 to vector<16x36xf32>
    %709 = arith.mulf %708, %702 : vector<16x36xf32>
    %710 = arith.addf %693, %709 : vector<16x36xf32>
    %c218 = arith.constant 218 : index
    %711 = memref.load %arg2[%c218] : memref<288xf32, #tpu.memory_space<smem>>
    %712 = vector.broadcast %711 : f32 to vector<16x36xf32>
    %713 = arith.mulf %712, %702 : vector<16x36xf32>
    %714 = arith.addf %697, %713 : vector<16x36xf32>
    %c254 = arith.constant 254 : index
    %715 = memref.load %arg2[%c254] : memref<288xf32, #tpu.memory_space<smem>>
    %716 = vector.broadcast %715 : f32 to vector<16x36xf32>
    %717 = arith.mulf %716, %702 : vector<16x36xf32>
    %718 = arith.addf %701, %717 : vector<16x36xf32>
    %c0_129 = arith.constant 0 : index
    %c1_130 = arith.constant 1 : index
    %c0_131 = arith.constant 0 : index
    %719 = vector.load %arg5[%c0_129, %c1_130, %c0_131] : memref<4x18x36xf32, #tpu.memory_space<vmem>>, vector<1x16x36xf32>
    %720 = vector.shape_cast %719 : vector<1x16x36xf32> to vector<16x36xf32>
    %c1_i32_132 = arith.constant 1 : i32
    %721 = tpu.dynamic_rotate %720 by %c1_i32_132 dim 1 : vector<16x36xf32>, i32 -> vector<16x36xf32>
    %c147 = arith.constant 147 : index
    %722 = memref.load %arg2[%c147] : memref<288xf32, #tpu.memory_space<smem>>
    %723 = vector.broadcast %722 : f32 to vector<16x36xf32>
    %724 = arith.mulf %723, %721 : vector<16x36xf32>
    %725 = arith.addf %706, %724 : vector<16x36xf32>
    %c183 = arith.constant 183 : index
    %726 = memref.load %arg2[%c183] : memref<288xf32, #tpu.memory_space<smem>>
    %727 = vector.broadcast %726 : f32 to vector<16x36xf32>
    %728 = arith.mulf %727, %721 : vector<16x36xf32>
    %729 = arith.addf %710, %728 : vector<16x36xf32>
    %c219 = arith.constant 219 : index
    %730 = memref.load %arg2[%c219] : memref<288xf32, #tpu.memory_space<smem>>
    %731 = vector.broadcast %730 : f32 to vector<16x36xf32>
    %732 = arith.mulf %731, %721 : vector<16x36xf32>
    %733 = arith.addf %714, %732 : vector<16x36xf32>
    %c255 = arith.constant 255 : index
    %734 = memref.load %arg2[%c255] : memref<288xf32, #tpu.memory_space<smem>>
    %735 = vector.broadcast %734 : f32 to vector<16x36xf32>
    %736 = arith.mulf %735, %721 : vector<16x36xf32>
    %737 = arith.addf %718, %736 : vector<16x36xf32>
    %c148 = arith.constant 148 : index
    %738 = memref.load %arg2[%c148] : memref<288xf32, #tpu.memory_space<smem>>
    %739 = vector.broadcast %738 : f32 to vector<16x36xf32>
    %740 = arith.mulf %739, %720 : vector<16x36xf32>
    %741 = arith.addf %725, %740 : vector<16x36xf32>
    %c184 = arith.constant 184 : index
    %742 = memref.load %arg2[%c184] : memref<288xf32, #tpu.memory_space<smem>>
    %743 = vector.broadcast %742 : f32 to vector<16x36xf32>
    %744 = arith.mulf %743, %720 : vector<16x36xf32>
    %745 = arith.addf %729, %744 : vector<16x36xf32>
    %c220 = arith.constant 220 : index
    %746 = memref.load %arg2[%c220] : memref<288xf32, #tpu.memory_space<smem>>
    %747 = vector.broadcast %746 : f32 to vector<16x36xf32>
    %748 = arith.mulf %747, %720 : vector<16x36xf32>
    %749 = arith.addf %733, %748 : vector<16x36xf32>
    %c256 = arith.constant 256 : index
    %750 = memref.load %arg2[%c256] : memref<288xf32, #tpu.memory_space<smem>>
    %751 = vector.broadcast %750 : f32 to vector<16x36xf32>
    %752 = arith.mulf %751, %720 : vector<16x36xf32>
    %753 = arith.addf %737, %752 : vector<16x36xf32>
    %c35_i32_133 = arith.constant 35 : i32
    %754 = tpu.dynamic_rotate %720 by %c35_i32_133 dim 1 : vector<16x36xf32>, i32 -> vector<16x36xf32>
    %c149 = arith.constant 149 : index
    %755 = memref.load %arg2[%c149] : memref<288xf32, #tpu.memory_space<smem>>
    %756 = vector.broadcast %755 : f32 to vector<16x36xf32>
    %757 = arith.mulf %756, %754 : vector<16x36xf32>
    %758 = arith.addf %741, %757 : vector<16x36xf32>
    %c185 = arith.constant 185 : index
    %759 = memref.load %arg2[%c185] : memref<288xf32, #tpu.memory_space<smem>>
    %760 = vector.broadcast %759 : f32 to vector<16x36xf32>
    %761 = arith.mulf %760, %754 : vector<16x36xf32>
    %762 = arith.addf %745, %761 : vector<16x36xf32>
    %c221 = arith.constant 221 : index
    %763 = memref.load %arg2[%c221] : memref<288xf32, #tpu.memory_space<smem>>
    %764 = vector.broadcast %763 : f32 to vector<16x36xf32>
    %765 = arith.mulf %764, %754 : vector<16x36xf32>
    %766 = arith.addf %749, %765 : vector<16x36xf32>
    %c257 = arith.constant 257 : index
    %767 = memref.load %arg2[%c257] : memref<288xf32, #tpu.memory_space<smem>>
    %768 = vector.broadcast %767 : f32 to vector<16x36xf32>
    %769 = arith.mulf %768, %754 : vector<16x36xf32>
    %770 = arith.addf %753, %769 : vector<16x36xf32>
    %c0_134 = arith.constant 0 : index
    %c2_135 = arith.constant 2 : index
    %c0_136 = arith.constant 0 : index
    %771 = vector.load %arg5[%c0_134, %c2_135, %c0_136] : memref<4x18x36xf32, #tpu.memory_space<vmem>>, vector<1x16x36xf32>
    %772 = vector.shape_cast %771 : vector<1x16x36xf32> to vector<16x36xf32>
    %c1_i32_137 = arith.constant 1 : i32
    %773 = tpu.dynamic_rotate %772 by %c1_i32_137 dim 1 : vector<16x36xf32>, i32 -> vector<16x36xf32>
    %c150 = arith.constant 150 : index
    %774 = memref.load %arg2[%c150] : memref<288xf32, #tpu.memory_space<smem>>
    %775 = vector.broadcast %774 : f32 to vector<16x36xf32>
    %776 = arith.mulf %775, %773 : vector<16x36xf32>
    %777 = arith.addf %758, %776 : vector<16x36xf32>
    %c186 = arith.constant 186 : index
    %778 = memref.load %arg2[%c186] : memref<288xf32, #tpu.memory_space<smem>>
    %779 = vector.broadcast %778 : f32 to vector<16x36xf32>
    %780 = arith.mulf %779, %773 : vector<16x36xf32>
    %781 = arith.addf %762, %780 : vector<16x36xf32>
    %c222 = arith.constant 222 : index
    %782 = memref.load %arg2[%c222] : memref<288xf32, #tpu.memory_space<smem>>
    %783 = vector.broadcast %782 : f32 to vector<16x36xf32>
    %784 = arith.mulf %783, %773 : vector<16x36xf32>
    %785 = arith.addf %766, %784 : vector<16x36xf32>
    %c258 = arith.constant 258 : index
    %786 = memref.load %arg2[%c258] : memref<288xf32, #tpu.memory_space<smem>>
    %787 = vector.broadcast %786 : f32 to vector<16x36xf32>
    %788 = arith.mulf %787, %773 : vector<16x36xf32>
    %789 = arith.addf %770, %788 : vector<16x36xf32>
    %c151 = arith.constant 151 : index
    %790 = memref.load %arg2[%c151] : memref<288xf32, #tpu.memory_space<smem>>
    %791 = vector.broadcast %790 : f32 to vector<16x36xf32>
    %792 = arith.mulf %791, %772 : vector<16x36xf32>
    %793 = arith.addf %777, %792 : vector<16x36xf32>
    %c187 = arith.constant 187 : index
    %794 = memref.load %arg2[%c187] : memref<288xf32, #tpu.memory_space<smem>>
    %795 = vector.broadcast %794 : f32 to vector<16x36xf32>
    %796 = arith.mulf %795, %772 : vector<16x36xf32>
    %797 = arith.addf %781, %796 : vector<16x36xf32>
    %c223 = arith.constant 223 : index
    %798 = memref.load %arg2[%c223] : memref<288xf32, #tpu.memory_space<smem>>
    %799 = vector.broadcast %798 : f32 to vector<16x36xf32>
    %800 = arith.mulf %799, %772 : vector<16x36xf32>
    %801 = arith.addf %785, %800 : vector<16x36xf32>
    %c259 = arith.constant 259 : index
    %802 = memref.load %arg2[%c259] : memref<288xf32, #tpu.memory_space<smem>>
    %803 = vector.broadcast %802 : f32 to vector<16x36xf32>
    %804 = arith.mulf %803, %772 : vector<16x36xf32>
    %805 = arith.addf %789, %804 : vector<16x36xf32>
    %c35_i32_138 = arith.constant 35 : i32
    %806 = tpu.dynamic_rotate %772 by %c35_i32_138 dim 1 : vector<16x36xf32>, i32 -> vector<16x36xf32>
    %c152 = arith.constant 152 : index
    %807 = memref.load %arg2[%c152] : memref<288xf32, #tpu.memory_space<smem>>
    %808 = vector.broadcast %807 : f32 to vector<16x36xf32>
    %809 = arith.mulf %808, %806 : vector<16x36xf32>
    %810 = arith.addf %793, %809 : vector<16x36xf32>
    %c188 = arith.constant 188 : index
    %811 = memref.load %arg2[%c188] : memref<288xf32, #tpu.memory_space<smem>>
    %812 = vector.broadcast %811 : f32 to vector<16x36xf32>
    %813 = arith.mulf %812, %806 : vector<16x36xf32>
    %814 = arith.addf %797, %813 : vector<16x36xf32>
    %c224 = arith.constant 224 : index
    %815 = memref.load %arg2[%c224] : memref<288xf32, #tpu.memory_space<smem>>
    %816 = vector.broadcast %815 : f32 to vector<16x36xf32>
    %817 = arith.mulf %816, %806 : vector<16x36xf32>
    %818 = arith.addf %801, %817 : vector<16x36xf32>
    %c260 = arith.constant 260 : index
    %819 = memref.load %arg2[%c260] : memref<288xf32, #tpu.memory_space<smem>>
    %820 = vector.broadcast %819 : f32 to vector<16x36xf32>
    %821 = arith.mulf %820, %806 : vector<16x36xf32>
    %822 = arith.addf %805, %821 : vector<16x36xf32>
    %c1_139 = arith.constant 1 : index
    %c0_140 = arith.constant 0 : index
    %c0_141 = arith.constant 0 : index
    %823 = vector.load %arg5[%c1_139, %c0_140, %c0_141] : memref<4x18x36xf32, #tpu.memory_space<vmem>>, vector<1x16x36xf32>
    %824 = vector.shape_cast %823 : vector<1x16x36xf32> to vector<16x36xf32>
    %c1_i32_142 = arith.constant 1 : i32
    %825 = tpu.dynamic_rotate %824 by %c1_i32_142 dim 1 : vector<16x36xf32>, i32 -> vector<16x36xf32>
    %c153 = arith.constant 153 : index
    %826 = memref.load %arg2[%c153] : memref<288xf32, #tpu.memory_space<smem>>
    %827 = vector.broadcast %826 : f32 to vector<16x36xf32>
    %828 = arith.mulf %827, %825 : vector<16x36xf32>
    %829 = arith.addf %810, %828 : vector<16x36xf32>
    %c189 = arith.constant 189 : index
    %830 = memref.load %arg2[%c189] : memref<288xf32, #tpu.memory_space<smem>>
    %831 = vector.broadcast %830 : f32 to vector<16x36xf32>
    %832 = arith.mulf %831, %825 : vector<16x36xf32>
    %833 = arith.addf %814, %832 : vector<16x36xf32>
    %c225 = arith.constant 225 : index
    %834 = memref.load %arg2[%c225] : memref<288xf32, #tpu.memory_space<smem>>
    %835 = vector.broadcast %834 : f32 to vector<16x36xf32>
    %836 = arith.mulf %835, %825 : vector<16x36xf32>
    %837 = arith.addf %818, %836 : vector<16x36xf32>
    %c261 = arith.constant 261 : index
    %838 = memref.load %arg2[%c261] : memref<288xf32, #tpu.memory_space<smem>>
    %839 = vector.broadcast %838 : f32 to vector<16x36xf32>
    %840 = arith.mulf %839, %825 : vector<16x36xf32>
    %841 = arith.addf %822, %840 : vector<16x36xf32>
    %c154 = arith.constant 154 : index
    %842 = memref.load %arg2[%c154] : memref<288xf32, #tpu.memory_space<smem>>
    %843 = vector.broadcast %842 : f32 to vector<16x36xf32>
    %844 = arith.mulf %843, %824 : vector<16x36xf32>
    %845 = arith.addf %829, %844 : vector<16x36xf32>
    %c190 = arith.constant 190 : index
    %846 = memref.load %arg2[%c190] : memref<288xf32, #tpu.memory_space<smem>>
    %847 = vector.broadcast %846 : f32 to vector<16x36xf32>
    %848 = arith.mulf %847, %824 : vector<16x36xf32>
    %849 = arith.addf %833, %848 : vector<16x36xf32>
    %c226 = arith.constant 226 : index
    %850 = memref.load %arg2[%c226] : memref<288xf32, #tpu.memory_space<smem>>
    %851 = vector.broadcast %850 : f32 to vector<16x36xf32>
    %852 = arith.mulf %851, %824 : vector<16x36xf32>
    %853 = arith.addf %837, %852 : vector<16x36xf32>
    %c262 = arith.constant 262 : index
    %854 = memref.load %arg2[%c262] : memref<288xf32, #tpu.memory_space<smem>>
    %855 = vector.broadcast %854 : f32 to vector<16x36xf32>
    %856 = arith.mulf %855, %824 : vector<16x36xf32>
    %857 = arith.addf %841, %856 : vector<16x36xf32>
    %c35_i32_143 = arith.constant 35 : i32
    %858 = tpu.dynamic_rotate %824 by %c35_i32_143 dim 1 : vector<16x36xf32>, i32 -> vector<16x36xf32>
    %c155 = arith.constant 155 : index
    %859 = memref.load %arg2[%c155] : memref<288xf32, #tpu.memory_space<smem>>
    %860 = vector.broadcast %859 : f32 to vector<16x36xf32>
    %861 = arith.mulf %860, %858 : vector<16x36xf32>
    %862 = arith.addf %845, %861 : vector<16x36xf32>
    %c191 = arith.constant 191 : index
    %863 = memref.load %arg2[%c191] : memref<288xf32, #tpu.memory_space<smem>>
    %864 = vector.broadcast %863 : f32 to vector<16x36xf32>
    %865 = arith.mulf %864, %858 : vector<16x36xf32>
    %866 = arith.addf %849, %865 : vector<16x36xf32>
    %c227 = arith.constant 227 : index
    %867 = memref.load %arg2[%c227] : memref<288xf32, #tpu.memory_space<smem>>
    %868 = vector.broadcast %867 : f32 to vector<16x36xf32>
    %869 = arith.mulf %868, %858 : vector<16x36xf32>
    %870 = arith.addf %853, %869 : vector<16x36xf32>
    %c263 = arith.constant 263 : index
    %871 = memref.load %arg2[%c263] : memref<288xf32, #tpu.memory_space<smem>>
    %872 = vector.broadcast %871 : f32 to vector<16x36xf32>
    %873 = arith.mulf %872, %858 : vector<16x36xf32>
    %874 = arith.addf %857, %873 : vector<16x36xf32>
    %c1_144 = arith.constant 1 : index
    %c1_145 = arith.constant 1 : index
    %c0_146 = arith.constant 0 : index
    %875 = vector.load %arg5[%c1_144, %c1_145, %c0_146] : memref<4x18x36xf32, #tpu.memory_space<vmem>>, vector<1x16x36xf32>
    %876 = vector.shape_cast %875 : vector<1x16x36xf32> to vector<16x36xf32>
    %c1_i32_147 = arith.constant 1 : i32
    %877 = tpu.dynamic_rotate %876 by %c1_i32_147 dim 1 : vector<16x36xf32>, i32 -> vector<16x36xf32>
    %c156 = arith.constant 156 : index
    %878 = memref.load %arg2[%c156] : memref<288xf32, #tpu.memory_space<smem>>
    %879 = vector.broadcast %878 : f32 to vector<16x36xf32>
    %880 = arith.mulf %879, %877 : vector<16x36xf32>
    %881 = arith.addf %862, %880 : vector<16x36xf32>
    %c192 = arith.constant 192 : index
    %882 = memref.load %arg2[%c192] : memref<288xf32, #tpu.memory_space<smem>>
    %883 = vector.broadcast %882 : f32 to vector<16x36xf32>
    %884 = arith.mulf %883, %877 : vector<16x36xf32>
    %885 = arith.addf %866, %884 : vector<16x36xf32>
    %c228 = arith.constant 228 : index
    %886 = memref.load %arg2[%c228] : memref<288xf32, #tpu.memory_space<smem>>
    %887 = vector.broadcast %886 : f32 to vector<16x36xf32>
    %888 = arith.mulf %887, %877 : vector<16x36xf32>
    %889 = arith.addf %870, %888 : vector<16x36xf32>
    %c264 = arith.constant 264 : index
    %890 = memref.load %arg2[%c264] : memref<288xf32, #tpu.memory_space<smem>>
    %891 = vector.broadcast %890 : f32 to vector<16x36xf32>
    %892 = arith.mulf %891, %877 : vector<16x36xf32>
    %893 = arith.addf %874, %892 : vector<16x36xf32>
    %c157 = arith.constant 157 : index
    %894 = memref.load %arg2[%c157] : memref<288xf32, #tpu.memory_space<smem>>
    %895 = vector.broadcast %894 : f32 to vector<16x36xf32>
    %896 = arith.mulf %895, %876 : vector<16x36xf32>
    %897 = arith.addf %881, %896 : vector<16x36xf32>
    %c193 = arith.constant 193 : index
    %898 = memref.load %arg2[%c193] : memref<288xf32, #tpu.memory_space<smem>>
    %899 = vector.broadcast %898 : f32 to vector<16x36xf32>
    %900 = arith.mulf %899, %876 : vector<16x36xf32>
    %901 = arith.addf %885, %900 : vector<16x36xf32>
    %c229 = arith.constant 229 : index
    %902 = memref.load %arg2[%c229] : memref<288xf32, #tpu.memory_space<smem>>
    %903 = vector.broadcast %902 : f32 to vector<16x36xf32>
    %904 = arith.mulf %903, %876 : vector<16x36xf32>
    %905 = arith.addf %889, %904 : vector<16x36xf32>
    %c265 = arith.constant 265 : index
    %906 = memref.load %arg2[%c265] : memref<288xf32, #tpu.memory_space<smem>>
    %907 = vector.broadcast %906 : f32 to vector<16x36xf32>
    %908 = arith.mulf %907, %876 : vector<16x36xf32>
    %909 = arith.addf %893, %908 : vector<16x36xf32>
    %c35_i32_148 = arith.constant 35 : i32
    %910 = tpu.dynamic_rotate %876 by %c35_i32_148 dim 1 : vector<16x36xf32>, i32 -> vector<16x36xf32>
    %c158 = arith.constant 158 : index
    %911 = memref.load %arg2[%c158] : memref<288xf32, #tpu.memory_space<smem>>
    %912 = vector.broadcast %911 : f32 to vector<16x36xf32>
    %913 = arith.mulf %912, %910 : vector<16x36xf32>
    %914 = arith.addf %897, %913 : vector<16x36xf32>
    %c194 = arith.constant 194 : index
    %915 = memref.load %arg2[%c194] : memref<288xf32, #tpu.memory_space<smem>>
    %916 = vector.broadcast %915 : f32 to vector<16x36xf32>
    %917 = arith.mulf %916, %910 : vector<16x36xf32>
    %918 = arith.addf %901, %917 : vector<16x36xf32>
    %c230 = arith.constant 230 : index
    %919 = memref.load %arg2[%c230] : memref<288xf32, #tpu.memory_space<smem>>
    %920 = vector.broadcast %919 : f32 to vector<16x36xf32>
    %921 = arith.mulf %920, %910 : vector<16x36xf32>
    %922 = arith.addf %905, %921 : vector<16x36xf32>
    %c266 = arith.constant 266 : index
    %923 = memref.load %arg2[%c266] : memref<288xf32, #tpu.memory_space<smem>>
    %924 = vector.broadcast %923 : f32 to vector<16x36xf32>
    %925 = arith.mulf %924, %910 : vector<16x36xf32>
    %926 = arith.addf %909, %925 : vector<16x36xf32>
    %c1_149 = arith.constant 1 : index
    %c2_150 = arith.constant 2 : index
    %c0_151 = arith.constant 0 : index
    %927 = vector.load %arg5[%c1_149, %c2_150, %c0_151] : memref<4x18x36xf32, #tpu.memory_space<vmem>>, vector<1x16x36xf32>
    %928 = vector.shape_cast %927 : vector<1x16x36xf32> to vector<16x36xf32>
    %c1_i32_152 = arith.constant 1 : i32
    %929 = tpu.dynamic_rotate %928 by %c1_i32_152 dim 1 : vector<16x36xf32>, i32 -> vector<16x36xf32>
    %c159 = arith.constant 159 : index
    %930 = memref.load %arg2[%c159] : memref<288xf32, #tpu.memory_space<smem>>
    %931 = vector.broadcast %930 : f32 to vector<16x36xf32>
    %932 = arith.mulf %931, %929 : vector<16x36xf32>
    %933 = arith.addf %914, %932 : vector<16x36xf32>
    %c195 = arith.constant 195 : index
    %934 = memref.load %arg2[%c195] : memref<288xf32, #tpu.memory_space<smem>>
    %935 = vector.broadcast %934 : f32 to vector<16x36xf32>
    %936 = arith.mulf %935, %929 : vector<16x36xf32>
    %937 = arith.addf %918, %936 : vector<16x36xf32>
    %c231 = arith.constant 231 : index
    %938 = memref.load %arg2[%c231] : memref<288xf32, #tpu.memory_space<smem>>
    %939 = vector.broadcast %938 : f32 to vector<16x36xf32>
    %940 = arith.mulf %939, %929 : vector<16x36xf32>
    %941 = arith.addf %922, %940 : vector<16x36xf32>
    %c267 = arith.constant 267 : index
    %942 = memref.load %arg2[%c267] : memref<288xf32, #tpu.memory_space<smem>>
    %943 = vector.broadcast %942 : f32 to vector<16x36xf32>
    %944 = arith.mulf %943, %929 : vector<16x36xf32>
    %945 = arith.addf %926, %944 : vector<16x36xf32>
    %c160 = arith.constant 160 : index
    %946 = memref.load %arg2[%c160] : memref<288xf32, #tpu.memory_space<smem>>
    %947 = vector.broadcast %946 : f32 to vector<16x36xf32>
    %948 = arith.mulf %947, %928 : vector<16x36xf32>
    %949 = arith.addf %933, %948 : vector<16x36xf32>
    %c196 = arith.constant 196 : index
    %950 = memref.load %arg2[%c196] : memref<288xf32, #tpu.memory_space<smem>>
    %951 = vector.broadcast %950 : f32 to vector<16x36xf32>
    %952 = arith.mulf %951, %928 : vector<16x36xf32>
    %953 = arith.addf %937, %952 : vector<16x36xf32>
    %c232 = arith.constant 232 : index
    %954 = memref.load %arg2[%c232] : memref<288xf32, #tpu.memory_space<smem>>
    %955 = vector.broadcast %954 : f32 to vector<16x36xf32>
    %956 = arith.mulf %955, %928 : vector<16x36xf32>
    %957 = arith.addf %941, %956 : vector<16x36xf32>
    %c268 = arith.constant 268 : index
    %958 = memref.load %arg2[%c268] : memref<288xf32, #tpu.memory_space<smem>>
    %959 = vector.broadcast %958 : f32 to vector<16x36xf32>
    %960 = arith.mulf %959, %928 : vector<16x36xf32>
    %961 = arith.addf %945, %960 : vector<16x36xf32>
    %c35_i32_153 = arith.constant 35 : i32
    %962 = tpu.dynamic_rotate %928 by %c35_i32_153 dim 1 : vector<16x36xf32>, i32 -> vector<16x36xf32>
    %c161 = arith.constant 161 : index
    %963 = memref.load %arg2[%c161] : memref<288xf32, #tpu.memory_space<smem>>
    %964 = vector.broadcast %963 : f32 to vector<16x36xf32>
    %965 = arith.mulf %964, %962 : vector<16x36xf32>
    %966 = arith.addf %949, %965 : vector<16x36xf32>
    %c197 = arith.constant 197 : index
    %967 = memref.load %arg2[%c197] : memref<288xf32, #tpu.memory_space<smem>>
    %968 = vector.broadcast %967 : f32 to vector<16x36xf32>
    %969 = arith.mulf %968, %962 : vector<16x36xf32>
    %970 = arith.addf %953, %969 : vector<16x36xf32>
    %c233 = arith.constant 233 : index
    %971 = memref.load %arg2[%c233] : memref<288xf32, #tpu.memory_space<smem>>
    %972 = vector.broadcast %971 : f32 to vector<16x36xf32>
    %973 = arith.mulf %972, %962 : vector<16x36xf32>
    %974 = arith.addf %957, %973 : vector<16x36xf32>
    %c269 = arith.constant 269 : index
    %975 = memref.load %arg2[%c269] : memref<288xf32, #tpu.memory_space<smem>>
    %976 = vector.broadcast %975 : f32 to vector<16x36xf32>
    %977 = arith.mulf %976, %962 : vector<16x36xf32>
    %978 = arith.addf %961, %977 : vector<16x36xf32>
    %c2_154 = arith.constant 2 : index
    %c0_155 = arith.constant 0 : index
    %c0_156 = arith.constant 0 : index
    %979 = vector.load %arg5[%c2_154, %c0_155, %c0_156] : memref<4x18x36xf32, #tpu.memory_space<vmem>>, vector<1x16x36xf32>
    %980 = vector.shape_cast %979 : vector<1x16x36xf32> to vector<16x36xf32>
    %c1_i32_157 = arith.constant 1 : i32
    %981 = tpu.dynamic_rotate %980 by %c1_i32_157 dim 1 : vector<16x36xf32>, i32 -> vector<16x36xf32>
    %c162 = arith.constant 162 : index
    %982 = memref.load %arg2[%c162] : memref<288xf32, #tpu.memory_space<smem>>
    %983 = vector.broadcast %982 : f32 to vector<16x36xf32>
    %984 = arith.mulf %983, %981 : vector<16x36xf32>
    %985 = arith.addf %966, %984 : vector<16x36xf32>
    %c198 = arith.constant 198 : index
    %986 = memref.load %arg2[%c198] : memref<288xf32, #tpu.memory_space<smem>>
    %987 = vector.broadcast %986 : f32 to vector<16x36xf32>
    %988 = arith.mulf %987, %981 : vector<16x36xf32>
    %989 = arith.addf %970, %988 : vector<16x36xf32>
    %c234 = arith.constant 234 : index
    %990 = memref.load %arg2[%c234] : memref<288xf32, #tpu.memory_space<smem>>
    %991 = vector.broadcast %990 : f32 to vector<16x36xf32>
    %992 = arith.mulf %991, %981 : vector<16x36xf32>
    %993 = arith.addf %974, %992 : vector<16x36xf32>
    %c270 = arith.constant 270 : index
    %994 = memref.load %arg2[%c270] : memref<288xf32, #tpu.memory_space<smem>>
    %995 = vector.broadcast %994 : f32 to vector<16x36xf32>
    %996 = arith.mulf %995, %981 : vector<16x36xf32>
    %997 = arith.addf %978, %996 : vector<16x36xf32>
    %c163 = arith.constant 163 : index
    %998 = memref.load %arg2[%c163] : memref<288xf32, #tpu.memory_space<smem>>
    %999 = vector.broadcast %998 : f32 to vector<16x36xf32>
    %1000 = arith.mulf %999, %980 : vector<16x36xf32>
    %1001 = arith.addf %985, %1000 : vector<16x36xf32>
    %c199 = arith.constant 199 : index
    %1002 = memref.load %arg2[%c199] : memref<288xf32, #tpu.memory_space<smem>>
    %1003 = vector.broadcast %1002 : f32 to vector<16x36xf32>
    %1004 = arith.mulf %1003, %980 : vector<16x36xf32>
    %1005 = arith.addf %989, %1004 : vector<16x36xf32>
    %c235 = arith.constant 235 : index
    %1006 = memref.load %arg2[%c235] : memref<288xf32, #tpu.memory_space<smem>>
    %1007 = vector.broadcast %1006 : f32 to vector<16x36xf32>
    %1008 = arith.mulf %1007, %980 : vector<16x36xf32>
    %1009 = arith.addf %993, %1008 : vector<16x36xf32>
    %c271 = arith.constant 271 : index
    %1010 = memref.load %arg2[%c271] : memref<288xf32, #tpu.memory_space<smem>>
    %1011 = vector.broadcast %1010 : f32 to vector<16x36xf32>
    %1012 = arith.mulf %1011, %980 : vector<16x36xf32>
    %1013 = arith.addf %997, %1012 : vector<16x36xf32>
    %c35_i32_158 = arith.constant 35 : i32
    %1014 = tpu.dynamic_rotate %980 by %c35_i32_158 dim 1 : vector<16x36xf32>, i32 -> vector<16x36xf32>
    %c164 = arith.constant 164 : index
    %1015 = memref.load %arg2[%c164] : memref<288xf32, #tpu.memory_space<smem>>
    %1016 = vector.broadcast %1015 : f32 to vector<16x36xf32>
    %1017 = arith.mulf %1016, %1014 : vector<16x36xf32>
    %1018 = arith.addf %1001, %1017 : vector<16x36xf32>
    %c200 = arith.constant 200 : index
    %1019 = memref.load %arg2[%c200] : memref<288xf32, #tpu.memory_space<smem>>
    %1020 = vector.broadcast %1019 : f32 to vector<16x36xf32>
    %1021 = arith.mulf %1020, %1014 : vector<16x36xf32>
    %1022 = arith.addf %1005, %1021 : vector<16x36xf32>
    %c236 = arith.constant 236 : index
    %1023 = memref.load %arg2[%c236] : memref<288xf32, #tpu.memory_space<smem>>
    %1024 = vector.broadcast %1023 : f32 to vector<16x36xf32>
    %1025 = arith.mulf %1024, %1014 : vector<16x36xf32>
    %1026 = arith.addf %1009, %1025 : vector<16x36xf32>
    %c272 = arith.constant 272 : index
    %1027 = memref.load %arg2[%c272] : memref<288xf32, #tpu.memory_space<smem>>
    %1028 = vector.broadcast %1027 : f32 to vector<16x36xf32>
    %1029 = arith.mulf %1028, %1014 : vector<16x36xf32>
    %1030 = arith.addf %1013, %1029 : vector<16x36xf32>
    %c2_159 = arith.constant 2 : index
    %c1_160 = arith.constant 1 : index
    %c0_161 = arith.constant 0 : index
    %1031 = vector.load %arg5[%c2_159, %c1_160, %c0_161] : memref<4x18x36xf32, #tpu.memory_space<vmem>>, vector<1x16x36xf32>
    %1032 = vector.shape_cast %1031 : vector<1x16x36xf32> to vector<16x36xf32>
    %c1_i32_162 = arith.constant 1 : i32
    %1033 = tpu.dynamic_rotate %1032 by %c1_i32_162 dim 1 : vector<16x36xf32>, i32 -> vector<16x36xf32>
    %c165 = arith.constant 165 : index
    %1034 = memref.load %arg2[%c165] : memref<288xf32, #tpu.memory_space<smem>>
    %1035 = vector.broadcast %1034 : f32 to vector<16x36xf32>
    %1036 = arith.mulf %1035, %1033 : vector<16x36xf32>
    %1037 = arith.addf %1018, %1036 : vector<16x36xf32>
    %c201 = arith.constant 201 : index
    %1038 = memref.load %arg2[%c201] : memref<288xf32, #tpu.memory_space<smem>>
    %1039 = vector.broadcast %1038 : f32 to vector<16x36xf32>
    %1040 = arith.mulf %1039, %1033 : vector<16x36xf32>
    %1041 = arith.addf %1022, %1040 : vector<16x36xf32>
    %c237 = arith.constant 237 : index
    %1042 = memref.load %arg2[%c237] : memref<288xf32, #tpu.memory_space<smem>>
    %1043 = vector.broadcast %1042 : f32 to vector<16x36xf32>
    %1044 = arith.mulf %1043, %1033 : vector<16x36xf32>
    %1045 = arith.addf %1026, %1044 : vector<16x36xf32>
    %c273 = arith.constant 273 : index
    %1046 = memref.load %arg2[%c273] : memref<288xf32, #tpu.memory_space<smem>>
    %1047 = vector.broadcast %1046 : f32 to vector<16x36xf32>
    %1048 = arith.mulf %1047, %1033 : vector<16x36xf32>
    %1049 = arith.addf %1030, %1048 : vector<16x36xf32>
    %c166 = arith.constant 166 : index
    %1050 = memref.load %arg2[%c166] : memref<288xf32, #tpu.memory_space<smem>>
    %1051 = vector.broadcast %1050 : f32 to vector<16x36xf32>
    %1052 = arith.mulf %1051, %1032 : vector<16x36xf32>
    %1053 = arith.addf %1037, %1052 : vector<16x36xf32>
    %c202 = arith.constant 202 : index
    %1054 = memref.load %arg2[%c202] : memref<288xf32, #tpu.memory_space<smem>>
    %1055 = vector.broadcast %1054 : f32 to vector<16x36xf32>
    %1056 = arith.mulf %1055, %1032 : vector<16x36xf32>
    %1057 = arith.addf %1041, %1056 : vector<16x36xf32>
    %c238 = arith.constant 238 : index
    %1058 = memref.load %arg2[%c238] : memref<288xf32, #tpu.memory_space<smem>>
    %1059 = vector.broadcast %1058 : f32 to vector<16x36xf32>
    %1060 = arith.mulf %1059, %1032 : vector<16x36xf32>
    %1061 = arith.addf %1045, %1060 : vector<16x36xf32>
    %c274 = arith.constant 274 : index
    %1062 = memref.load %arg2[%c274] : memref<288xf32, #tpu.memory_space<smem>>
    %1063 = vector.broadcast %1062 : f32 to vector<16x36xf32>
    %1064 = arith.mulf %1063, %1032 : vector<16x36xf32>
    %1065 = arith.addf %1049, %1064 : vector<16x36xf32>
    %c35_i32_163 = arith.constant 35 : i32
    %1066 = tpu.dynamic_rotate %1032 by %c35_i32_163 dim 1 : vector<16x36xf32>, i32 -> vector<16x36xf32>
    %c167 = arith.constant 167 : index
    %1067 = memref.load %arg2[%c167] : memref<288xf32, #tpu.memory_space<smem>>
    %1068 = vector.broadcast %1067 : f32 to vector<16x36xf32>
    %1069 = arith.mulf %1068, %1066 : vector<16x36xf32>
    %1070 = arith.addf %1053, %1069 : vector<16x36xf32>
    %c203 = arith.constant 203 : index
    %1071 = memref.load %arg2[%c203] : memref<288xf32, #tpu.memory_space<smem>>
    %1072 = vector.broadcast %1071 : f32 to vector<16x36xf32>
    %1073 = arith.mulf %1072, %1066 : vector<16x36xf32>
    %1074 = arith.addf %1057, %1073 : vector<16x36xf32>
    %c239 = arith.constant 239 : index
    %1075 = memref.load %arg2[%c239] : memref<288xf32, #tpu.memory_space<smem>>
    %1076 = vector.broadcast %1075 : f32 to vector<16x36xf32>
    %1077 = arith.mulf %1076, %1066 : vector<16x36xf32>
    %1078 = arith.addf %1061, %1077 : vector<16x36xf32>
    %c275 = arith.constant 275 : index
    %1079 = memref.load %arg2[%c275] : memref<288xf32, #tpu.memory_space<smem>>
    %1080 = vector.broadcast %1079 : f32 to vector<16x36xf32>
    %1081 = arith.mulf %1080, %1066 : vector<16x36xf32>
    %1082 = arith.addf %1065, %1081 : vector<16x36xf32>
    %c2_164 = arith.constant 2 : index
    %c2_165 = arith.constant 2 : index
    %c0_166 = arith.constant 0 : index
    %1083 = vector.load %arg5[%c2_164, %c2_165, %c0_166] : memref<4x18x36xf32, #tpu.memory_space<vmem>>, vector<1x16x36xf32>
    %1084 = vector.shape_cast %1083 : vector<1x16x36xf32> to vector<16x36xf32>
    %c1_i32_167 = arith.constant 1 : i32
    %1085 = tpu.dynamic_rotate %1084 by %c1_i32_167 dim 1 : vector<16x36xf32>, i32 -> vector<16x36xf32>
    %c168 = arith.constant 168 : index
    %1086 = memref.load %arg2[%c168] : memref<288xf32, #tpu.memory_space<smem>>
    %1087 = vector.broadcast %1086 : f32 to vector<16x36xf32>
    %1088 = arith.mulf %1087, %1085 : vector<16x36xf32>
    %1089 = arith.addf %1070, %1088 : vector<16x36xf32>
    %c204 = arith.constant 204 : index
    %1090 = memref.load %arg2[%c204] : memref<288xf32, #tpu.memory_space<smem>>
    %1091 = vector.broadcast %1090 : f32 to vector<16x36xf32>
    %1092 = arith.mulf %1091, %1085 : vector<16x36xf32>
    %1093 = arith.addf %1074, %1092 : vector<16x36xf32>
    %c240 = arith.constant 240 : index
    %1094 = memref.load %arg2[%c240] : memref<288xf32, #tpu.memory_space<smem>>
    %1095 = vector.broadcast %1094 : f32 to vector<16x36xf32>
    %1096 = arith.mulf %1095, %1085 : vector<16x36xf32>
    %1097 = arith.addf %1078, %1096 : vector<16x36xf32>
    %c276 = arith.constant 276 : index
    %1098 = memref.load %arg2[%c276] : memref<288xf32, #tpu.memory_space<smem>>
    %1099 = vector.broadcast %1098 : f32 to vector<16x36xf32>
    %1100 = arith.mulf %1099, %1085 : vector<16x36xf32>
    %1101 = arith.addf %1082, %1100 : vector<16x36xf32>
    %c169 = arith.constant 169 : index
    %1102 = memref.load %arg2[%c169] : memref<288xf32, #tpu.memory_space<smem>>
    %1103 = vector.broadcast %1102 : f32 to vector<16x36xf32>
    %1104 = arith.mulf %1103, %1084 : vector<16x36xf32>
    %1105 = arith.addf %1089, %1104 : vector<16x36xf32>
    %c205 = arith.constant 205 : index
    %1106 = memref.load %arg2[%c205] : memref<288xf32, #tpu.memory_space<smem>>
    %1107 = vector.broadcast %1106 : f32 to vector<16x36xf32>
    %1108 = arith.mulf %1107, %1084 : vector<16x36xf32>
    %1109 = arith.addf %1093, %1108 : vector<16x36xf32>
    %c241 = arith.constant 241 : index
    %1110 = memref.load %arg2[%c241] : memref<288xf32, #tpu.memory_space<smem>>
    %1111 = vector.broadcast %1110 : f32 to vector<16x36xf32>
    %1112 = arith.mulf %1111, %1084 : vector<16x36xf32>
    %1113 = arith.addf %1097, %1112 : vector<16x36xf32>
    %c277 = arith.constant 277 : index
    %1114 = memref.load %arg2[%c277] : memref<288xf32, #tpu.memory_space<smem>>
    %1115 = vector.broadcast %1114 : f32 to vector<16x36xf32>
    %1116 = arith.mulf %1115, %1084 : vector<16x36xf32>
    %1117 = arith.addf %1101, %1116 : vector<16x36xf32>
    %c35_i32_168 = arith.constant 35 : i32
    %1118 = tpu.dynamic_rotate %1084 by %c35_i32_168 dim 1 : vector<16x36xf32>, i32 -> vector<16x36xf32>
    %c170 = arith.constant 170 : index
    %1119 = memref.load %arg2[%c170] : memref<288xf32, #tpu.memory_space<smem>>
    %1120 = vector.broadcast %1119 : f32 to vector<16x36xf32>
    %1121 = arith.mulf %1120, %1118 : vector<16x36xf32>
    %1122 = arith.addf %1105, %1121 : vector<16x36xf32>
    %c206 = arith.constant 206 : index
    %1123 = memref.load %arg2[%c206] : memref<288xf32, #tpu.memory_space<smem>>
    %1124 = vector.broadcast %1123 : f32 to vector<16x36xf32>
    %1125 = arith.mulf %1124, %1118 : vector<16x36xf32>
    %1126 = arith.addf %1109, %1125 : vector<16x36xf32>
    %c242 = arith.constant 242 : index
    %1127 = memref.load %arg2[%c242] : memref<288xf32, #tpu.memory_space<smem>>
    %1128 = vector.broadcast %1127 : f32 to vector<16x36xf32>
    %1129 = arith.mulf %1128, %1118 : vector<16x36xf32>
    %1130 = arith.addf %1113, %1129 : vector<16x36xf32>
    %c278 = arith.constant 278 : index
    %1131 = memref.load %arg2[%c278] : memref<288xf32, #tpu.memory_space<smem>>
    %1132 = vector.broadcast %1131 : f32 to vector<16x36xf32>
    %1133 = arith.mulf %1132, %1118 : vector<16x36xf32>
    %1134 = arith.addf %1117, %1133 : vector<16x36xf32>
    %c3_169 = arith.constant 3 : index
    %c0_170 = arith.constant 0 : index
    %c0_171 = arith.constant 0 : index
    %1135 = vector.load %arg5[%c3_169, %c0_170, %c0_171] : memref<4x18x36xf32, #tpu.memory_space<vmem>>, vector<1x16x36xf32>
    %1136 = vector.shape_cast %1135 : vector<1x16x36xf32> to vector<16x36xf32>
    %c1_i32_172 = arith.constant 1 : i32
    %1137 = tpu.dynamic_rotate %1136 by %c1_i32_172 dim 1 : vector<16x36xf32>, i32 -> vector<16x36xf32>
    %c171 = arith.constant 171 : index
    %1138 = memref.load %arg2[%c171] : memref<288xf32, #tpu.memory_space<smem>>
    %1139 = vector.broadcast %1138 : f32 to vector<16x36xf32>
    %1140 = arith.mulf %1139, %1137 : vector<16x36xf32>
    %1141 = arith.addf %1122, %1140 : vector<16x36xf32>
    %c207 = arith.constant 207 : index
    %1142 = memref.load %arg2[%c207] : memref<288xf32, #tpu.memory_space<smem>>
    %1143 = vector.broadcast %1142 : f32 to vector<16x36xf32>
    %1144 = arith.mulf %1143, %1137 : vector<16x36xf32>
    %1145 = arith.addf %1126, %1144 : vector<16x36xf32>
    %c243 = arith.constant 243 : index
    %1146 = memref.load %arg2[%c243] : memref<288xf32, #tpu.memory_space<smem>>
    %1147 = vector.broadcast %1146 : f32 to vector<16x36xf32>
    %1148 = arith.mulf %1147, %1137 : vector<16x36xf32>
    %1149 = arith.addf %1130, %1148 : vector<16x36xf32>
    %c279 = arith.constant 279 : index
    %1150 = memref.load %arg2[%c279] : memref<288xf32, #tpu.memory_space<smem>>
    %1151 = vector.broadcast %1150 : f32 to vector<16x36xf32>
    %1152 = arith.mulf %1151, %1137 : vector<16x36xf32>
    %1153 = arith.addf %1134, %1152 : vector<16x36xf32>
    %c172 = arith.constant 172 : index
    %1154 = memref.load %arg2[%c172] : memref<288xf32, #tpu.memory_space<smem>>
    %1155 = vector.broadcast %1154 : f32 to vector<16x36xf32>
    %1156 = arith.mulf %1155, %1136 : vector<16x36xf32>
    %1157 = arith.addf %1141, %1156 : vector<16x36xf32>
    %c208 = arith.constant 208 : index
    %1158 = memref.load %arg2[%c208] : memref<288xf32, #tpu.memory_space<smem>>
    %1159 = vector.broadcast %1158 : f32 to vector<16x36xf32>
    %1160 = arith.mulf %1159, %1136 : vector<16x36xf32>
    %1161 = arith.addf %1145, %1160 : vector<16x36xf32>
    %c244 = arith.constant 244 : index
    %1162 = memref.load %arg2[%c244] : memref<288xf32, #tpu.memory_space<smem>>
    %1163 = vector.broadcast %1162 : f32 to vector<16x36xf32>
    %1164 = arith.mulf %1163, %1136 : vector<16x36xf32>
    %1165 = arith.addf %1149, %1164 : vector<16x36xf32>
    %c280 = arith.constant 280 : index
    %1166 = memref.load %arg2[%c280] : memref<288xf32, #tpu.memory_space<smem>>
    %1167 = vector.broadcast %1166 : f32 to vector<16x36xf32>
    %1168 = arith.mulf %1167, %1136 : vector<16x36xf32>
    %1169 = arith.addf %1153, %1168 : vector<16x36xf32>
    %c35_i32_173 = arith.constant 35 : i32
    %1170 = tpu.dynamic_rotate %1136 by %c35_i32_173 dim 1 : vector<16x36xf32>, i32 -> vector<16x36xf32>
    %c173 = arith.constant 173 : index
    %1171 = memref.load %arg2[%c173] : memref<288xf32, #tpu.memory_space<smem>>
    %1172 = vector.broadcast %1171 : f32 to vector<16x36xf32>
    %1173 = arith.mulf %1172, %1170 : vector<16x36xf32>
    %1174 = arith.addf %1157, %1173 : vector<16x36xf32>
    %c209 = arith.constant 209 : index
    %1175 = memref.load %arg2[%c209] : memref<288xf32, #tpu.memory_space<smem>>
    %1176 = vector.broadcast %1175 : f32 to vector<16x36xf32>
    %1177 = arith.mulf %1176, %1170 : vector<16x36xf32>
    %1178 = arith.addf %1161, %1177 : vector<16x36xf32>
    %c245 = arith.constant 245 : index
    %1179 = memref.load %arg2[%c245] : memref<288xf32, #tpu.memory_space<smem>>
    %1180 = vector.broadcast %1179 : f32 to vector<16x36xf32>
    %1181 = arith.mulf %1180, %1170 : vector<16x36xf32>
    %1182 = arith.addf %1165, %1181 : vector<16x36xf32>
    %c281 = arith.constant 281 : index
    %1183 = memref.load %arg2[%c281] : memref<288xf32, #tpu.memory_space<smem>>
    %1184 = vector.broadcast %1183 : f32 to vector<16x36xf32>
    %1185 = arith.mulf %1184, %1170 : vector<16x36xf32>
    %1186 = arith.addf %1169, %1185 : vector<16x36xf32>
    %c3_174 = arith.constant 3 : index
    %c1_175 = arith.constant 1 : index
    %c0_176 = arith.constant 0 : index
    %1187 = vector.load %arg5[%c3_174, %c1_175, %c0_176] : memref<4x18x36xf32, #tpu.memory_space<vmem>>, vector<1x16x36xf32>
    %1188 = vector.shape_cast %1187 : vector<1x16x36xf32> to vector<16x36xf32>
    %c1_i32_177 = arith.constant 1 : i32
    %1189 = tpu.dynamic_rotate %1188 by %c1_i32_177 dim 1 : vector<16x36xf32>, i32 -> vector<16x36xf32>
    %c174 = arith.constant 174 : index
    %1190 = memref.load %arg2[%c174] : memref<288xf32, #tpu.memory_space<smem>>
    %1191 = vector.broadcast %1190 : f32 to vector<16x36xf32>
    %1192 = arith.mulf %1191, %1189 : vector<16x36xf32>
    %1193 = arith.addf %1174, %1192 : vector<16x36xf32>
    %c210 = arith.constant 210 : index
    %1194 = memref.load %arg2[%c210] : memref<288xf32, #tpu.memory_space<smem>>
    %1195 = vector.broadcast %1194 : f32 to vector<16x36xf32>
    %1196 = arith.mulf %1195, %1189 : vector<16x36xf32>
    %1197 = arith.addf %1178, %1196 : vector<16x36xf32>
    %c246 = arith.constant 246 : index
    %1198 = memref.load %arg2[%c246] : memref<288xf32, #tpu.memory_space<smem>>
    %1199 = vector.broadcast %1198 : f32 to vector<16x36xf32>
    %1200 = arith.mulf %1199, %1189 : vector<16x36xf32>
    %1201 = arith.addf %1182, %1200 : vector<16x36xf32>
    %c282 = arith.constant 282 : index
    %1202 = memref.load %arg2[%c282] : memref<288xf32, #tpu.memory_space<smem>>
    %1203 = vector.broadcast %1202 : f32 to vector<16x36xf32>
    %1204 = arith.mulf %1203, %1189 : vector<16x36xf32>
    %1205 = arith.addf %1186, %1204 : vector<16x36xf32>
    %c175 = arith.constant 175 : index
    %1206 = memref.load %arg2[%c175] : memref<288xf32, #tpu.memory_space<smem>>
    %1207 = vector.broadcast %1206 : f32 to vector<16x36xf32>
    %1208 = arith.mulf %1207, %1188 : vector<16x36xf32>
    %1209 = arith.addf %1193, %1208 : vector<16x36xf32>
    %c211 = arith.constant 211 : index
    %1210 = memref.load %arg2[%c211] : memref<288xf32, #tpu.memory_space<smem>>
    %1211 = vector.broadcast %1210 : f32 to vector<16x36xf32>
    %1212 = arith.mulf %1211, %1188 : vector<16x36xf32>
    %1213 = arith.addf %1197, %1212 : vector<16x36xf32>
    %c247 = arith.constant 247 : index
    %1214 = memref.load %arg2[%c247] : memref<288xf32, #tpu.memory_space<smem>>
    %1215 = vector.broadcast %1214 : f32 to vector<16x36xf32>
    %1216 = arith.mulf %1215, %1188 : vector<16x36xf32>
    %1217 = arith.addf %1201, %1216 : vector<16x36xf32>
    %c283 = arith.constant 283 : index
    %1218 = memref.load %arg2[%c283] : memref<288xf32, #tpu.memory_space<smem>>
    %1219 = vector.broadcast %1218 : f32 to vector<16x36xf32>
    %1220 = arith.mulf %1219, %1188 : vector<16x36xf32>
    %1221 = arith.addf %1205, %1220 : vector<16x36xf32>
    %c35_i32_178 = arith.constant 35 : i32
    %1222 = tpu.dynamic_rotate %1188 by %c35_i32_178 dim 1 : vector<16x36xf32>, i32 -> vector<16x36xf32>
    %c176 = arith.constant 176 : index
    %1223 = memref.load %arg2[%c176] : memref<288xf32, #tpu.memory_space<smem>>
    %1224 = vector.broadcast %1223 : f32 to vector<16x36xf32>
    %1225 = arith.mulf %1224, %1222 : vector<16x36xf32>
    %1226 = arith.addf %1209, %1225 : vector<16x36xf32>
    %c212 = arith.constant 212 : index
    %1227 = memref.load %arg2[%c212] : memref<288xf32, #tpu.memory_space<smem>>
    %1228 = vector.broadcast %1227 : f32 to vector<16x36xf32>
    %1229 = arith.mulf %1228, %1222 : vector<16x36xf32>
    %1230 = arith.addf %1213, %1229 : vector<16x36xf32>
    %c248 = arith.constant 248 : index
    %1231 = memref.load %arg2[%c248] : memref<288xf32, #tpu.memory_space<smem>>
    %1232 = vector.broadcast %1231 : f32 to vector<16x36xf32>
    %1233 = arith.mulf %1232, %1222 : vector<16x36xf32>
    %1234 = arith.addf %1217, %1233 : vector<16x36xf32>
    %c284 = arith.constant 284 : index
    %1235 = memref.load %arg2[%c284] : memref<288xf32, #tpu.memory_space<smem>>
    %1236 = vector.broadcast %1235 : f32 to vector<16x36xf32>
    %1237 = arith.mulf %1236, %1222 : vector<16x36xf32>
    %1238 = arith.addf %1221, %1237 : vector<16x36xf32>
    %c3_179 = arith.constant 3 : index
    %c2_180 = arith.constant 2 : index
    %c0_181 = arith.constant 0 : index
    %1239 = vector.load %arg5[%c3_179, %c2_180, %c0_181] : memref<4x18x36xf32, #tpu.memory_space<vmem>>, vector<1x16x36xf32>
    %1240 = vector.shape_cast %1239 : vector<1x16x36xf32> to vector<16x36xf32>
    %c1_i32_182 = arith.constant 1 : i32
    %1241 = tpu.dynamic_rotate %1240 by %c1_i32_182 dim 1 : vector<16x36xf32>, i32 -> vector<16x36xf32>
    %c177 = arith.constant 177 : index
    %1242 = memref.load %arg2[%c177] : memref<288xf32, #tpu.memory_space<smem>>
    %1243 = vector.broadcast %1242 : f32 to vector<16x36xf32>
    %1244 = arith.mulf %1243, %1241 : vector<16x36xf32>
    %1245 = arith.addf %1226, %1244 : vector<16x36xf32>
    %c213 = arith.constant 213 : index
    %1246 = memref.load %arg2[%c213] : memref<288xf32, #tpu.memory_space<smem>>
    %1247 = vector.broadcast %1246 : f32 to vector<16x36xf32>
    %1248 = arith.mulf %1247, %1241 : vector<16x36xf32>
    %1249 = arith.addf %1230, %1248 : vector<16x36xf32>
    %c249 = arith.constant 249 : index
    %1250 = memref.load %arg2[%c249] : memref<288xf32, #tpu.memory_space<smem>>
    %1251 = vector.broadcast %1250 : f32 to vector<16x36xf32>
    %1252 = arith.mulf %1251, %1241 : vector<16x36xf32>
    %1253 = arith.addf %1234, %1252 : vector<16x36xf32>
    %c285 = arith.constant 285 : index
    %1254 = memref.load %arg2[%c285] : memref<288xf32, #tpu.memory_space<smem>>
    %1255 = vector.broadcast %1254 : f32 to vector<16x36xf32>
    %1256 = arith.mulf %1255, %1241 : vector<16x36xf32>
    %1257 = arith.addf %1238, %1256 : vector<16x36xf32>
    %c178 = arith.constant 178 : index
    %1258 = memref.load %arg2[%c178] : memref<288xf32, #tpu.memory_space<smem>>
    %1259 = vector.broadcast %1258 : f32 to vector<16x36xf32>
    %1260 = arith.mulf %1259, %1240 : vector<16x36xf32>
    %1261 = arith.addf %1245, %1260 : vector<16x36xf32>
    %c214 = arith.constant 214 : index
    %1262 = memref.load %arg2[%c214] : memref<288xf32, #tpu.memory_space<smem>>
    %1263 = vector.broadcast %1262 : f32 to vector<16x36xf32>
    %1264 = arith.mulf %1263, %1240 : vector<16x36xf32>
    %1265 = arith.addf %1249, %1264 : vector<16x36xf32>
    %c250 = arith.constant 250 : index
    %1266 = memref.load %arg2[%c250] : memref<288xf32, #tpu.memory_space<smem>>
    %1267 = vector.broadcast %1266 : f32 to vector<16x36xf32>
    %1268 = arith.mulf %1267, %1240 : vector<16x36xf32>
    %1269 = arith.addf %1253, %1268 : vector<16x36xf32>
    %c286 = arith.constant 286 : index
    %1270 = memref.load %arg2[%c286] : memref<288xf32, #tpu.memory_space<smem>>
    %1271 = vector.broadcast %1270 : f32 to vector<16x36xf32>
    %1272 = arith.mulf %1271, %1240 : vector<16x36xf32>
    %1273 = arith.addf %1257, %1272 : vector<16x36xf32>
    %c35_i32_183 = arith.constant 35 : i32
    %1274 = tpu.dynamic_rotate %1240 by %c35_i32_183 dim 1 : vector<16x36xf32>, i32 -> vector<16x36xf32>
    %c179 = arith.constant 179 : index
    %1275 = memref.load %arg2[%c179] : memref<288xf32, #tpu.memory_space<smem>>
    %1276 = vector.broadcast %1275 : f32 to vector<16x36xf32>
    %1277 = arith.mulf %1276, %1274 : vector<16x36xf32>
    %1278 = arith.addf %1261, %1277 : vector<16x36xf32>
    %c215 = arith.constant 215 : index
    %1279 = memref.load %arg2[%c215] : memref<288xf32, #tpu.memory_space<smem>>
    %1280 = vector.broadcast %1279 : f32 to vector<16x36xf32>
    %1281 = arith.mulf %1280, %1274 : vector<16x36xf32>
    %1282 = arith.addf %1265, %1281 : vector<16x36xf32>
    %c251 = arith.constant 251 : index
    %1283 = memref.load %arg2[%c251] : memref<288xf32, #tpu.memory_space<smem>>
    %1284 = vector.broadcast %1283 : f32 to vector<16x36xf32>
    %1285 = arith.mulf %1284, %1274 : vector<16x36xf32>
    %1286 = arith.addf %1269, %1285 : vector<16x36xf32>
    %c287 = arith.constant 287 : index
    %1287 = memref.load %arg2[%c287] : memref<288xf32, #tpu.memory_space<smem>>
    %1288 = vector.broadcast %1287 : f32 to vector<16x36xf32>
    %1289 = arith.mulf %1288, %1274 : vector<16x36xf32>
    %1290 = arith.addf %1273, %1289 : vector<16x36xf32>
    %c4_184 = arith.constant 4 : index
    %1291 = memref.load %arg3[%c4_184] : memref<8xf32, #tpu.memory_space<smem>>
    %1292 = vector.broadcast %1291 : f32 to vector<16x36xf32>
    %1293 = arith.addf %1278, %1292 : vector<16x36xf32>
    %cst_185 = arith.constant 0.000000e+00 : f32
    %1294 = vector.broadcast %cst_185 : f32 to vector<16x36xf32>
    %1295 = arith.maximumf %1293, %1294 : vector<16x36xf32>
    %c5_186 = arith.constant 5 : index
    %1296 = memref.load %arg3[%c5_186] : memref<8xf32, #tpu.memory_space<smem>>
    %1297 = vector.broadcast %1296 : f32 to vector<16x36xf32>
    %1298 = arith.addf %1282, %1297 : vector<16x36xf32>
    %cst_187 = arith.constant 0.000000e+00 : f32
    %1299 = vector.broadcast %cst_187 : f32 to vector<16x36xf32>
    %1300 = arith.maximumf %1298, %1299 : vector<16x36xf32>
    %c6_188 = arith.constant 6 : index
    %1301 = memref.load %arg3[%c6_188] : memref<8xf32, #tpu.memory_space<smem>>
    %1302 = vector.broadcast %1301 : f32 to vector<16x36xf32>
    %1303 = arith.addf %1286, %1302 : vector<16x36xf32>
    %cst_189 = arith.constant 0.000000e+00 : f32
    %1304 = vector.broadcast %cst_189 : f32 to vector<16x36xf32>
    %1305 = arith.maximumf %1303, %1304 : vector<16x36xf32>
    %c7_190 = arith.constant 7 : index
    %1306 = memref.load %arg3[%c7_190] : memref<8xf32, #tpu.memory_space<smem>>
    %1307 = vector.broadcast %1306 : f32 to vector<16x36xf32>
    %1308 = arith.addf %1290, %1307 : vector<16x36xf32>
    %cst_191 = arith.constant 0.000000e+00 : f32
    %1309 = vector.broadcast %cst_191 : f32 to vector<16x36xf32>
    %1310 = arith.maximumf %1308, %1309 : vector<16x36xf32>
    %c0_192 = arith.constant 0 : index
    %c0_193 = arith.constant 0 : index
    %c0_194 = arith.constant 0 : index
    %c0_195 = arith.constant 0 : index
    %1311 = vector.load %arg4[%c0_192, %c0_193, %c0_194, %c0_195] : memref<1x4x16x36xf32, #tpu.memory_space<vmem>>, vector<1x1x16x36xf32>
    %1312 = vector.shape_cast %1311 : vector<1x1x16x36xf32> to vector<16x36xf32>
    %1313 = vector.shape_cast %1295 : vector<16x36xf32> to vector<1x1x16x36xf32>
    tpu.vector_store %arg4[%c0_192, %c0_193, %c0_194, %c0_195], %1313 {strides = array<i32>} : memref<1x4x16x36xf32, #tpu.memory_space<vmem>>, vector<1x1x16x36xf32>,
    %c0_196 = arith.constant 0 : index
    %c1_197 = arith.constant 1 : index
    %c0_198 = arith.constant 0 : index
    %c0_199 = arith.constant 0 : index
    %1314 = vector.load %arg4[%c0_196, %c1_197, %c0_198, %c0_199] : memref<1x4x16x36xf32, #tpu.memory_space<vmem>>, vector<1x1x16x36xf32>
    %1315 = vector.shape_cast %1314 : vector<1x1x16x36xf32> to vector<16x36xf32>
    %1316 = vector.shape_cast %1300 : vector<16x36xf32> to vector<1x1x16x36xf32>
    tpu.vector_store %arg4[%c0_196, %c1_197, %c0_198, %c0_199], %1316 {strides = array<i32>} : memref<1x4x16x36xf32, #tpu.memory_space<vmem>>, vector<1x1x16x36xf32>,
    %c0_200 = arith.constant 0 : index
    %c2_201 = arith.constant 2 : index
    %c0_202 = arith.constant 0 : index
    %c0_203 = arith.constant 0 : index
    %1317 = vector.load %arg4[%c0_200, %c2_201, %c0_202, %c0_203] : memref<1x4x16x36xf32, #tpu.memory_space<vmem>>, vector<1x1x16x36xf32>
    %1318 = vector.shape_cast %1317 : vector<1x1x16x36xf32> to vector<16x36xf32>
    %1319 = vector.shape_cast %1305 : vector<16x36xf32> to vector<1x1x16x36xf32>
    tpu.vector_store %arg4[%c0_200, %c2_201, %c0_202, %c0_203], %1319 {strides = array<i32>} : memref<1x4x16x36xf32, #tpu.memory_space<vmem>>, vector<1x1x16x36xf32>,
    %c0_204 = arith.constant 0 : index
    %c3_205 = arith.constant 3 : index
    %c0_206 = arith.constant 0 : index
    %c0_207 = arith.constant 0 : index
    %1320 = vector.load %arg4[%c0_204, %c3_205, %c0_206, %c0_207] : memref<1x4x16x36xf32, #tpu.memory_space<vmem>>, vector<1x1x16x36xf32>
    %1321 = vector.shape_cast %1320 : vector<1x1x16x36xf32> to vector<16x36xf32>
    %1322 = vector.shape_cast %1310 : vector<16x36xf32> to vector<1x1x16x36xf32>
    tpu.vector_store %arg4[%c0_204, %c3_205, %c0_206, %c0_207], %1322 {strides = array<i32>} : memref<1x4x16x36xf32, #tpu.memory_space<vmem>>, vector<1x1x16x36xf32>,
    return
  }
  func.func @transform_0(%arg0: i32) -> (i32, i32, i32, i32) {
    %c0_i32 = arith.constant 0 : i32
    %c0_i32_0 = arith.constant 0 : i32
    %c0_i32_1 = arith.constant 0 : i32
    %c0_i32_2 = arith.constant 0 : i32
    return %arg0, %c0_i32, %c0_i32_0, %c0_i32_1 : i32, i32, i32, i32
  }
  func.func @transform_1(%arg0: i32) -> i32 {
    %c0_i32 = arith.constant 0 : i32
    %c0_i32_0 = arith.constant 0 : i32
    return %c0_i32 : i32
  }
  func.func @transform_2(%arg0: i32) -> i32 {
    %c0_i32 = arith.constant 0 : i32
    %c0_i32_0 = arith.constant 0 : i32
    return %c0_i32 : i32
  }
  func.func @transform_3(%arg0: i32) -> (i32, i32, i32, i32) {
    %c0_i32 = arith.constant 0 : i32
    %c0_i32_0 = arith.constant 0 : i32
    %c0_i32_1 = arith.constant 0 : i32
    %c0_i32_2 = arith.constant 0 : i32
    return %arg0, %c0_i32, %c0_i32_0, %c0_i32_1 : i32, i32, i32, i32
  }
}

</mosaic_0001>

<llo_original>
// kernel: recurrent_block.1
$region0: #{recurrent_block.1}
  #allocation0 [shape = 'u32[]', space=smem, size = 0x4, offset = 0x4, fixed_abs, tag = 'smem constant byte address 0x4 - core index']
  #allocation1 [shape = 'u32[144,128]{1,0:T(1,128)}', space=vmem, size = 0x12000, scoped, tag = 'internal scratch']
  #allocation2 [shape = 'f32[4,18,36]{2,1,0:T(8,128)}', space=vmem, size = 0xc000, scoped, tag = 'scratch operand']
  %s0 = inlined_call_operand.vmem [shape: f32[2,4,16,16], index: 0, kind: input, shape index: {}]
  %s1 = inlined_call_operand.vmem [shape: f32[288], index: 1, kind: input, shape index: {}]
  %s2 = inlined_call_operand.vmem [shape: f32[8], index: 2, kind: input, shape index: {}]
  %s3 = inlined_call_operand.vmem [shape: f32[1,4,16,36], index: 3, kind: output, shape index: {}]
  %s4 = sld [smem:[#allocation0]]
  $region30: #{recurrent_block.1} parent=0
    _
  %s6 = ssub.s32 1, %s4
  %s7 = scalar_select 0, %s6, %s4
  $region1: #{recurrent_block.1} parent=0
    #allocation3 [shape = 'u8[1536]{0}', space=smem, size = 0x600, scoped, tag = 'input window, operand 1, single buffered']
    #allocation4 [shape = 's32[1]{0}', space=sflag, size = 0x4, scoped, tag = 'scoped memory for recurrent_block.1']
    #allocation5 [shape = 'u8[512]{0}', space=smem, size = 0x200, scoped, tag = 'input window, operand 2, single buffered']
    #allocation6 [shape = 's32[1]{0}', space=sflag, size = 0x4, scoped, tag = 'scoped memory for recurrent_block.1']
    %8 = vsyncpa [#allocation4], 0
    %9 = vsyncpa [#allocation6], 0
    // Predicated region
    $region2: #{recurrent_block.1} parent=1 // pred_check
      _
    $region3: #{recurrent_block.1} parent=1 // pred_check_branch
      %11 = sbr.rel (0) target = $region5
    $region4: #{recurrent_block.1} parent=1 // pred_region
      _
    $region5: #{recurrent_block.1} parent=1 // pred_fallthru
      _
    // Predicated region
    $region6: #{recurrent_block.1} parent=1 // pred_check
      _
    $region7: #{recurrent_block.1} parent=1 // pred_check_branch
      %13 = sbr.rel (0) target = $region9
    $region8: #{recurrent_block.1} parent=1 // pred_region
      %s15 = ssub.s32 48, 48
      %16 = vsyncadd [#allocation4], %s15
      %s18 = sshll.u32 %s1, 4
      %s19 = int_to_ptr.vmem [resolvable:$true] %s18
      %21 = dma.vmem_to_smem %s19, 48, [#allocation3], [#allocation4]
    $region9: #{recurrent_block.1} parent=1 // pred_fallthru
      _
    // Predicated region
    $region10: #{recurrent_block.1} parent=1 // pred_check
      _
    $region11: #{recurrent_block.1} parent=1 // pred_check_branch
      %23 = sbr.rel (0) target = $region13
    $region12: #{recurrent_block.1} parent=1 // pred_region
      %s25 = ssub.s32 16, 16
      %26 = vsyncadd [#allocation6], %s25
      %s28 = sshll.u32 %s2, 4
      %s29 = int_to_ptr.vmem [resolvable:$true] %s28
      %31 = dma.vmem_to_smem %s29, 16, [#allocation5], [#allocation6]
    $region13: #{recurrent_block.1} parent=1 // pred_fallthru
      _
    // Predicated region
    $region14: #{recurrent_block.1} parent=1 // pred_check
      _
    $region15: #{recurrent_block.1} parent=1 // pred_check_branch
      %33 = sbr.rel (0) target = $region17
    $region16: #{recurrent_block.1} parent=1 // pred_region
      %34 = dma.done [#allocation4], 48
    $region17: #{recurrent_block.1} parent=1 // pred_fallthru
      _
    // Predicated region
    $region18: #{recurrent_block.1} parent=1 // pred_check
      _
    $region19: #{recurrent_block.1} parent=1 // pred_check_branch
      %36 = sbr.rel (0) target = $region21
    $region20: #{recurrent_block.1} parent=1 // pred_region
      %37 = dma.done [#allocation6], 16
    $region21: #{recurrent_block.1} parent=1 // pred_fallthru
      _
    %38 = sfence
    %vm39 = vcmask 286720
    %40 = vst.msk [vmem:[#allocation2] sm:$0x1] %vm39, 0.0
    %41 = vst.msk [vmem:[#allocation2 + $0x18] sm:$0x1] %vm39, 0.0
    %42 = vst.msk [vmem:[#allocation2 + $0x30] sm:$0x1] %vm39, 0.0
    %43 = vst.msk [vmem:[#allocation2 + $0x48] sm:$0x1] %vm39, 0.0
    %44 = vst.msk [vmem:[#allocation2 + $0x11] sm:$0x1] %vm39, 0.0
    %45 = vst.msk [vmem:[#allocation2 + $0x29] sm:$0x1] %vm39, 0.0
    %46 = vst.msk [vmem:[#allocation2 + $0x41] sm:$0x1] %vm39, 0.0
    %47 = vst.msk [vmem:[#allocation2 + $0x59] sm:$0x1] %vm39, 0.0
    %vm48 = vcmask 7168
    %49 = vst.msk [vmem:[#allocation2] sm:$0xff] %vm48, 0.0
    %50 = vst.msk [vmem:[#allocation2 + $0x8] sm:$0xff] %vm48, 0.0
    %vm51 = vcmask 1024
    %52 = vst.msk [vmem:[#allocation2 + $0x10] sm:$0x3] %vm51, 0.0
    %53 = vst.msk [vmem:[#allocation2 + $0x18] sm:$0xff] %vm48, 0.0
    %54 = vst.msk [vmem:[#allocation2 + $0x20] sm:$0xff] %vm48, 0.0
    %55 = vst.msk [vmem:[#allocation2 + $0x28] sm:$0x3] %vm51, 0.0
    %56 = vst.msk [vmem:[#allocation2 + $0x30] sm:$0xff] %vm48, 0.0
    %57 = vst.msk [vmem:[#allocation2 + $0x38] sm:$0xff] %vm48, 0.0
    %58 = vst.msk [vmem:[#allocation2 + $0x40] sm:$0x3] %vm51, 0.0
    %59 = vst.msk [vmem:[#allocation2 + $0x48] sm:$0xff] %vm48, 0.0
    %60 = vst.msk [vmem:[#allocation2 + $0x50] sm:$0xff] %vm48, 0.0
    %61 = vst.msk [vmem:[#allocation2 + $0x58] sm:$0x3] %vm51, 0.0
    %vm62 = vcmask 146568
    %63 = vst.msk [vmem:[#allocation2] sm:$0xff] %vm62, 0.0
    %64 = vst.msk [vmem:[#allocation2 + $0x8] sm:$0xff] %vm62, 0.0
    %vm65 = vcmask 140424
    %66 = vst.msk [vmem:[#allocation2 + $0x10] sm:$0x3] %vm65, 0.0
    %67 = vst.msk [vmem:[#allocation2 + $0x18] sm:$0xff] %vm62, 0.0
    %68 = vst.msk [vmem:[#allocation2 + $0x20] sm:$0xff] %vm62, 0.0
    %69 = vst.msk [vmem:[#allocation2 + $0x28] sm:$0x3] %vm65, 0.0
    %70 = vst.msk [vmem:[#allocation2 + $0x30] sm:$0xff] %vm62, 0.0
    %71 = vst.msk [vmem:[#allocation2 + $0x38] sm:$0xff] %vm62, 0.0
    %72 = vst.msk [vmem:[#allocation2 + $0x40] sm:$0x3] %vm65, 0.0
    %73 = vst.msk [vmem:[#allocation2 + $0x48] sm:$0xff] %vm62, 0.0
    %74 = vst.msk [vmem:[#allocation2 + $0x50] sm:$0xff] %vm62, 0.0
    %75 = vst.msk [vmem:[#allocation2 + $0x58] sm:$0x3] %vm65, 0.0
    %v76 = vld [vmem:[%s0] sm:$0xff]
    %v77 = vld [vmem:[%s0 + $0x8] sm:$0xff]
    %v78 = vld [vmem:[%s0 + $0x10] sm:$0xff]
    %v79 = vld [vmem:[%s0 + $0x18] sm:$0xff]
    %v80 = vld [vmem:[%s0 + $0x20] sm:$0xff]
    %v81 = vld [vmem:[%s0 + $0x28] sm:$0xff]
    %v82 = vld [vmem:[%s0 + $0x30] sm:$0xff]
    %v83 = vld [vmem:[%s0 + $0x38] sm:$0xff]
    %92 = vrot.lane.b32.xlu0 %v76, 1
    %v93 = vpop.permute.xlu0 %92
    %94 = vrot.lane.b32.xlu0 %v77, 1
    %v95 = vpop.permute.xlu0 %94
    %96 = vrot.lane.b32.xlu0 %v78, 1
    %v97 = vpop.permute.xlu0 %96
    %98 = vrot.lane.b32.xlu0 %v79, 1
    %v99 = vpop.permute.xlu0 %98
    %100 = vrot.lane.b32.xlu0 %v80, 1
    %v101 = vpop.permute.xlu0 %100
    %102 = vrot.lane.b32.xlu0 %v81, 1
    %v103 = vpop.permute.xlu0 %102
    %104 = vrot.lane.b32.xlu0 %v82, 1
    %v105 = vpop.permute.xlu0 %104
    %106 = vrot.lane.b32.xlu0 %v83, 1
    %v107 = vpop.permute.xlu0 %106
    %vm116 = vcmask 138248
    %117 = vst.msk [vmem:[#allocation2 + $0x1] sm:$0xff] %vm116, %v93
    %118 = vst.msk [vmem:[#allocation2 + $0x9] sm:$0xff] %vm116, %v95
    %119 = vst.msk [vmem:[#allocation2 + $0x19] sm:$0xff] %vm116, %v97
    %120 = vst.msk [vmem:[#allocation2 + $0x21] sm:$0xff] %vm116, %v99
    %121 = vst.msk [vmem:[#allocation2 + $0x31] sm:$0xff] %vm116, %v101
    %122 = vst.msk [vmem:[#allocation2 + $0x39] sm:$0xff] %vm116, %v103
    %123 = vst.msk [vmem:[#allocation2 + $0x49] sm:$0xff] %vm116, %v105
    %124 = vst.msk [vmem:[#allocation2 + $0x51] sm:$0xff] %vm116, %v107
    %vm125 = vcmask 154768
    %126 = vst.msk [vmem:[#allocation2] sm:$0xff] %vm125, 0.0
    %127 = vst.msk [vmem:[#allocation2 + $0x8] sm:$0xff] %vm125, 0.0
    %vm128 = vcmask 148624
    %129 = vst.msk [vmem:[#allocation2 + $0x10] sm:$0x3] %vm128, 0.0
    %130 = vst.msk [vmem:[#allocation2 + $0x18] sm:$0xff] %vm125, 0.0
    %131 = vst.msk [vmem:[#allocation2 + $0x20] sm:$0xff] %vm125, 0.0
    %132 = vst.msk [vmem:[#allocation2 + $0x28] sm:$0x3] %vm128, 0.0
    %133 = vst.msk [vmem:[#allocation2 + $0x30] sm:$0xff] %vm125, 0.0
    %134 = vst.msk [vmem:[#allocation2 + $0x38] sm:$0xff] %vm125, 0.0
    %135 = vst.msk [vmem:[#allocation2 + $0x40] sm:$0x3] %vm128, 0.0
    %136 = vst.msk [vmem:[#allocation2 + $0x48] sm:$0xff] %vm125, 0.0
    %137 = vst.msk [vmem:[#allocation2 + $0x50] sm:$0xff] %vm125, 0.0
    %138 = vst.msk [vmem:[#allocation2 + $0x58] sm:$0x3] %vm128, 0.0
    %vm139 = vcmask 294168
    %140 = vst.msk [vmem:[#allocation2] sm:$0xff] %vm139, 0.0
    %141 = vst.msk [vmem:[#allocation2 + $0x8] sm:$0xff] %vm139, 0.0
    %vm142 = vcmask 288024
    %143 = vst.msk [vmem:[#allocation2 + $0x10] sm:$0x3] %vm142, 0.0
    %144 = vst.msk [vmem:[#allocation2 + $0x18] sm:$0xff] %vm139, 0.0
    %145 = vst.msk [vmem:[#allocation2 + $0x20] sm:$0xff] %vm139, 0.0
    %146 = vst.msk [vmem:[#allocation2 + $0x28] sm:$0x3] %vm142, 0.0
    %147 = vst.msk [vmem:[#allocation2 + $0x30] sm:$0xff] %vm139, 0.0
    %148 = vst.msk [vmem:[#allocation2 + $0x38] sm:$0xff] %vm139, 0.0
    %149 = vst.msk [vmem:[#allocation2 + $0x40] sm:$0x3] %vm142, 0.0
    %150 = vst.msk [vmem:[#allocation2 + $0x48] sm:$0xff] %vm139, 0.0
    %151 = vst.msk [vmem:[#allocation2 + $0x50] sm:$0xff] %vm139, 0.0
    %152 = vst.msk [vmem:[#allocation2 + $0x58] sm:$0x3] %vm142, 0.0
    %s153 = scalar_lea.vmem %s0, 64
    %v154 = vld [vmem:[%s153] sm:$0xff]
    %v155 = vld [vmem:[%s153 + $0x8] sm:$0xff]
    %v156 = vld [vmem:[%s153 + $0x10] sm:$0xff]
    %v157 = vld [vmem:[%s153 + $0x18] sm:$0xff]
    %v158 = vld [vmem:[%s153 + $0x20] sm:$0xff]
    %v159 = vld [vmem:[%s153 + $0x28] sm:$0xff]
    %v160 = vld [vmem:[%s153 + $0x30] sm:$0xff]
    %v161 = vld [vmem:[%s153 + $0x38] sm:$0xff]
    %170 = vrot.lane.b32.xlu0 %v154, 19
    %v171 = vpop.permute.xlu0 %170
    %172 = vrot.lane.b32.xlu0 %v155, 19
    %v173 = vpop.permute.xlu0 %172
    %174 = vrot.lane.b32.xlu0 %v156, 19
    %v175 = vpop.permute.xlu0 %174
    %176 = vrot.lane.b32.xlu0 %v157, 19
    %v177 = vpop.permute.xlu0 %176
    %178 = vrot.lane.b32.xlu0 %v158, 19
    %v179 = vpop.permute.xlu0 %178
    %180 = vrot.lane.b32.xlu0 %v159, 19
    %v181 = vpop.permute.xlu0 %180
    %182 = vrot.lane.b32.xlu0 %v160, 19
    %v183 = vpop.permute.xlu0 %182
    %184 = vrot.lane.b32.xlu0 %v161, 19
    %v185 = vpop.permute.xlu0 %184
    %vm194 = vcmask 285848
    %195 = vst.msk [vmem:[#allocation2 + $0x1] sm:$0xff] %vm194, %v171
    %196 = vst.msk [vmem:[#allocation2 + $0x9] sm:$0xff] %vm194, %v173
    %197 = vst.msk [vmem:[#allocation2 + $0x19] sm:$0xff] %vm194, %v175
    %198 = vst.msk [vmem:[#allocation2 + $0x21] sm:$0xff] %vm194, %v177
    %199 = vst.msk [vmem:[#allocation2 + $0x31] sm:$0xff] %vm194, %v179
    %200 = vst.msk [vmem:[#allocation2 + $0x39] sm:$0xff] %vm194, %v181
    %201 = vst.msk [vmem:[#allocation2 + $0x49] sm:$0xff] %vm194, %v183
    %202 = vst.msk [vmem:[#allocation2 + $0x51] sm:$0xff] %vm194, %v185
    %v203 = vld [vmem:[#allocation2] sm:$0xff]
    %v204 = vld [vmem:[#allocation2 + $0x8] sm:$0xff]
    %vm205 = vcmask 1047840
    %206 = vrot.lane.b32.xlu0 %v203, 36
    %v207 = vpop.permute.xlu0 %206
    %v208 = vsel %vm205, %v207, %v203
    %209 = vrot.lane.b32.xlu0 %v204, 36
    %v210 = vpop.permute.xlu0 %209
    %v211 = vsel %vm205, %v210, %v204
    %212 = vrot.lane.b32.xlu0 %v208, 36
    %v213 = vpop.permute.xlu0 %212
    %214 = vrot.lane.b32.xlu0 %v211, 36
    %v215 = vpop.permute.xlu0 %214
    %v216 = vsel %vm205, %v213, %v203
    %v217 = vsel %vm205, %v215, %v204
    %s218 = sld [smem:[#allocation3]]
    %v219 = vstv %s218
    %v220 = vmul.f32 %v219, %v216
    %v221 = vmul.f32 %v219, %v217
    %s222 = sld [smem:[#allocation3 + $0x24]]
    %v223 = vstv %s222
    %v224 = vmul.f32 %v223, %v216
    %v225 = vmul.f32 %v223, %v217
    %s226 = sld [smem:[#allocation3 + $0x48]]
    %v227 = vstv %s226
    %v228 = vmul.f32 %v227, %v216
    %v229 = vmul.f32 %v227, %v217
    %s230 = sld [smem:[#allocation3 + $0x6c]]
    %v231 = vstv %s230
    %v232 = vmul.f32 %v231, %v216
    %v233 = vmul.f32 %v231, %v217
    %s234 = sld [smem:[#allocation3 + $0x1]]
    %v235 = vstv %s234
    %v236 = vmul.f32 %v235, %v203
    %v237 = vmul.f32 %v235, %v204
    %240 = vrot.lane.b32.xlu0 %v236, 35
    %v241 = vpop.permute.xlu0 %240
    %242 = vrot.lane.b32.xlu0 %v237, 35
    %v243 = vpop.permute.xlu0 %242
    %v246 = vadd.f32 %v220, %v241
    %v247 = vadd.f32 %v221, %v243
    %s248 = sld [smem:[#allocation3 + $0x25]]
    %v249 = vstv %s248
    %v250 = vmul.f32 %v249, %v203
    %v251 = vmul.f32 %v249, %v204
    %254 = vrot.lane.b32.xlu0 %v250, 35
    %v255 = vpop.permute.xlu0 %254
    %256 = vrot.lane.b32.xlu0 %v251, 35
    %v257 = vpop.permute.xlu0 %256
    %v260 = vadd.f32 %v224, %v255
    %v261 = vadd.f32 %v225, %v257
    %s262 = sld [smem:[#allocation3 + $0x49]]
    %v263 = vstv %s262
    %v264 = vmul.f32 %v263, %v203
    %v265 = vmul.f32 %v263, %v204
    %268 = vrot.lane.b32.xlu0 %v264, 35
    %v269 = vpop.permute.xlu0 %268
    %270 = vrot.lane.b32.xlu0 %v265, 35
    %v271 = vpop.permute.xlu0 %270
    %v274 = vadd.f32 %v228, %v269
    %v275 = vadd.f32 %v229, %v271
    %s276 = sld [smem:[#allocation3 + $0x6d]]
    %v277 = vstv %s276
    %v278 = vmul.f32 %v277, %v203
    %v279 = vmul.f32 %v277, %v204
    %282 = vrot.lane.b32.xlu0 %v278, 35
    %v283 = vpop.permute.xlu0 %282
    %284 = vrot.lane.b32.xlu0 %v279, 35
    %v285 = vpop.permute.xlu0 %284
    %v288 = vadd.f32 %v232, %v283
    %v289 = vadd.f32 %v233, %v285
    %s290 = sld [smem:[#allocation3 + $0x2]]
    %v291 = vstv %s290
    %v292 = vmul.f32 %v291, %v216
    %v293 = vmul.f32 %v291, %v217
    %296 = vrot.lane.b32.xlu0 %v292, 34
    %v297 = vpop.permute.xlu0 %296
    %298 = vrot.lane.b32.xlu0 %v293, 34
    %v299 = vpop.permute.xlu0 %298
    %v302 = vadd.f32 %v246, %v297
    %v303 = vadd.f32 %v247, %v299
    %s304 = sld [smem:[#allocation3 + $0x26]]
    %v305 = vstv %s304
    %v306 = vmul.f32 %v305, %v216
    %v307 = vmul.f32 %v305, %v217
    %310 = vrot.lane.b32.xlu0 %v306, 34
    %v311 = vpop.permute.xlu0 %310
    %312 = vrot.lane.b32.xlu0 %v307, 34
    %v313 = vpop.permute.xlu0 %312
    %v316 = vadd.f32 %v260, %v311
    %v317 = vadd.f32 %v261, %v313
    %s318 = sld [smem:[#allocation3 + $0x4a]]
    %v319 = vstv %s318
    %v320 = vmul.f32 %v319, %v216
    %v321 = vmul.f32 %v319, %v217
    %324 = vrot.lane.b32.xlu0 %v320, 34
    %v325 = vpop.permute.xlu0 %324
    %326 = vrot.lane.b32.xlu0 %v321, 34
    %v327 = vpop.permute.xlu0 %326
    %v330 = vadd.f32 %v274, %v325
    %v331 = vadd.f32 %v275, %v327
    %s332 = sld [smem:[#allocation3 + $0x6e]]
    %v333 = vstv %s332
    %v334 = vmul.f32 %v333, %v216
    %v335 = vmul.f32 %v333, %v217
    %338 = vrot.lane.b32.xlu0 %v334, 34
    %v339 = vpop.permute.xlu0 %338
    %340 = vrot.lane.b32.xlu0 %v335, 34
    %v341 = vpop.permute.xlu0 %340
    %v344 = vadd.f32 %v288, %v339
    %v345 = vadd.f32 %v289, %v341
    %v346 = vld [vmem:[#allocation2 + $0x1] sm:$0xff]
    %v347 = vld [vmem:[#allocation2 + $0x9] sm:$0xff]
    %348 = vrot.lane.b32.xlu0 %v346, 36
    %v349 = vpop.permute.xlu0 %348
    %v350 = vsel %vm205, %v349, %v346
    %351 = vrot.lane.b32.xlu0 %v347, 36
    %v352 = vpop.permute.xlu0 %351
    %v353 = vsel %vm205, %v352, %v347
    %354 = vrot.lane.b32.xlu0 %v350, 36
    %v355 = vpop.permute.xlu0 %354
    %356 = vrot.lane.b32.xlu0 %v353, 36
    %v357 = vpop.permute.xlu0 %356
    %v358 = vsel %vm205, %v355, %v346
    %v359 = vsel %vm205, %v357, %v347
    %s360 = sld [smem:[#allocation3 + $0x3]]
    %v361 = vstv %s360
    %v362 = vmul.f32 %v361, %v358
    %v363 = vmul.f32 %v361, %v359
    %v364 = vadd.f32 %v302, %v362
    %v365 = vadd.f32 %v303, %v363
    %s366 = sld [smem:[#allocation3 + $0x27]]
    %v367 = vstv %s366
    %v368 = vmul.f32 %v367, %v358
    %v369 = vmul.f32 %v367, %v359
    %v370 = vadd.f32 %v316, %v368
    %v371 = vadd.f32 %v317, %v369
    %s372 = sld [smem:[#allocation3 + $0x4b]]
    %v373 = vstv %s372
    %v374 = vmul.f32 %v373, %v358
    %v375 = vmul.f32 %v373, %v359
    %v376 = vadd.f32 %v330, %v374
    %v377 = vadd.f32 %v331, %v375
    %s378 = sld [smem:[#allocation3 + $0x6f]]
    %v379 = vstv %s378
    %v380 = vmul.f32 %v379, %v358
    %v381 = vmul.f32 %v379, %v359
    %v382 = vadd.f32 %v344, %v380
    %v383 = vadd.f32 %v345, %v381
    %s384 = sld [smem:[#allocation3 + $0x4]]
    %v385 = vstv %s384
    %v386 = vmul.f32 %v385, %v346
    %v387 = vmul.f32 %v385, %v347
    %390 = vrot.lane.b32.xlu0 %v386, 35
    %v391 = vpop.permute.xlu0 %390
    %392 = vrot.lane.b32.xlu0 %v387, 35
    %v393 = vpop.permute.xlu0 %392
    %v396 = vadd.f32 %v364, %v391
    %v397 = vadd.f32 %v365, %v393
    %s398 = sld [smem:[#allocation3 + $0x28]]
    %v399 = vstv %s398
    %v400 = vmul.f32 %v399, %v346
    %v401 = vmul.f32 %v399, %v347
    %404 = vrot.lane.b32.xlu0 %v400, 35
    %v405 = vpop.permute.xlu0 %404
    %406 = vrot.lane.b32.xlu0 %v401, 35
    %v407 = vpop.permute.xlu0 %406
    %v410 = vadd.f32 %v370, %v405
    %v411 = vadd.f32 %v371, %v407
    %s412 = sld [smem:[#allocation3 + $0x4c]]
    %v413 = vstv %s412
    %v414 = vmul.f32 %v413, %v346
    %v415 = vmul.f32 %v413, %v347
    %418 = vrot.lane.b32.xlu0 %v414, 35
    %v419 = vpop.permute.xlu0 %418
    %420 = vrot.lane.b32.xlu0 %v415, 35
    %v421 = vpop.permute.xlu0 %420
    %v424 = vadd.f32 %v376, %v419
    %v425 = vadd.f32 %v377, %v421
    %s426 = sld [smem:[#allocation3 + $0x70]]
    %v427 = vstv %s426
    %v428 = vmul.f32 %v427, %v346
    %v429 = vmul.f32 %v427, %v347
    %432 = vrot.lane.b32.xlu0 %v428, 35
    %v433 = vpop.permute.xlu0 %432
    %434 = vrot.lane.b32.xlu0 %v429, 35
    %v435 = vpop.permute.xlu0 %434
    %v438 = vadd.f32 %v382, %v433
    %v439 = vadd.f32 %v383, %v435
    %s440 = sld [smem:[#allocation3 + $0x5]]
    %v441 = vstv %s440
    %v442 = vmul.f32 %v441, %v358
    %v443 = vmul.f32 %v441, %v359
    %446 = vrot.lane.b32.xlu0 %v442, 34
    %v447 = vpop.permute.xlu0 %446
    %448 = vrot.lane.b32.xlu0 %v443, 34
    %v449 = vpop.permute.xlu0 %448
    %v452 = vadd.f32 %v396, %v447
    %v453 = vadd.f32 %v397, %v449
    %s454 = sld [smem:[#allocation3 + $0x29]]
    %v455 = vstv %s454
    %v456 = vmul.f32 %v455, %v358
    %v457 = vmul.f32 %v455, %v359
    %460 = vrot.lane.b32.xlu0 %v456, 34
    %v461 = vpop.permute.xlu0 %460
    %462 = vrot.lane.b32.xlu0 %v457, 34
    %v463 = vpop.permute.xlu0 %462
    %v466 = vadd.f32 %v410, %v461
    %v467 = vadd.f32 %v411, %v463
    %s468 = sld [smem:[#allocation3 + $0x4d]]
    %v469 = vstv %s468
    %v470 = vmul.f32 %v469, %v358
    %v471 = vmul.f32 %v469, %v359
    %474 = vrot.lane.b32.xlu0 %v470, 34
    %v475 = vpop.permute.xlu0 %474
    %476 = vrot.lane.b32.xlu0 %v471, 34
    %v477 = vpop.permute.xlu0 %476
    %v480 = vadd.f32 %v424, %v475
    %v481 = vadd.f32 %v425, %v477
    %s482 = sld [smem:[#allocation3 + $0x71]]
    %v483 = vstv %s482
    %v484 = vmul.f32 %v483, %v358
    %v485 = vmul.f32 %v483, %v359
    %488 = vrot.lane.b32.xlu0 %v484, 34
    %v489 = vpop.permute.xlu0 %488
    %490 = vrot.lane.b32.xlu0 %v485, 34
    %v491 = vpop.permute.xlu0 %490
    %v494 = vadd.f32 %v438, %v489
    %v495 = vadd.f32 %v439, %v491
    %v496 = vld [vmem:[#allocation2 + $0x2] sm:$0xff]
    %v497 = vld [vmem:[#allocation2 + $0xa] sm:$0xff]
    %498 = vrot.lane.b32.xlu0 %v496, 36
    %v499 = vpop.permute.xlu0 %498
    %v500 = vsel %vm205, %v499, %v496
    %501 = vrot.lane.b32.xlu0 %v497, 36
    %v502 = vpop.permute.xlu0 %501
    %v503 = vsel %vm205, %v502, %v497
    %504 = vrot.lane.b32.xlu0 %v500, 36
    %v505 = vpop.permute.xlu0 %504
    %506 = vrot.lane.b32.xlu0 %v503, 36
    %v507 = vpop.permute.xlu0 %506
    %v508 = vsel %vm205, %v505, %v496
    %v509 = vsel %vm205, %v507, %v497
    %s510 = sld [smem:[#allocation3 + $0x6]]
    %v511 = vstv %s510
    %v512 = vmul.f32 %v511, %v508
    %v513 = vmul.f32 %v511, %v509
    %v514 = vadd.f32 %v452, %v512
    %v515 = vadd.f32 %v453, %v513
    %s516 = sld [smem:[#allocation3 + $0x2a]]
    %v517 = vstv %s516
    %v518 = vmul.f32 %v517, %v508
    %v519 = vmul.f32 %v517, %v509
    %v520 = vadd.f32 %v466, %v518
    %v521 = vadd.f32 %v467, %v519
    %s522 = sld [smem:[#allocation3 + $0x4e]]
    %v523 = vstv %s522
    %v524 = vmul.f32 %v523, %v508
    %v525 = vmul.f32 %v523, %v509
    %v526 = vadd.f32 %v480, %v524
    %v527 = vadd.f32 %v481, %v525
    %s528 = sld [smem:[#allocation3 + $0x72]]
    %v529 = vstv %s528
    %v530 = vmul.f32 %v529, %v508
    %v531 = vmul.f32 %v529, %v509
    %v532 = vadd.f32 %v494, %v530
    %v533 = vadd.f32 %v495, %v531
    %s534 = sld [smem:[#allocation3 + $0x7]]
    %v535 = vstv %s534
    %v536 = vmul.f32 %v535, %v496
    %v537 = vmul.f32 %v535, %v497
    %540 = vrot.lane.b32.xlu0 %v536, 35
    %v541 = vpop.permute.xlu0 %540
    %542 = vrot.lane.b32.xlu0 %v537, 35
    %v543 = vpop.permute.xlu0 %542
    %v546 = vadd.f32 %v514, %v541
    %v547 = vadd.f32 %v515, %v543
    %s548 = sld [smem:[#allocation3 + $0x2b]]
    %v549 = vstv %s548
    %v550 = vmul.f32 %v549, %v496
    %v551 = vmul.f32 %v549, %v497
    %554 = vrot.lane.b32.xlu0 %v550, 35
    %v555 = vpop.permute.xlu0 %554
    %556 = vrot.lane.b32.xlu0 %v551, 35
    %v557 = vpop.permute.xlu0 %556
    %v560 = vadd.f32 %v520, %v555
    %v561 = vadd.f32 %v521, %v557
    %s562 = sld [smem:[#allocation3 + $0x4f]]
    %v563 = vstv %s562
    %v564 = vmul.f32 %v563, %v496
    %v565 = vmul.f32 %v563, %v497
    %568 = vrot.lane.b32.xlu0 %v564, 35
    %v569 = vpop.permute.xlu0 %568
    %570 = vrot.lane.b32.xlu0 %v565, 35
    %v571 = vpop.permute.xlu0 %570
    %v574 = vadd.f32 %v526, %v569
    %v575 = vadd.f32 %v527, %v571
    %s576 = sld [smem:[#allocation3 + $0x73]]
    %v577 = vstv %s576
    %v578 = vmul.f32 %v577, %v496
    %v579 = vmul.f32 %v577, %v497
    %582 = vrot.lane.b32.xlu0 %v578, 35
    %v583 = vpop.permute.xlu0 %582
    %584 = vrot.lane.b32.xlu0 %v579, 35
    %v585 = vpop.permute.xlu0 %584
    %v588 = vadd.f32 %v532, %v583
    %v589 = vadd.f32 %v533, %v585
    %s590 = sld [smem:[#allocation3 + $0x8]]
    %v591 = vstv %s590
    %v592 = vmul.f32 %v591, %v508
    %v593 = vmul.f32 %v591, %v509
    %596 = vrot.lane.b32.xlu0 %v592, 34
    %v597 = vpop.permute.xlu0 %596
    %598 = vrot.lane.b32.xlu0 %v593, 34
    %v599 = vpop.permute.xlu0 %598
    %v602 = vadd.f32 %v546, %v597
    %v603 = vadd.f32 %v547, %v599
    %s604 = sld [smem:[#allocation3 + $0x2c]]
    %v605 = vstv %s604
    %v606 = vmul.f32 %v605, %v508
    %v607 = vmul.f32 %v605, %v509
    %610 = vrot.lane.b32.xlu0 %v606, 34
    %v611 = vpop.permute.xlu0 %610
    %612 = vrot.lane.b32.xlu0 %v607, 34
    %v613 = vpop.permute.xlu0 %612
    %v616 = vadd.f32 %v560, %v611
    %v617 = vadd.f32 %v561, %v613
    %s618 = sld [smem:[#allocation3 + $0x50]]
    %v619 = vstv %s618
    %v620 = vmul.f32 %v619, %v508
    %v621 = vmul.f32 %v619, %v509
    %624 = vrot.lane.b32.xlu0 %v620, 34
    %v625 = vpop.permute.xlu0 %624
    %626 = vrot.lane.b32.xlu0 %v621, 34
    %v627 = vpop.permute.xlu0 %626
    %v630 = vadd.f32 %v574, %v625
    %v631 = vadd.f32 %v575, %v627
    %s632 = sld [smem:[#allocation3 + $0x74]]
    %v633 = vstv %s632
    %v634 = vmul.f32 %v633, %v508
    %v635 = vmul.f32 %v633, %v509
    %638 = vrot.lane.b32.xlu0 %v634, 34
    %v639 = vpop.permute.xlu0 %638
    %640 = vrot.lane.b32.xlu0 %v635, 34
    %v641 = vpop.permute.xlu0 %640
    %v644 = vadd.f32 %v588, %v639
    %v645 = vadd.f32 %v589, %v641
    %s646 = scalar_lea.vmem [#allocation2], 24
    %v647 = vld [vmem:[%s646] sm:$0xff]
    %v648 = vld [vmem:[%s646 + $0x8] sm:$0xff]
    %649 = vrot.lane.b32.xlu0 %v647, 36
    %v650 = vpop.permute.xlu0 %649
    %v651 = vsel %vm205, %v650, %v647
    %652 = vrot.lane.b32.xlu0 %v648, 36
    %v653 = vpop.permute.xlu0 %652
    %v654 = vsel %vm205, %v653, %v648
    %655 = vrot.lane.b32.xlu0 %v651, 36
    %v656 = vpop.permute.xlu0 %655
    %657 = vrot.lane.b32.xlu0 %v654, 36
    %v658 = vpop.permute.xlu0 %657
    %v659 = vsel %vm205, %v656, %v647
    %v660 = vsel %vm205, %v658, %v648
    %s661 = sld [smem:[#allocation3 + $0x9]]
    %v662 = vstv %s661
    %v663 = vmul.f32 %v662, %v659
    %v664 = vmul.f32 %v662, %v660
    %v665 = vadd.f32 %v602, %v663
    %v666 = vadd.f32 %v603, %v664
    %s667 = sld [smem:[#allocation3 + $0x2d]]
    %v668 = vstv %s667
    %v669 = vmul.f32 %v668, %v659
    %v670 = vmul.f32 %v668, %v660
    %v671 = vadd.f32 %v616, %v669
    %v672 = vadd.f32 %v617, %v670
    %s673 = sld [smem:[#allocation3 + $0x51]]
    %v674 = vstv %s673
    %v675 = vmul.f32 %v674, %v659
    %v676 = vmul.f32 %v674, %v660
    %v677 = vadd.f32 %v630, %v675
    %v678 = vadd.f32 %v631, %v676
    %s679 = sld [smem:[#allocation3 + $0x75]]
    %v680 = vstv %s679
    %v681 = vmul.f32 %v680, %v659
    %v682 = vmul.f32 %v680, %v660
    %v683 = vadd.f32 %v644, %v681
    %v684 = vadd.f32 %v645, %v682
    %s685 = sld [smem:[#allocation3 + $0xa]]
    %v686 = vstv %s685
    %v687 = vmul.f32 %v686, %v647
    %v688 = vmul.f32 %v686, %v648
    %691 = vrot.lane.b32.xlu0 %v687, 35
    %v692 = vpop.permute.xlu0 %691
    %693 = vrot.lane.b32.xlu0 %v688, 35
    %v694 = vpop.permute.xlu0 %693
    %v697 = vadd.f32 %v665, %v692
    %v698 = vadd.f32 %v666, %v694
    %s699 = sld [smem:[#allocation3 + $0x2e]]
    %v700 = vstv %s699
    %v701 = vmul.f32 %v700, %v647
    %v702 = vmul.f32 %v700, %v648
    %705 = vrot.lane.b32.xlu0 %v701, 35
    %v706 = vpop.permute.xlu0 %705
    %707 = vrot.lane.b32.xlu0 %v702, 35
    %v708 = vpop.permute.xlu0 %707
    %v711 = vadd.f32 %v671, %v706
    %v712 = vadd.f32 %v672, %v708
    %s713 = sld [smem:[#allocation3 + $0x52]]
    %v714 = vstv %s713
    %v715 = vmul.f32 %v714, %v647
    %v716 = vmul.f32 %v714, %v648
    %719 = vrot.lane.b32.xlu0 %v715, 35
    %v720 = vpop.permute.xlu0 %719
    %721 = vrot.lane.b32.xlu0 %v716, 35
    %v722 = vpop.permute.xlu0 %721
    %v725 = vadd.f32 %v677, %v720
    %v726 = vadd.f32 %v678, %v722
    %s727 = sld [smem:[#allocation3 + $0x76]]
    %v728 = vstv %s727
    %v729 = vmul.f32 %v728, %v647
    %v730 = vmul.f32 %v728, %v648
    %733 = vrot.lane.b32.xlu0 %v729, 35
    %v734 = vpop.permute.xlu0 %733
    %735 = vrot.lane.b32.xlu0 %v730, 35
    %v736 = vpop.permute.xlu0 %735
    %v739 = vadd.f32 %v683, %v734
    %v740 = vadd.f32 %v684, %v736
    %s741 = sld [smem:[#allocation3 + $0xb]]
    %v742 = vstv %s741
    %v743 = vmul.f32 %v742, %v659
    %v744 = vmul.f32 %v742, %v660
    %747 = vrot.lane.b32.xlu0 %v743, 34
    %v748 = vpop.permute.xlu0 %747
    %749 = vrot.lane.b32.xlu0 %v744, 34
    %v750 = vpop.permute.xlu0 %749
    %v753 = vadd.f32 %v697, %v748
    %v754 = vadd.f32 %v698, %v750
    %s755 = sld [smem:[#allocation3 + $0x2f]]
    %v756 = vstv %s755
    %v757 = vmul.f32 %v756, %v659
    %v758 = vmul.f32 %v756, %v660
    %761 = vrot.lane.b32.xlu0 %v757, 34
    %v762 = vpop.permute.xlu0 %761
    %763 = vrot.lane.b32.xlu0 %v758, 34
    %v764 = vpop.permute.xlu0 %763
    %v767 = vadd.f32 %v711, %v762
    %v768 = vadd.f32 %v712, %v764
    %s769 = sld [smem:[#allocation3 + $0x53]]
    %v770 = vstv %s769
    %v771 = vmul.f32 %v770, %v659
    %v772 = vmul.f32 %v770, %v660
    %775 = vrot.lane.b32.xlu0 %v771, 34
    %v776 = vpop.permute.xlu0 %775
    %777 = vrot.lane.b32.xlu0 %v772, 34
    %v778 = vpop.permute.xlu0 %777
    %v781 = vadd.f32 %v725, %v776
    %v782 = vadd.f32 %v726, %v778
    %s783 = sld [smem:[#allocation3 + $0x77]]
    %v784 = vstv %s783
    %v785 = vmul.f32 %v784, %v659
    %v786 = vmul.f32 %v784, %v660
    %789 = vrot.lane.b32.xlu0 %v785, 34
    %v790 = vpop.permute.xlu0 %789
    %791 = vrot.lane.b32.xlu0 %v786, 34
    %v792 = vpop.permute.xlu0 %791
    %v795 = vadd.f32 %v739, %v790
    %v796 = vadd.f32 %v740, %v792
    %v797 = vld [vmem:[%s646 + $0x1] sm:$0xff]
    %v798 = vld [vmem:[%s646 + $0x9] sm:$0xff]
    %799 = vrot.lane.b32.xlu0 %v797, 36
    %v800 = vpop.permute.xlu0 %799
    %v801 = vsel %vm205, %v800, %v797
    %802 = vrot.lane.b32.xlu0 %v798, 36
    %v803 = vpop.permute.xlu0 %802
    %v804 = vsel %vm205, %v803, %v798
    %805 = vrot.lane.b32.xlu0 %v801, 36
    %v806 = vpop.permute.xlu0 %805
    %807 = vrot.lane.b32.xlu0 %v804, 36
    %v808 = vpop.permute.xlu0 %807
    %v809 = vsel %vm205, %v806, %v797
    %v810 = vsel %vm205, %v808, %v798
    %s811 = sld [smem:[#allocation3 + $0xc]]
    %v812 = vstv %s811
    %v813 = vmul.f32 %v812, %v809
    %v814 = vmul.f32 %v812, %v810
    %v815 = vadd.f32 %v753, %v813
    %v816 = vadd.f32 %v754, %v814
    %s817 = sld [smem:[#allocation3 + $0x30]]
    %v818 = vstv %s817
    %v819 = vmul.f32 %v818, %v809
    %v820 = vmul.f32 %v818, %v810
    %v821 = vadd.f32 %v767, %v819
    %v822 = vadd.f32 %v768, %v820
    %s823 = sld [smem:[#allocation3 + $0x54]]
    %v824 = vstv %s823
    %v825 = vmul.f32 %v824, %v809
    %v826 = vmul.f32 %v824, %v810
    %v827 = vadd.f32 %v781, %v825
    %v828 = vadd.f32 %v782, %v826
    %s829 = sld [smem:[#allocation3 + $0x78]]
    %v830 = vstv %s829
    %v831 = vmul.f32 %v830, %v809
    %v832 = vmul.f32 %v830, %v810
    %v833 = vadd.f32 %v795, %v831
    %v834 = vadd.f32 %v796, %v832
    %s835 = sld [smem:[#allocation3 + $0xd]]
    %v836 = vstv %s835
    %v837 = vmul.f32 %v836, %v797
    %v838 = vmul.f32 %v836, %v798
    %841 = vrot.lane.b32.xlu0 %v837, 35
    %v842 = vpop.permute.xlu0 %841
    %843 = vrot.lane.b32.xlu0 %v838, 35
    %v844 = vpop.permute.xlu0 %843
    %v847 = vadd.f32 %v815, %v842
    %v848 = vadd.f32 %v816, %v844
    %s849 = sld [smem:[#allocation3 + $0x31]]
    %v850 = vstv %s849
    %v851 = vmul.f32 %v850, %v797
    %v852 = vmul.f32 %v850, %v798
    %855 = vrot.lane.b32.xlu0 %v851, 35
    %v856 = vpop.permute.xlu0 %855
    %857 = vrot.lane.b32.xlu0 %v852, 35
    %v858 = vpop.permute.xlu0 %857
    %v861 = vadd.f32 %v821, %v856
    %v862 = vadd.f32 %v822, %v858
    %s863 = sld [smem:[#allocation3 + $0x55]]
    %v864 = vstv %s863
    %v865 = vmul.f32 %v864, %v797
    %v866 = vmul.f32 %v864, %v798
    %869 = vrot.lane.b32.xlu0 %v865, 35
    %v870 = vpop.permute.xlu0 %869
    %871 = vrot.lane.b32.xlu0 %v866, 35
    %v872 = vpop.permute.xlu0 %871
    %v875 = vadd.f32 %v827, %v870
    %v876 = vadd.f32 %v828, %v872
    %s877 = sld [smem:[#allocation3 + $0x79]]
    %v878 = vstv %s877
    %v879 = vmul.f32 %v878, %v797
    %v880 = vmul.f32 %v878, %v798
    %883 = vrot.lane.b32.xlu0 %v879, 35
    %v884 = vpop.permute.xlu0 %883
    %885 = vrot.lane.b32.xlu0 %v880, 35
    %v886 = vpop.permute.xlu0 %885
    %v889 = vadd.f32 %v833, %v884
    %v890 = vadd.f32 %v834, %v886
    %s891 = sld [smem:[#allocation3 + $0xe]]
    %v892 = vstv %s891
    %v893 = vmul.f32 %v892, %v809
    %v894 = vmul.f32 %v892, %v810
    %897 = vrot.lane.b32.xlu0 %v893, 34
    %v898 = vpop.permute.xlu0 %897
    %899 = vrot.lane.b32.xlu0 %v894, 34
    %v900 = vpop.permute.xlu0 %899
    %v903 = vadd.f32 %v847, %v898
    %v904 = vadd.f32 %v848, %v900
    %s905 = sld [smem:[#allocation3 + $0x32]]
    %v906 = vstv %s905
    %v907 = vmul.f32 %v906, %v809
    %v908 = vmul.f32 %v906, %v810
    %911 = vrot.lane.b32.xlu0 %v907, 34
    %v912 = vpop.permute.xlu0 %911
    %913 = vrot.lane.b32.xlu0 %v908, 34
    %v914 = vpop.permute.xlu0 %913
    %v917 = vadd.f32 %v861, %v912
    %v918 = vadd.f32 %v862, %v914
    %s919 = sld [smem:[#allocation3 + $0x56]]
    %v920 = vstv %s919
    %v921 = vmul.f32 %v920, %v809
    %v922 = vmul.f32 %v920, %v810
    %925 = vrot.lane.b32.xlu0 %v921, 34
    %v926 = vpop.permute.xlu0 %925
    %927 = vrot.lane.b32.xlu0 %v922, 34
    %v928 = vpop.permute.xlu0 %927
    %v931 = vadd.f32 %v875, %v926
    %v932 = vadd.f32 %v876, %v928
    %s933 = sld [smem:[#allocation3 + $0x7a]]
    %v934 = vstv %s933
    %v935 = vmul.f32 %v934, %v809
    %v936 = vmul.f32 %v934, %v810
    %939 = vrot.lane.b32.xlu0 %v935, 34
    %v940 = vpop.permute.xlu0 %939
    %941 = vrot.lane.b32.xlu0 %v936, 34
    %v942 = vpop.permute.xlu0 %941
    %v945 = vadd.f32 %v889, %v940
    %v946 = vadd.f32 %v890, %v942
    %v947 = vld [vmem:[%s646 + $0x2] sm:$0xff]
    %v948 = vld [vmem:[%s646 + $0xa] sm:$0xff]
    %949 = vrot.lane.b32.xlu0 %v947, 36
    %v950 = vpop.permute.xlu0 %949
    %v951 = vsel %vm205, %v950, %v947
    %952 = vrot.lane.b32.xlu0 %v948, 36
    %v953 = vpop.permute.xlu0 %952
    %v954 = vsel %vm205, %v953, %v948
    %955 = vrot.lane.b32.xlu0 %v951, 36
    %v956 = vpop.permute.xlu0 %955
    %957 = vrot.lane.b32.xlu0 %v954, 36
    %v958 = vpop.permute.xlu0 %957
    %v959 = vsel %vm205, %v956, %v947
    %v960 = vsel %vm205, %v958, %v948
    %s961 = sld [smem:[#allocation3 + $0xf]]
    %v962 = vstv %s961
    %v963 = vmul.f32 %v962, %v959
    %v964 = vmul.f32 %v962, %v960
    %v965 = vadd.f32 %v903, %v963
    %v966 = vadd.f32 %v904, %v964
    %s967 = sld [smem:[#allocation3 + $0x33]]
    %v968 = vstv %s967
    %v969 = vmul.f32 %v968, %v959
    %v970 = vmul.f32 %v968, %v960
    %v971 = vadd.f32 %v917, %v969
    %v972 = vadd.f32 %v918, %v970
    %s973 = sld [smem:[#allocation3 + $0x57]]
    %v974 = vstv %s973
    %v975 = vmul.f32 %v974, %v959
    %v976 = vmul.f32 %v974, %v960
    %v977 = vadd.f32 %v931, %v975
    %v978 = vadd.f32 %v932, %v976
    %s979 = sld [smem:[#allocation3 + $0x7b]]
    %v980 = vstv %s979
    %v981 = vmul.f32 %v980, %v959
    %v982 = vmul.f32 %v980, %v960
    %v983 = vadd.f32 %v945, %v981
    %v984 = vadd.f32 %v946, %v982
    %s985 = sld [smem:[#allocation3 + $0x10]]
    %v986 = vstv %s985
    %v987 = vmul.f32 %v986, %v947
    %v988 = vmul.f32 %v986, %v948
    %991 = vrot.lane.b32.xlu0 %v987, 35
    %v992 = vpop.permute.xlu0 %991
    %993 = vrot.lane.b32.xlu0 %v988, 35
    %v994 = vpop.permute.xlu0 %993
    %v997 = vadd.f32 %v965, %v992
    %v998 = vadd.f32 %v966, %v994
    %s999 = sld [smem:[#allocation3 + $0x34]]
    %v1000 = vstv %s999
    %v1001 = vmul.f32 %v1000, %v947
    %v1002 = vmul.f32 %v1000, %v948
    %1005 = vrot.lane.b32.xlu0 %v1001, 35
    %v1006 = vpop.permute.xlu0 %1005
    %1007 = vrot.lane.b32.xlu0 %v1002, 35
    %v1008 = vpop.permute.xlu0 %1007
    %v1011 = vadd.f32 %v971, %v1006
    %v1012 = vadd.f32 %v972, %v1008
    %s1013 = sld [smem:[#allocation3 + $0x58]]
    %v1014 = vstv %s1013
    %v1015 = vmul.f32 %v1014, %v947
    %v1016 = vmul.f32 %v1014, %v948
    %1019 = vrot.lane.b32.xlu0 %v1015, 35
    %v1020 = vpop.permute.xlu0 %1019
    %1021 = vrot.lane.b32.xlu0 %v1016, 35
    %v1022 = vpop.permute.xlu0 %1021
    %v1025 = vadd.f32 %v977, %v1020
    %v1026 = vadd.f32 %v978, %v1022
    %s1027 = sld [smem:[#allocation3 + $0x7c]]
    %v1028 = vstv %s1027
    %v1029 = vmul.f32 %v1028, %v947
    %v1030 = vmul.f32 %v1028, %v948
    %1033 = vrot.lane.b32.xlu0 %v1029, 35
    %v1034 = vpop.permute.xlu0 %1033
    %1035 = vrot.lane.b32.xlu0 %v1030, 35
    %v1036 = vpop.permute.xlu0 %1035
    %v1039 = vadd.f32 %v983, %v1034
    %v1040 = vadd.f32 %v984, %v1036
    %s1041 = sld [smem:[#allocation3 + $0x11]]
    %v1042 = vstv %s1041
    %v1043 = vmul.f32 %v1042, %v959
    %v1044 = vmul.f32 %v1042, %v960
    %1047 = vrot.lane.b32.xlu0 %v1043, 34
    %v1048 = vpop.permute.xlu0 %1047
    %1049 = vrot.lane.b32.xlu0 %v1044, 34
    %v1050 = vpop.permute.xlu0 %1049
    %v1053 = vadd.f32 %v997, %v1048
    %v1054 = vadd.f32 %v998, %v1050
    %s1055 = sld [smem:[#allocation3 + $0x35]]
    %v1056 = vstv %s1055
    %v1057 = vmul.f32 %v1056, %v959
    %v1058 = vmul.f32 %v1056, %v960
    %1061 = vrot.lane.b32.xlu0 %v1057, 34
    %v1062 = vpop.permute.xlu0 %1061
    %1063 = vrot.lane.b32.xlu0 %v1058, 34
    %v1064 = vpop.permute.xlu0 %1063
    %v1067 = vadd.f32 %v1011, %v1062
    %v1068 = vadd.f32 %v1012, %v1064
    %s1069 = sld [smem:[#allocation3 + $0x59]]
    %v1070 = vstv %s1069
    %v1071 = vmul.f32 %v1070, %v959
    %v1072 = vmul.f32 %v1070, %v960
    %1075 = vrot.lane.b32.xlu0 %v1071, 34
    %v1076 = vpop.permute.xlu0 %1075
    %1077 = vrot.lane.b32.xlu0 %v1072, 34
    %v1078 = vpop.permute.xlu0 %1077
    %v1081 = vadd.f32 %v1025, %v1076
    %v1082 = vadd.f32 %v1026, %v1078
    %s1083 = sld [smem:[#allocation3 + $0x7d]]
    %v1084 = vstv %s1083
    %v1085 = vmul.f32 %v1084, %v959
    %v1086 = vmul.f32 %v1084, %v960
    %1089 = vrot.lane.b32.xlu0 %v1085, 34
    %v1090 = vpop.permute.xlu0 %1089
    %1091 = vrot.lane.b32.xlu0 %v1086, 34
    %v1092 = vpop.permute.xlu0 %1091
    %v1095 = vadd.f32 %v1039, %v1090
    %v1096 = vadd.f32 %v1040, %v1092
    %s1097 = scalar_lea.vmem [#allocation2], 48
    %v1098 = vld [vmem:[%s1097] sm:$0xff]
    %v1099 = vld [vmem:[%s1097 + $0x8] sm:$0xff]
    %1100 = vrot.lane.b32.xlu0 %v1098, 36
    %v1101 = vpop.permute.xlu0 %1100
    %v1102 = vsel %vm205, %v1101, %v1098
    %1103 = vrot.lane.b32.xlu0 %v1099, 36
    %v1104 = vpop.permute.xlu0 %1103
    %v1105 = vsel %vm205, %v1104, %v1099
    %1106 = vrot.lane.b32.xlu0 %v1102, 36
    %v1107 = vpop.permute.xlu0 %1106
    %1108 = vrot.lane.b32.xlu0 %v1105, 36
    %v1109 = vpop.permute.xlu0 %1108
    %v1110 = vsel %vm205, %v1107, %v1098
    %v1111 = vsel %vm205, %v1109, %v1099
    %s1112 = sld [smem:[#allocation3 + $0x12]]
    %v1113 = vstv %s1112
    %v1114 = vmul.f32 %v1113, %v1110
    %v1115 = vmul.f32 %v1113, %v1111
    %v1116 = vadd.f32 %v1053, %v1114
    %v1117 = vadd.f32 %v1054, %v1115
    %s1118 = sld [smem:[#allocation3 + $0x36]]
    %v1119 = vstv %s1118
    %v1120 = vmul.f32 %v1119, %v1110
    %v1121 = vmul.f32 %v1119, %v1111
    %v1122 = vadd.f32 %v1067, %v1120
    %v1123 = vadd.f32 %v1068, %v1121
    %s1124 = sld [smem:[#allocation3 + $0x5a]]
    %v1125 = vstv %s1124
    %v1126 = vmul.f32 %v1125, %v1110
    %v1127 = vmul.f32 %v1125, %v1111
    %v1128 = vadd.f32 %v1081, %v1126
    %v1129 = vadd.f32 %v1082, %v1127
    %s1130 = sld [smem:[#allocation3 + $0x7e]]
    %v1131 = vstv %s1130
    %v1132 = vmul.f32 %v1131, %v1110
    %v1133 = vmul.f32 %v1131, %v1111
    %v1134 = vadd.f32 %v1095, %v1132
    %v1135 = vadd.f32 %v1096, %v1133
    %s1136 = sld [smem:[#allocation3 + $0x13]]
    %v1137 = vstv %s1136
    %v1138 = vmul.f32 %v1137, %v1098
    %v1139 = vmul.f32 %v1137, %v1099
    %1142 = vrot.lane.b32.xlu0 %v1138, 35
    %v1143 = vpop.permute.xlu0 %1142
    %1144 = vrot.lane.b32.xlu0 %v1139, 35
    %v1145 = vpop.permute.xlu0 %1144
    %v1148 = vadd.f32 %v1116, %v1143
    %v1149 = vadd.f32 %v1117, %v1145
    %s1150 = sld [smem:[#allocation3 + $0x37]]
    %v1151 = vstv %s1150
    %v1152 = vmul.f32 %v1151, %v1098
    %v1153 = vmul.f32 %v1151, %v1099
    %1156 = vrot.lane.b32.xlu0 %v1152, 35
    %v1157 = vpop.permute.xlu0 %1156
    %1158 = vrot.lane.b32.xlu0 %v1153, 35
    %v1159 = vpop.permute.xlu0 %1158
    %v1162 = vadd.f32 %v1122, %v1157
    %v1163 = vadd.f32 %v1123, %v1159
    %s1164 = sld [smem:[#allocation3 + $0x5b]]
    %v1165 = vstv %s1164
    %v1166 = vmul.f32 %v1165, %v1098
    %v1167 = vmul.f32 %v1165, %v1099
    %1170 = vrot.lane.b32.xlu0 %v1166, 35
    %v1171 = vpop.permute.xlu0 %1170
    %1172 = vrot.lane.b32.xlu0 %v1167, 35
    %v1173 = vpop.permute.xlu0 %1172
    %v1176 = vadd.f32 %v1128, %v1171
    %v1177 = vadd.f32 %v1129, %v1173
    %s1178 = sld [smem:[#allocation3 + $0x7f]]
    %v1179 = vstv %s1178
    %v1180 = vmul.f32 %v1179, %v1098
    %v1181 = vmul.f32 %v1179, %v1099
    %1184 = vrot.lane.b32.xlu0 %v1180, 35
    %v1185 = vpop.permute.xlu0 %1184
    %1186 = vrot.lane.b32.xlu0 %v1181, 35
    %v1187 = vpop.permute.xlu0 %1186
    %v1190 = vadd.f32 %v1134, %v1185
    %v1191 = vadd.f32 %v1135, %v1187
    %s1192 = sld [smem:[#allocation3 + $0x14]]
    %v1193 = vstv %s1192
    %v1194 = vmul.f32 %v1193, %v1110
    %v1195 = vmul.f32 %v1193, %v1111
    %1198 = vrot.lane.b32.xlu0 %v1194, 34
    %v1199 = vpop.permute.xlu0 %1198
    %1200 = vrot.lane.b32.xlu0 %v1195, 34
    %v1201 = vpop.permute.xlu0 %1200
    %v1204 = vadd.f32 %v1148, %v1199
    %v1205 = vadd.f32 %v1149, %v1201
    %s1206 = sld [smem:[#allocation3 + $0x38]]
    %v1207 = vstv %s1206
    %v1208 = vmul.f32 %v1207, %v1110
    %v1209 = vmul.f32 %v1207, %v1111
    %1212 = vrot.lane.b32.xlu0 %v1208, 34
    %v1213 = vpop.permute.xlu0 %1212
    %1214 = vrot.lane.b32.xlu0 %v1209, 34
    %v1215 = vpop.permute.xlu0 %1214
    %v1218 = vadd.f32 %v1162, %v1213
    %v1219 = vadd.f32 %v1163, %v1215
    %s1220 = sld [smem:[#allocation3 + $0x5c]]
    %v1221 = vstv %s1220
    %v1222 = vmul.f32 %v1221, %v1110
    %v1223 = vmul.f32 %v1221, %v1111
    %1226 = vrot.lane.b32.xlu0 %v1222, 34
    %v1227 = vpop.permute.xlu0 %1226
    %1228 = vrot.lane.b32.xlu0 %v1223, 34
    %v1229 = vpop.permute.xlu0 %1228
    %v1232 = vadd.f32 %v1176, %v1227
    %v1233 = vadd.f32 %v1177, %v1229
    %s1234 = sld [smem:[#allocation3 + $0x80]]
    %v1235 = vstv %s1234
    %v1236 = vmul.f32 %v1235, %v1110
    %v1237 = vmul.f32 %v1235, %v1111
    %1240 = vrot.lane.b32.xlu0 %v1236, 34
    %v1241 = vpop.permute.xlu0 %1240
    %1242 = vrot.lane.b32.xlu0 %v1237, 34
    %v1243 = vpop.permute.xlu0 %1242
    %v1246 = vadd.f32 %v1190, %v1241
    %v1247 = vadd.f32 %v1191, %v1243
    %v1248 = vld [vmem:[%s1097 + $0x1] sm:$0xff]
    %v1249 = vld [vmem:[%s1097 + $0x9] sm:$0xff]
    %1250 = vrot.lane.b32.xlu0 %v1248, 36
    %v1251 = vpop.permute.xlu0 %1250
    %v1252 = vsel %vm205, %v1251, %v1248
    %1253 = vrot.lane.b32.xlu0 %v1249, 36
    %v1254 = vpop.permute.xlu0 %1253
    %v1255 = vsel %vm205, %v1254, %v1249
    %1256 = vrot.lane.b32.xlu0 %v1252, 36
    %v1257 = vpop.permute.xlu0 %1256
    %1258 = vrot.lane.b32.xlu0 %v1255, 36
    %v1259 = vpop.permute.xlu0 %1258
    %v1260 = vsel %vm205, %v1257, %v1248
    %v1261 = vsel %vm205, %v1259, %v1249
    %s1262 = sld [smem:[#allocation3 + $0x15]]
    %v1263 = vstv %s1262
    %v1264 = vmul.f32 %v1263, %v1260
    %v1265 = vmul.f32 %v1263, %v1261
    %v1266 = vadd.f32 %v1204, %v1264
    %v1267 = vadd.f32 %v1205, %v1265
    %s1268 = sld [smem:[#allocation3 + $0x39]]
    %v1269 = vstv %s1268
    %v1270 = vmul.f32 %v1269, %v1260
    %v1271 = vmul.f32 %v1269, %v1261
    %v1272 = vadd.f32 %v1218, %v1270
    %v1273 = vadd.f32 %v1219, %v1271
    %s1274 = sld [smem:[#allocation3 + $0x5d]]
    %v1275 = vstv %s1274
    %v1276 = vmul.f32 %v1275, %v1260
    %v1277 = vmul.f32 %v1275, %v1261
    %v1278 = vadd.f32 %v1232, %v1276
    %v1279 = vadd.f32 %v1233, %v1277
    %s1280 = sld [smem:[#allocation3 + $0x81]]
    %v1281 = vstv %s1280
    %v1282 = vmul.f32 %v1281, %v1260
    %v1283 = vmul.f32 %v1281, %v1261
    %v1284 = vadd.f32 %v1246, %v1282
    %v1285 = vadd.f32 %v1247, %v1283
    %s1286 = sld [smem:[#allocation3 + $0x16]]
    %v1287 = vstv %s1286
    %v1288 = vmul.f32 %v1287, %v1248
    %v1289 = vmul.f32 %v1287, %v1249
    %1292 = vrot.lane.b32.xlu0 %v1288, 35
    %v1293 = vpop.permute.xlu0 %1292
    %1294 = vrot.lane.b32.xlu0 %v1289, 35
    %v1295 = vpop.permute.xlu0 %1294
    %v1298 = vadd.f32 %v1266, %v1293
    %v1299 = vadd.f32 %v1267, %v1295
    %s1300 = sld [smem:[#allocation3 + $0x3a]]
    %v1301 = vstv %s1300
    %v1302 = vmul.f32 %v1301, %v1248
    %v1303 = vmul.f32 %v1301, %v1249
    %1306 = vrot.lane.b32.xlu0 %v1302, 35
    %v1307 = vpop.permute.xlu0 %1306
    %1308 = vrot.lane.b32.xlu0 %v1303, 35
    %v1309 = vpop.permute.xlu0 %1308
    %v1312 = vadd.f32 %v1272, %v1307
    %v1313 = vadd.f32 %v1273, %v1309
    %s1314 = sld [smem:[#allocation3 + $0x5e]]
    %v1315 = vstv %s1314
    %v1316 = vmul.f32 %v1315, %v1248
    %v1317 = vmul.f32 %v1315, %v1249
    %1320 = vrot.lane.b32.xlu0 %v1316, 35
    %v1321 = vpop.permute.xlu0 %1320
    %1322 = vrot.lane.b32.xlu0 %v1317, 35
    %v1323 = vpop.permute.xlu0 %1322
    %v1326 = vadd.f32 %v1278, %v1321
    %v1327 = vadd.f32 %v1279, %v1323
    %s1328 = sld [smem:[#allocation3 + $0x82]]
    %v1329 = vstv %s1328
    %v1330 = vmul.f32 %v1329, %v1248
    %v1331 = vmul.f32 %v1329, %v1249
    %1334 = vrot.lane.b32.xlu0 %v1330, 35
    %v1335 = vpop.permute.xlu0 %1334
    %1336 = vrot.lane.b32.xlu0 %v1331, 35
    %v1337 = vpop.permute.xlu0 %1336
    %v1340 = vadd.f32 %v1284, %v1335
    %v1341 = vadd.f32 %v1285, %v1337
    %s1342 = sld [smem:[#allocation3 + $0x17]]
    %v1343 = vstv %s1342
    %v1344 = vmul.f32 %v1343, %v1260
    %v1345 = vmul.f32 %v1343, %v1261
    %1348 = vrot.lane.b32.xlu0 %v1344, 34
    %v1349 = vpop.permute.xlu0 %1348
    %1350 = vrot.lane.b32.xlu0 %v1345, 34
    %v1351 = vpop.permute.xlu0 %1350
    %v1354 = vadd.f32 %v1298, %v1349
    %v1355 = vadd.f32 %v1299, %v1351
    %s1356 = sld [smem:[#allocation3 + $0x3b]]
    %v1357 = vstv %s1356
    %v1358 = vmul.f32 %v1357, %v1260
    %v1359 = vmul.f32 %v1357, %v1261
    %1362 = vrot.lane.b32.xlu0 %v1358, 34
    %v1363 = vpop.permute.xlu0 %1362
    %1364 = vrot.lane.b32.xlu0 %v1359, 34
    %v1365 = vpop.permute.xlu0 %1364
    %v1368 = vadd.f32 %v1312, %v1363
    %v1369 = vadd.f32 %v1313, %v1365
    %s1370 = sld [smem:[#allocation3 + $0x5f]]
    %v1371 = vstv %s1370
    %v1372 = vmul.f32 %v1371, %v1260
    %v1373 = vmul.f32 %v1371, %v1261
    %1376 = vrot.lane.b32.xlu0 %v1372, 34
    %v1377 = vpop.permute.xlu0 %1376
    %1378 = vrot.lane.b32.xlu0 %v1373, 34
    %v1379 = vpop.permute.xlu0 %1378
    %v1382 = vadd.f32 %v1326, %v1377
    %v1383 = vadd.f32 %v1327, %v1379
    %s1384 = sld [smem:[#allocation3 + $0x83]]
    %v1385 = vstv %s1384
    %v1386 = vmul.f32 %v1385, %v1260
    %v1387 = vmul.f32 %v1385, %v1261
    %1390 = vrot.lane.b32.xlu0 %v1386, 34
    %v1391 = vpop.permute.xlu0 %1390
    %1392 = vrot.lane.b32.xlu0 %v1387, 34
    %v1393 = vpop.permute.xlu0 %1392
    %v1396 = vadd.f32 %v1340, %v1391
    %v1397 = vadd.f32 %v1341, %v1393
    %v1398 = vld [vmem:[%s1097 + $0x2] sm:$0xff]
    %v1399 = vld [vmem:[%s1097 + $0xa] sm:$0xff]
    %1400 = vrot.lane.b32.xlu0 %v1398, 36
    %v1401 = vpop.permute.xlu0 %1400
    %v1402 = vsel %vm205, %v1401, %v1398
    %1403 = vrot.lane.b32.xlu0 %v1399, 36
    %v1404 = vpop.permute.xlu0 %1403
    %v1405 = vsel %vm205, %v1404, %v1399
    %1406 = vrot.lane.b32.xlu0 %v1402, 36
    %v1407 = vpop.permute.xlu0 %1406
    %1408 = vrot.lane.b32.xlu0 %v1405, 36
    %v1409 = vpop.permute.xlu0 %1408
    %v1410 = vsel %vm205, %v1407, %v1398
    %v1411 = vsel %vm205, %v1409, %v1399
    %s1412 = sld [smem:[#allocation3 + $0x18]]
    %v1413 = vstv %s1412
    %v1414 = vmul.f32 %v1413, %v1410
    %v1415 = vmul.f32 %v1413, %v1411
    %v1416 = vadd.f32 %v1354, %v1414
    %v1417 = vadd.f32 %v1355, %v1415
    %s1418 = sld [smem:[#allocation3 + $0x3c]]
    %v1419 = vstv %s1418
    %v1420 = vmul.f32 %v1419, %v1410
    %v1421 = vmul.f32 %v1419, %v1411
    %v1422 = vadd.f32 %v1368, %v1420
    %v1423 = vadd.f32 %v1369, %v1421
    %s1424 = sld [smem:[#allocation3 + $0x60]]
    %v1425 = vstv %s1424
    %v1426 = vmul.f32 %v1425, %v1410
    %v1427 = vmul.f32 %v1425, %v1411
    %v1428 = vadd.f32 %v1382, %v1426
    %v1429 = vadd.f32 %v1383, %v1427
    %s1430 = sld [smem:[#allocation3 + $0x84]]
    %v1431 = vstv %s1430
    %v1432 = vmul.f32 %v1431, %v1410
    %v1433 = vmul.f32 %v1431, %v1411
    %v1434 = vadd.f32 %v1396, %v1432
    %v1435 = vadd.f32 %v1397, %v1433
    %s1436 = sld [smem:[#allocation3 + $0x19]]
    %v1437 = vstv %s1436
    %v1438 = vmul.f32 %v1437, %v1398
    %v1439 = vmul.f32 %v1437, %v1399
    %1442 = vrot.lane.b32.xlu0 %v1438, 35
    %v1443 = vpop.permute.xlu0 %1442
    %1444 = vrot.lane.b32.xlu0 %v1439, 35
    %v1445 = vpop.permute.xlu0 %1444
    %v1448 = vadd.f32 %v1416, %v1443
    %v1449 = vadd.f32 %v1417, %v1445
    %s1450 = sld [smem:[#allocation3 + $0x3d]]
    %v1451 = vstv %s1450
    %v1452 = vmul.f32 %v1451, %v1398
    %v1453 = vmul.f32 %v1451, %v1399
    %1456 = vrot.lane.b32.xlu0 %v1452, 35
    %v1457 = vpop.permute.xlu0 %1456
    %1458 = vrot.lane.b32.xlu0 %v1453, 35
    %v1459 = vpop.permute.xlu0 %1458
    %v1462 = vadd.f32 %v1422, %v1457
    %v1463 = vadd.f32 %v1423, %v1459
    %s1464 = sld [smem:[#allocation3 + $0x61]]
    %v1465 = vstv %s1464
    %v1466 = vmul.f32 %v1465, %v1398
    %v1467 = vmul.f32 %v1465, %v1399
    %1470 = vrot.lane.b32.xlu0 %v1466, 35
    %v1471 = vpop.permute.xlu0 %1470
    %1472 = vrot.lane.b32.xlu0 %v1467, 35
    %v1473 = vpop.permute.xlu0 %1472
    %v1476 = vadd.f32 %v1428, %v1471
    %v1477 = vadd.f32 %v1429, %v1473
    %s1478 = sld [smem:[#allocation3 + $0x85]]
    %v1479 = vstv %s1478
    %v1480 = vmul.f32 %v1479, %v1398
    %v1481 = vmul.f32 %v1479, %v1399
    %1484 = vrot.lane.b32.xlu0 %v1480, 35
    %v1485 = vpop.permute.xlu0 %1484
    %1486 = vrot.lane.b32.xlu0 %v1481, 35
    %v1487 = vpop.permute.xlu0 %1486
    %v1490 = vadd.f32 %v1434, %v1485
    %v1491 = vadd.f32 %v1435, %v1487
    %s1492 = sld [smem:[#allocation3 + $0x1a]]
    %v1493 = vstv %s1492
    %v1494 = vmul.f32 %v1493, %v1410
    %v1495 = vmul.f32 %v1493, %v1411
    %1498 = vrot.lane.b32.xlu0 %v1494, 34
    %v1499 = vpop.permute.xlu0 %1498
    %1500 = vrot.lane.b32.xlu0 %v1495, 34
    %v1501 = vpop.permute.xlu0 %1500
    %v1504 = vadd.f32 %v1448, %v1499
    %v1505 = vadd.f32 %v1449, %v1501
    %s1506 = sld [smem:[#allocation3 + $0x3e]]
    %v1507 = vstv %s1506
    %v1508 = vmul.f32 %v1507, %v1410
    %v1509 = vmul.f32 %v1507, %v1411
    %1512 = vrot.lane.b32.xlu0 %v1508, 34
    %v1513 = vpop.permute.xlu0 %1512
    %1514 = vrot.lane.b32.xlu0 %v1509, 34
    %v1515 = vpop.permute.xlu0 %1514
    %v1518 = vadd.f32 %v1462, %v1513
    %v1519 = vadd.f32 %v1463, %v1515
    %s1520 = sld [smem:[#allocation3 + $0x62]]
    %v1521 = vstv %s1520
    %v1522 = vmul.f32 %v1521, %v1410
    %v1523 = vmul.f32 %v1521, %v1411
    %1526 = vrot.lane.b32.xlu0 %v1522, 34
    %v1527 = vpop.permute.xlu0 %1526
    %1528 = vrot.lane.b32.xlu0 %v1523, 34
    %v1529 = vpop.permute.xlu0 %1528
    %v1532 = vadd.f32 %v1476, %v1527
    %v1533 = vadd.f32 %v1477, %v1529
    %s1534 = sld [smem:[#allocation3 + $0x86]]
    %v1535 = vstv %s1534
    %v1536 = vmul.f32 %v1535, %v1410
    %v1537 = vmul.f32 %v1535, %v1411
    %1540 = vrot.lane.b32.xlu0 %v1536, 34
    %v1541 = vpop.permute.xlu0 %1540
    %1542 = vrot.lane.b32.xlu0 %v1537, 34
    %v1543 = vpop.permute.xlu0 %1542
    %v1546 = vadd.f32 %v1490, %v1541
    %v1547 = vadd.f32 %v1491, %v1543
    %s1548 = scalar_lea.vmem [#allocation2], 72
    %v1549 = vld [vmem:[%s1548] sm:$0xff]
    %v1550 = vld [vmem:[%s1548 + $0x8] sm:$0xff]
    %1551 = vrot.lane.b32.xlu0 %v1549, 36
    %v1552 = vpop.permute.xlu0 %1551
    %v1553 = vsel %vm205, %v1552, %v1549
    %1554 = vrot.lane.b32.xlu0 %v1550, 36
    %v1555 = vpop.permute.xlu0 %1554
    %v1556 = vsel %vm205, %v1555, %v1550
    %1557 = vrot.lane.b32.xlu0 %v1553, 36
    %v1558 = vpop.permute.xlu0 %1557
    %1559 = vrot.lane.b32.xlu0 %v1556, 36
    %v1560 = vpop.permute.xlu0 %1559
    %v1561 = vsel %vm205, %v1558, %v1549
    %v1562 = vsel %vm205, %v1560, %v1550
    %s1563 = sld [smem:[#allocation3 + $0x1b]]
    %v1564 = vstv %s1563
    %v1565 = vmul.f32 %v1564, %v1561
    %v1566 = vmul.f32 %v1564, %v1562
    %v1567 = vadd.f32 %v1504, %v1565
    %v1568 = vadd.f32 %v1505, %v1566
    %s1569 = sld [smem:[#allocation3 + $0x3f]]
    %v1570 = vstv %s1569
    %v1571 = vmul.f32 %v1570, %v1561
    %v1572 = vmul.f32 %v1570, %v1562
    %v1573 = vadd.f32 %v1518, %v1571
    %v1574 = vadd.f32 %v1519, %v1572
    %s1575 = sld [smem:[#allocation3 + $0x63]]
    %v1576 = vstv %s1575
    %v1577 = vmul.f32 %v1576, %v1561
    %v1578 = vmul.f32 %v1576, %v1562
    %v1579 = vadd.f32 %v1532, %v1577
    %v1580 = vadd.f32 %v1533, %v1578
    %s1581 = sld [smem:[#allocation3 + $0x87]]
    %v1582 = vstv %s1581
    %v1583 = vmul.f32 %v1582, %v1561
    %v1584 = vmul.f32 %v1582, %v1562
    %v1585 = vadd.f32 %v1546, %v1583
    %v1586 = vadd.f32 %v1547, %v1584
    %s1587 = sld [smem:[#allocation3 + $0x1c]]
    %v1588 = vstv %s1587
    %v1589 = vmul.f32 %v1588, %v1549
    %v1590 = vmul.f32 %v1588, %v1550
    %1593 = vrot.lane.b32.xlu0 %v1589, 35
    %v1594 = vpop.permute.xlu0 %1593
    %1595 = vrot.lane.b32.xlu0 %v1590, 35
    %v1596 = vpop.permute.xlu0 %1595
    %v1599 = vadd.f32 %v1567, %v1594
    %v1600 = vadd.f32 %v1568, %v1596
    %s1601 = sld [smem:[#allocation3 + $0x40]]
    %v1602 = vstv %s1601
    %v1603 = vmul.f32 %v1602, %v1549
    %v1604 = vmul.f32 %v1602, %v1550
    %1607 = vrot.lane.b32.xlu0 %v1603, 35
    %v1608 = vpop.permute.xlu0 %1607
    %1609 = vrot.lane.b32.xlu0 %v1604, 35
    %v1610 = vpop.permute.xlu0 %1609
    %v1613 = vadd.f32 %v1573, %v1608
    %v1614 = vadd.f32 %v1574, %v1610
    %s1615 = sld [smem:[#allocation3 + $0x64]]
    %v1616 = vstv %s1615
    %v1617 = vmul.f32 %v1616, %v1549
    %v1618 = vmul.f32 %v1616, %v1550
    %1621 = vrot.lane.b32.xlu0 %v1617, 35
    %v1622 = vpop.permute.xlu0 %1621
    %1623 = vrot.lane.b32.xlu0 %v1618, 35
    %v1624 = vpop.permute.xlu0 %1623
    %v1627 = vadd.f32 %v1579, %v1622
    %v1628 = vadd.f32 %v1580, %v1624
    %s1629 = sld [smem:[#allocation3 + $0x88]]
    %v1630 = vstv %s1629
    %v1631 = vmul.f32 %v1630, %v1549
    %v1632 = vmul.f32 %v1630, %v1550
    %1635 = vrot.lane.b32.xlu0 %v1631, 35
    %v1636 = vpop.permute.xlu0 %1635
    %1637 = vrot.lane.b32.xlu0 %v1632, 35
    %v1638 = vpop.permute.xlu0 %1637
    %v1641 = vadd.f32 %v1585, %v1636
    %v1642 = vadd.f32 %v1586, %v1638
    %s1643 = sld [smem:[#allocation3 + $0x1d]]
    %v1644 = vstv %s1643
    %v1645 = vmul.f32 %v1644, %v1561
    %v1646 = vmul.f32 %v1644, %v1562
    %1649 = vrot.lane.b32.xlu0 %v1645, 34
    %v1650 = vpop.permute.xlu0 %1649
    %1651 = vrot.lane.b32.xlu0 %v1646, 34
    %v1652 = vpop.permute.xlu0 %1651
    %v1655 = vadd.f32 %v1599, %v1650
    %v1656 = vadd.f32 %v1600, %v1652
    %s1657 = sld [smem:[#allocation3 + $0x41]]
    %v1658 = vstv %s1657
    %v1659 = vmul.f32 %v1658, %v1561
    %v1660 = vmul.f32 %v1658, %v1562
    %1663 = vrot.lane.b32.xlu0 %v1659, 34
    %v1664 = vpop.permute.xlu0 %1663
    %1665 = vrot.lane.b32.xlu0 %v1660, 34
    %v1666 = vpop.permute.xlu0 %1665
    %v1669 = vadd.f32 %v1613, %v1664
    %v1670 = vadd.f32 %v1614, %v1666
    %s1671 = sld [smem:[#allocation3 + $0x65]]
    %v1672 = vstv %s1671
    %v1673 = vmul.f32 %v1672, %v1561
    %v1674 = vmul.f32 %v1672, %v1562
    %1677 = vrot.lane.b32.xlu0 %v1673, 34
    %v1678 = vpop.permute.xlu0 %1677
    %1679 = vrot.lane.b32.xlu0 %v1674, 34
    %v1680 = vpop.permute.xlu0 %1679
    %v1683 = vadd.f32 %v1627, %v1678
    %v1684 = vadd.f32 %v1628, %v1680
    %s1685 = sld [smem:[#allocation3 + $0x89]]
    %v1686 = vstv %s1685
    %v1687 = vmul.f32 %v1686, %v1561
    %v1688 = vmul.f32 %v1686, %v1562
    %1691 = vrot.lane.b32.xlu0 %v1687, 34
    %v1692 = vpop.permute.xlu0 %1691
    %1693 = vrot.lane.b32.xlu0 %v1688, 34
    %v1694 = vpop.permute.xlu0 %1693
    %v1697 = vadd.f32 %v1641, %v1692
    %v1698 = vadd.f32 %v1642, %v1694
    %v1699 = vld [vmem:[%s1548 + $0x1] sm:$0xff]
    %v1700 = vld [vmem:[%s1548 + $0x9] sm:$0xff]
    %1701 = vrot.lane.b32.xlu0 %v1699, 36
    %v1702 = vpop.permute.xlu0 %1701
    %v1703 = vsel %vm205, %v1702, %v1699
    %1704 = vrot.lane.b32.xlu0 %v1700, 36
    %v1705 = vpop.permute.xlu0 %1704
    %v1706 = vsel %vm205, %v1705, %v1700
    %1707 = vrot.lane.b32.xlu0 %v1703, 36
    %v1708 = vpop.permute.xlu0 %1707
    %1709 = vrot.lane.b32.xlu0 %v1706, 36
    %v1710 = vpop.permute.xlu0 %1709
    %v1711 = vsel %vm205, %v1708, %v1699
    %v1712 = vsel %vm205, %v1710, %v1700
    %s1713 = sld [smem:[#allocation3 + $0x1e]]
    %v1714 = vstv %s1713
    %v1715 = vmul.f32 %v1714, %v1711
    %v1716 = vmul.f32 %v1714, %v1712
    %v1717 = vadd.f32 %v1655, %v1715
    %v1718 = vadd.f32 %v1656, %v1716
    %s1719 = sld [smem:[#allocation3 + $0x42]]
    %v1720 = vstv %s1719
    %v1721 = vmul.f32 %v1720, %v1711
    %v1722 = vmul.f32 %v1720, %v1712
    %v1723 = vadd.f32 %v1669, %v1721
    %v1724 = vadd.f32 %v1670, %v1722
    %s1725 = sld [smem:[#allocation3 + $0x66]]
    %v1726 = vstv %s1725
    %v1727 = vmul.f32 %v1726, %v1711
    %v1728 = vmul.f32 %v1726, %v1712
    %v1729 = vadd.f32 %v1683, %v1727
    %v1730 = vadd.f32 %v1684, %v1728
    %s1731 = sld [smem:[#allocation3 + $0x8a]]
    %v1732 = vstv %s1731
    %v1733 = vmul.f32 %v1732, %v1711
    %v1734 = vmul.f32 %v1732, %v1712
    %v1735 = vadd.f32 %v1697, %v1733
    %v1736 = vadd.f32 %v1698, %v1734
    %s1737 = sld [smem:[#allocation3 + $0x1f]]
    %v1738 = vstv %s1737
    %v1739 = vmul.f32 %v1738, %v1699
    %v1740 = vmul.f32 %v1738, %v1700
    %1743 = vrot.lane.b32.xlu0 %v1739, 35
    %v1744 = vpop.permute.xlu0 %1743
    %1745 = vrot.lane.b32.xlu0 %v1740, 35
    %v1746 = vpop.permute.xlu0 %1745
    %v1749 = vadd.f32 %v1717, %v1744
    %v1750 = vadd.f32 %v1718, %v1746
    %s1751 = sld [smem:[#allocation3 + $0x43]]
    %v1752 = vstv %s1751
    %v1753 = vmul.f32 %v1752, %v1699
    %v1754 = vmul.f32 %v1752, %v1700
    %1757 = vrot.lane.b32.xlu0 %v1753, 35
    %v1758 = vpop.permute.xlu0 %1757
    %1759 = vrot.lane.b32.xlu0 %v1754, 35
    %v1760 = vpop.permute.xlu0 %1759
    %v1763 = vadd.f32 %v1723, %v1758
    %v1764 = vadd.f32 %v1724, %v1760
    %s1765 = sld [smem:[#allocation3 + $0x67]]
    %v1766 = vstv %s1765
    %v1767 = vmul.f32 %v1766, %v1699
    %v1768 = vmul.f32 %v1766, %v1700
    %1771 = vrot.lane.b32.xlu0 %v1767, 35
    %v1772 = vpop.permute.xlu0 %1771
    %1773 = vrot.lane.b32.xlu0 %v1768, 35
    %v1774 = vpop.permute.xlu0 %1773
    %v1777 = vadd.f32 %v1729, %v1772
    %v1778 = vadd.f32 %v1730, %v1774
    %s1779 = sld [smem:[#allocation3 + $0x8b]]
    %v1780 = vstv %s1779
    %v1781 = vmul.f32 %v1780, %v1699
    %v1782 = vmul.f32 %v1780, %v1700
    %1785 = vrot.lane.b32.xlu0 %v1781, 35
    %v1786 = vpop.permute.xlu0 %1785
    %1787 = vrot.lane.b32.xlu0 %v1782, 35
    %v1788 = vpop.permute.xlu0 %1787
    %v1791 = vadd.f32 %v1735, %v1786
    %v1792 = vadd.f32 %v1736, %v1788
    %s1793 = sld [smem:[#allocation3 + $0x20]]
    %v1794 = vstv %s1793
    %v1795 = vmul.f32 %v1794, %v1711
    %v1796 = vmul.f32 %v1794, %v1712
    %1799 = vrot.lane.b32.xlu0 %v1795, 34
    %v1800 = vpop.permute.xlu0 %1799
    %1801 = vrot.lane.b32.xlu0 %v1796, 34
    %v1802 = vpop.permute.xlu0 %1801
    %v1805 = vadd.f32 %v1749, %v1800
    %v1806 = vadd.f32 %v1750, %v1802
    %s1807 = sld [smem:[#allocation3 + $0x44]]
    %v1808 = vstv %s1807
    %v1809 = vmul.f32 %v1808, %v1711
    %v1810 = vmul.f32 %v1808, %v1712
    %1813 = vrot.lane.b32.xlu0 %v1809, 34
    %v1814 = vpop.permute.xlu0 %1813
    %1815 = vrot.lane.b32.xlu0 %v1810, 34
    %v1816 = vpop.permute.xlu0 %1815
    %v1819 = vadd.f32 %v1763, %v1814
    %v1820 = vadd.f32 %v1764, %v1816
    %s1821 = sld [smem:[#allocation3 + $0x68]]
    %v1822 = vstv %s1821
    %v1823 = vmul.f32 %v1822, %v1711
    %v1824 = vmul.f32 %v1822, %v1712
    %1827 = vrot.lane.b32.xlu0 %v1823, 34
    %v1828 = vpop.permute.xlu0 %1827
    %1829 = vrot.lane.b32.xlu0 %v1824, 34
    %v1830 = vpop.permute.xlu0 %1829
    %v1833 = vadd.f32 %v1777, %v1828
    %v1834 = vadd.f32 %v1778, %v1830
    %s1835 = sld [smem:[#allocation3 + $0x8c]]
    %v1836 = vstv %s1835
    %v1837 = vmul.f32 %v1836, %v1711
    %v1838 = vmul.f32 %v1836, %v1712
    %1841 = vrot.lane.b32.xlu0 %v1837, 34
    %v1842 = vpop.permute.xlu0 %1841
    %1843 = vrot.lane.b32.xlu0 %v1838, 34
    %v1844 = vpop.permute.xlu0 %1843
    %v1847 = vadd.f32 %v1791, %v1842
    %v1848 = vadd.f32 %v1792, %v1844
    %v1849 = vld [vmem:[%s1548 + $0x2] sm:$0xff]
    %v1850 = vld [vmem:[%s1548 + $0xa] sm:$0xff]
    %1851 = vrot.lane.b32.xlu0 %v1849, 36
    %v1852 = vpop.permute.xlu0 %1851
    %v1853 = vsel %vm205, %v1852, %v1849
    %1854 = vrot.lane.b32.xlu0 %v1850, 36
    %v1855 = vpop.permute.xlu0 %1854
    %v1856 = vsel %vm205, %v1855, %v1850
    %1857 = vrot.lane.b32.xlu0 %v1853, 36
    %v1858 = vpop.permute.xlu0 %1857
    %1859 = vrot.lane.b32.xlu0 %v1856, 36
    %v1860 = vpop.permute.xlu0 %1859
    %v1861 = vsel %vm205, %v1858, %v1849
    %v1862 = vsel %vm205, %v1860, %v1850
    %s1863 = sld [smem:[#allocation3 + $0x21]]
    %v1864 = vstv %s1863
    %v1865 = vmul.f32 %v1864, %v1861
    %v1866 = vmul.f32 %v1864, %v1862
    %v1867 = vadd.f32 %v1805, %v1865
    %v1868 = vadd.f32 %v1806, %v1866
    %s1869 = sld [smem:[#allocation3 + $0x45]]
    %v1870 = vstv %s1869
    %v1871 = vmul.f32 %v1870, %v1861
    %v1872 = vmul.f32 %v1870, %v1862
    %v1873 = vadd.f32 %v1819, %v1871
    %v1874 = vadd.f32 %v1820, %v1872
    %s1875 = sld [smem:[#allocation3 + $0x69]]
    %v1876 = vstv %s1875
    %v1877 = vmul.f32 %v1876, %v1861
    %v1878 = vmul.f32 %v1876, %v1862
    %v1879 = vadd.f32 %v1833, %v1877
    %v1880 = vadd.f32 %v1834, %v1878
    %s1881 = sld [smem:[#allocation3 + $0x8d]]
    %v1882 = vstv %s1881
    %v1883 = vmul.f32 %v1882, %v1861
    %v1884 = vmul.f32 %v1882, %v1862
    %v1885 = vadd.f32 %v1847, %v1883
    %v1886 = vadd.f32 %v1848, %v1884
    %s1887 = sld [smem:[#allocation3 + $0x22]]
    %v1888 = vstv %s1887
    %v1889 = vmul.f32 %v1888, %v1849
    %v1890 = vmul.f32 %v1888, %v1850
    %1893 = vrot.lane.b32.xlu0 %v1889, 35
    %v1894 = vpop.permute.xlu0 %1893
    %1895 = vrot.lane.b32.xlu0 %v1890, 35
    %v1896 = vpop.permute.xlu0 %1895
    %v1899 = vadd.f32 %v1867, %v1894
    %v1900 = vadd.f32 %v1868, %v1896
    %s1901 = sld [smem:[#allocation3 + $0x46]]
    %v1902 = vstv %s1901
    %v1903 = vmul.f32 %v1902, %v1849
    %v1904 = vmul.f32 %v1902, %v1850
    %1907 = vrot.lane.b32.xlu0 %v1903, 35
    %v1908 = vpop.permute.xlu0 %1907
    %1909 = vrot.lane.b32.xlu0 %v1904, 35
    %v1910 = vpop.permute.xlu0 %1909
    %v1913 = vadd.f32 %v1873, %v1908
    %v1914 = vadd.f32 %v1874, %v1910
    %s1915 = sld [smem:[#allocation3 + $0x6a]]
    %v1916 = vstv %s1915
    %v1917 = vmul.f32 %v1916, %v1849
    %v1918 = vmul.f32 %v1916, %v1850
    %1921 = vrot.lane.b32.xlu0 %v1917, 35
    %v1922 = vpop.permute.xlu0 %1921
    %1923 = vrot.lane.b32.xlu0 %v1918, 35
    %v1924 = vpop.permute.xlu0 %1923
    %v1927 = vadd.f32 %v1879, %v1922
    %v1928 = vadd.f32 %v1880, %v1924
    %s1929 = sld [smem:[#allocation3 + $0x8e]]
    %v1930 = vstv %s1929
    %v1931 = vmul.f32 %v1930, %v1849
    %v1932 = vmul.f32 %v1930, %v1850
    %1935 = vrot.lane.b32.xlu0 %v1931, 35
    %v1936 = vpop.permute.xlu0 %1935
    %1937 = vrot.lane.b32.xlu0 %v1932, 35
    %v1938 = vpop.permute.xlu0 %1937
    %v1941 = vadd.f32 %v1885, %v1936
    %v1942 = vadd.f32 %v1886, %v1938
    %s1943 = sld [smem:[#allocation3 + $0x23]]
    %v1944 = vstv %s1943
    %v1945 = vmul.f32 %v1944, %v1861
    %v1946 = vmul.f32 %v1944, %v1862
    %1949 = vrot.lane.b32.xlu0 %v1945, 34
    %v1950 = vpop.permute.xlu0 %1949
    %1951 = vrot.lane.b32.xlu0 %v1946, 34
    %v1952 = vpop.permute.xlu0 %1951
    %v1955 = vadd.f32 %v1899, %v1950
    %v1956 = vadd.f32 %v1900, %v1952
    %s1957 = sld [smem:[#allocation3 + $0x47]]
    %v1958 = vstv %s1957
    %v1959 = vmul.f32 %v1958, %v1861
    %v1960 = vmul.f32 %v1958, %v1862
    %1963 = vrot.lane.b32.xlu0 %v1959, 34
    %v1964 = vpop.permute.xlu0 %1963
    %1965 = vrot.lane.b32.xlu0 %v1960, 34
    %v1966 = vpop.permute.xlu0 %1965
    %v1969 = vadd.f32 %v1913, %v1964
    %v1970 = vadd.f32 %v1914, %v1966
    %s1971 = sld [smem:[#allocation3 + $0x6b]]
    %v1972 = vstv %s1971
    %v1973 = vmul.f32 %v1972, %v1861
    %v1974 = vmul.f32 %v1972, %v1862
    %1977 = vrot.lane.b32.xlu0 %v1973, 34
    %v1978 = vpop.permute.xlu0 %1977
    %1979 = vrot.lane.b32.xlu0 %v1974, 34
    %v1980 = vpop.permute.xlu0 %1979
    %v1983 = vadd.f32 %v1927, %v1978
    %v1984 = vadd.f32 %v1928, %v1980
    %s1985 = sld [smem:[#allocation3 + $0x8f]]
    %v1986 = vstv %s1985
    %v1987 = vmul.f32 %v1986, %v1861
    %v1988 = vmul.f32 %v1986, %v1862
    %1991 = vrot.lane.b32.xlu0 %v1987, 34
    %v1992 = vpop.permute.xlu0 %1991
    %1993 = vrot.lane.b32.xlu0 %v1988, 34
    %v1994 = vpop.permute.xlu0 %1993
    %v1997 = vadd.f32 %v1941, %v1992
    %v1998 = vadd.f32 %v1942, %v1994
    %s1999 = sld [smem:[#allocation5]]
    %v2000 = vstv %s1999
    %v2001 = vadd.f32 %v1955, %v2000
    %v2002 = vadd.f32 %v1956, %v2000
    %v2003 = vmax.f32 %v2001, 0.0
    %v2004 = vmax.f32 %v2002, 0.0
    %s2005 = sld [smem:[#allocation5 + $0x1]]
    %v2006 = vstv %s2005
    %v2007 = vadd.f32 %v1969, %v2006
    %v2008 = vadd.f32 %v1970, %v2006
    %v2009 = vmax.f32 %v2007, 0.0
    %v2010 = vmax.f32 %v2008, 0.0
    %s2011 = sld [smem:[#allocation5 + $0x2]]
    %v2012 = vstv %s2011
    %v2013 = vadd.f32 %v1983, %v2012
    %v2014 = vadd.f32 %v1984, %v2012
    %v2015 = vmax.f32 %v2013, 0.0
    %v2016 = vmax.f32 %v2014, 0.0
    %s2017 = sld [smem:[#allocation5 + $0x3]]
    %v2018 = vstv %s2017
    %v2019 = vadd.f32 %v1997, %v2018
    %v2020 = vadd.f32 %v1998, %v2018
    %v2021 = vmax.f32 %v2019, 0.0
    %v2022 = vmax.f32 %v2020, 0.0
    %2025 = vrot.lane.b32.xlu0 %v2003, 93
    %v2026 = vpop.permute.xlu0 %2025
    %2027 = vrot.lane.b32.xlu0 %v2004, 93
    %v2028 = vpop.permute.xlu0 %2027
    %vm2031 = vcmask 293888
    %2032 = vst.msk [vmem:[#allocation2 + $0x1] sm:$0xff] %vm2031, %v2026
    %2033 = vst.msk [vmem:[#allocation2 + $0x9] sm:$0xff] %vm2031, %v2028
    %2036 = vrot.lane.b32.xlu0 %v2009, 93
    %v2037 = vpop.permute.xlu0 %2036
    %2038 = vrot.lane.b32.xlu0 %v2010, 93
    %v2039 = vpop.permute.xlu0 %2038
    %2042 = vst.msk [vmem:[%s646 + $0x1] sm:$0xff] %vm2031, %v2037
    %2043 = vst.msk [vmem:[%s646 + $0x9] sm:$0xff] %vm2031, %v2039
    %2046 = vrot.lane.b32.xlu0 %v2015, 93
    %v2047 = vpop.permute.xlu0 %2046
    %2048 = vrot.lane.b32.xlu0 %v2016, 93
    %v2049 = vpop.permute.xlu0 %2048
    %2052 = vst.msk [vmem:[%s1097 + $0x1] sm:$0xff] %vm2031, %v2047
    %2053 = vst.msk [vmem:[%s1097 + $0x9] sm:$0xff] %vm2031, %v2049
    %2056 = vrot.lane.b32.xlu0 %v2021, 93
    %v2057 = vpop.permute.xlu0 %2056
    %2058 = vrot.lane.b32.xlu0 %v2022, 93
    %v2059 = vpop.permute.xlu0 %2058
    %2062 = vst.msk [vmem:[%s1548 + $0x1] sm:$0xff] %vm2031, %v2057
    %2063 = vst.msk [vmem:[%s1548 + $0x9] sm:$0xff] %vm2031, %v2059
    %2064 = vst.msk [vmem:[#allocation2 + $0x1] sm:$0xff] %vm48, 0.0
    %2065 = vst.msk [vmem:[#allocation2 + $0x9] sm:$0xff] %vm48, 0.0
    %2066 = vst.msk [vmem:[#allocation2 + $0x19] sm:$0xff] %vm48, 0.0
    %2067 = vst.msk [vmem:[#allocation2 + $0x21] sm:$0xff] %vm48, 0.0
    %2068 = vst.msk [vmem:[#allocation2 + $0x31] sm:$0xff] %vm48, 0.0
    %2069 = vst.msk [vmem:[#allocation2 + $0x39] sm:$0xff] %vm48, 0.0
    %2070 = vst.msk [vmem:[#allocation2 + $0x49] sm:$0xff] %vm48, 0.0
    %2071 = vst.msk [vmem:[#allocation2 + $0x51] sm:$0xff] %vm48, 0.0
    %2072 = vst.msk [vmem:[#allocation2 + $0x1] sm:$0xff] %vm62, 0.0
    %2073 = vst.msk [vmem:[#allocation2 + $0x9] sm:$0xff] %vm62, 0.0
    %2074 = vst.msk [vmem:[#allocation2 + $0x19] sm:$0xff] %vm62, 0.0
    %2075 = vst.msk [vmem:[#allocation2 + $0x21] sm:$0xff] %vm62, 0.0
    %2076 = vst.msk [vmem:[#allocation2 + $0x31] sm:$0xff] %vm62, 0.0
    %2077 = vst.msk [vmem:[#allocation2 + $0x39] sm:$0xff] %vm62, 0.0
    %2078 = vst.msk [vmem:[#allocation2 + $0x49] sm:$0xff] %vm62, 0.0
    %2079 = vst.msk [vmem:[#allocation2 + $0x51] sm:$0xff] %vm62, 0.0
    %2080 = vst.msk [vmem:[#allocation2 + $0x1] sm:$0xff] %vm125, 0.0
    %2081 = vst.msk [vmem:[#allocation2 + $0x9] sm:$0xff] %vm125, 0.0
    %2082 = vst.msk [vmem:[#allocation2 + $0x19] sm:$0xff] %vm125, 0.0
    %2083 = vst.msk [vmem:[#allocation2 + $0x21] sm:$0xff] %vm125, 0.0
    %2084 = vst.msk [vmem:[#allocation2 + $0x31] sm:$0xff] %vm125, 0.0
    %2085 = vst.msk [vmem:[#allocation2 + $0x39] sm:$0xff] %vm125, 0.0
    %2086 = vst.msk [vmem:[#allocation2 + $0x49] sm:$0xff] %vm125, 0.0
    %2087 = vst.msk [vmem:[#allocation2 + $0x51] sm:$0xff] %vm125, 0.0
    %2088 = vst.msk [vmem:[#allocation2 + $0x1] sm:$0xff] %vm139, 0.0
    %2089 = vst.msk [vmem:[#allocation2 + $0x9] sm:$0xff] %vm139, 0.0
    %2090 = vst.msk [vmem:[#allocation2 + $0x19] sm:$0xff] %vm139, 0.0
    %2091 = vst.msk [vmem:[#allocation2 + $0x21] sm:$0xff] %vm139, 0.0
    %2092 = vst.msk [vmem:[#allocation2 + $0x31] sm:$0xff] %vm139, 0.0
    %2093 = vst.msk [vmem:[#allocation2 + $0x39] sm:$0xff] %vm139, 0.0
    %2094 = vst.msk [vmem:[#allocation2 + $0x49] sm:$0xff] %vm139, 0.0
    %2095 = vst.msk [vmem:[#allocation2 + $0x51] sm:$0xff] %vm139, 0.0
    %v2096 = vld [vmem:[#allocation2] sm:$0xff]
    %v2097 = vld [vmem:[#allocation2 + $0x8] sm:$0xff]
    %2098 = vrot.lane.b32.xlu0 %v2096, 36
    %v2099 = vpop.permute.xlu0 %2098
    %v2100 = vsel %vm205, %v2099, %v2096
    %2101 = vrot.lane.b32.xlu0 %v2097, 36
    %v2102 = vpop.permute.xlu0 %2101
    %v2103 = vsel %vm205, %v2102, %v2097
    %2104 = vrot.lane.b32.xlu0 %v2100, 36
    %v2105 = vpop.permute.xlu0 %2104
    %2106 = vrot.lane.b32.xlu0 %v2103, 36
    %v2107 = vpop.permute.xlu0 %2106
    %v2108 = vsel %vm205, %v2105, %v2096
    %v2109 = vsel %vm205, %v2107, %v2097
    %s2110 = sld [smem:[#allocation3 + $0x90]]
    %v2111 = vstv %s2110
    %v2112 = vmul.f32 %v2111, %v2108
    %v2113 = vmul.f32 %v2111, %v2109
    %s2114 = sld [smem:[#allocation3 + $0xb4]]
    %v2115 = vstv %s2114
    %v2116 = vmul.f32 %v2115, %v2108
    %v2117 = vmul.f32 %v2115, %v2109
    %s2118 = sld [smem:[#allocation3 + $0xd8]]
    %v2119 = vstv %s2118
    %v2120 = vmul.f32 %v2119, %v2108
    %v2121 = vmul.f32 %v2119, %v2109
    %s2122 = sld [smem:[#allocation3 + $0xfc]]
    %v2123 = vstv %s2122
    %v2124 = vmul.f32 %v2123, %v2108
    %v2125 = vmul.f32 %v2123, %v2109
    %s2126 = sld [smem:[#allocation3 + $0x91]]
    %v2127 = vstv %s2126
    %v2128 = vmul.f32 %v2127, %v2096
    %v2129 = vmul.f32 %v2127, %v2097
    %2132 = vrot.lane.b32.xlu0 %v2128, 35
    %v2133 = vpop.permute.xlu0 %2132
    %2134 = vrot.lane.b32.xlu0 %v2129, 35
    %v2135 = vpop.permute.xlu0 %2134
    %v2138 = vadd.f32 %v2112, %v2133
    %v2139 = vadd.f32 %v2113, %v2135
    %s2140 = sld [smem:[#allocation3 + $0xb5]]
    %v2141 = vstv %s2140
    %v2142 = vmul.f32 %v2141, %v2096
    %v2143 = vmul.f32 %v2141, %v2097
    %2146 = vrot.lane.b32.xlu0 %v2142, 35
    %v2147 = vpop.permute.xlu0 %2146
    %2148 = vrot.lane.b32.xlu0 %v2143, 35
    %v2149 = vpop.permute.xlu0 %2148
    %v2152 = vadd.f32 %v2116, %v2147
    %v2153 = vadd.f32 %v2117, %v2149
    %s2154 = sld [smem:[#allocation3 + $0xd9]]
    %v2155 = vstv %s2154
    %v2156 = vmul.f32 %v2155, %v2096
    %v2157 = vmul.f32 %v2155, %v2097
    %2160 = vrot.lane.b32.xlu0 %v2156, 35
    %v2161 = vpop.permute.xlu0 %2160
    %2162 = vrot.lane.b32.xlu0 %v2157, 35
    %v2163 = vpop.permute.xlu0 %2162
    %v2166 = vadd.f32 %v2120, %v2161
    %v2167 = vadd.f32 %v2121, %v2163
    %s2168 = sld [smem:[#allocation3 + $0xfd]]
    %v2169 = vstv %s2168
    %v2170 = vmul.f32 %v2169, %v2096
    %v2171 = vmul.f32 %v2169, %v2097
    %2174 = vrot.lane.b32.xlu0 %v2170, 35
    %v2175 = vpop.permute.xlu0 %2174
    %2176 = vrot.lane.b32.xlu0 %v2171, 35
    %v2177 = vpop.permute.xlu0 %2176
    %v2180 = vadd.f32 %v2124, %v2175
    %v2181 = vadd.f32 %v2125, %v2177
    %s2182 = sld [smem:[#allocation3 + $0x92]]
    %v2183 = vstv %s2182
    %v2184 = vmul.f32 %v2183, %v2108
    %v2185 = vmul.f32 %v2183, %v2109
    %2188 = vrot.lane.b32.xlu0 %v2184, 34
    %v2189 = vpop.permute.xlu0 %2188
    %2190 = vrot.lane.b32.xlu0 %v2185, 34
    %v2191 = vpop.permute.xlu0 %2190
    %v2194 = vadd.f32 %v2138, %v2189
    %v2195 = vadd.f32 %v2139, %v2191
    %s2196 = sld [smem:[#allocation3 + $0xb6]]
    %v2197 = vstv %s2196
    %v2198 = vmul.f32 %v2197, %v2108
    %v2199 = vmul.f32 %v2197, %v2109
    %2202 = vrot.lane.b32.xlu0 %v2198, 34
    %v2203 = vpop.permute.xlu0 %2202
    %2204 = vrot.lane.b32.xlu0 %v2199, 34
    %v2205 = vpop.permute.xlu0 %2204
    %v2208 = vadd.f32 %v2152, %v2203
    %v2209 = vadd.f32 %v2153, %v2205
    %s2210 = sld [smem:[#allocation3 + $0xda]]
    %v2211 = vstv %s2210
    %v2212 = vmul.f32 %v2211, %v2108
    %v2213 = vmul.f32 %v2211, %v2109
    %2216 = vrot.lane.b32.xlu0 %v2212, 34
    %v2217 = vpop.permute.xlu0 %2216
    %2218 = vrot.lane.b32.xlu0 %v2213, 34
    %v2219 = vpop.permute.xlu0 %2218
    %v2222 = vadd.f32 %v2166, %v2217
    %v2223 = vadd.f32 %v2167, %v2219
    %s2224 = sld [smem:[#allocation3 + $0xfe]]
    %v2225 = vstv %s2224
    %v2226 = vmul.f32 %v2225, %v2108
    %v2227 = vmul.f32 %v2225, %v2109
    %2230 = vrot.lane.b32.xlu0 %v2226, 34
    %v2231 = vpop.permute.xlu0 %2230
    %2232 = vrot.lane.b32.xlu0 %v2227, 34
    %v2233 = vpop.permute.xlu0 %2232
    %v2236 = vadd.f32 %v2180, %v2231
    %v2237 = vadd.f32 %v2181, %v2233
    %v2238 = vld [vmem:[#allocation2 + $0x1] sm:$0xff]
    %v2239 = vld [vmem:[#allocation2 + $0x9] sm:$0xff]
    %2240 = vrot.lane.b32.xlu0 %v2238, 36
    %v2241 = vpop.permute.xlu0 %2240
    %v2242 = vsel %vm205, %v2241, %v2238
    %2243 = vrot.lane.b32.xlu0 %v2239, 36
    %v2244 = vpop.permute.xlu0 %2243
    %v2245 = vsel %vm205, %v2244, %v2239
    %2246 = vrot.lane.b32.xlu0 %v2242, 36
    %v2247 = vpop.permute.xlu0 %2246
    %2248 = vrot.lane.b32.xlu0 %v2245, 36
    %v2249 = vpop.permute.xlu0 %2248
    %v2250 = vsel %vm205, %v2247, %v2238
    %v2251 = vsel %vm205, %v2249, %v2239
    %s2252 = sld [smem:[#allocation3 + $0x93]]
    %v2253 = vstv %s2252
    %v2254 = vmul.f32 %v2253, %v2250
    %v2255 = vmul.f32 %v2253, %v2251
    %v2256 = vadd.f32 %v2194, %v2254
    %v2257 = vadd.f32 %v2195, %v2255
    %s2258 = sld [smem:[#allocation3 + $0xb7]]
    %v2259 = vstv %s2258
    %v2260 = vmul.f32 %v2259, %v2250
    %v2261 = vmul.f32 %v2259, %v2251
    %v2262 = vadd.f32 %v2208, %v2260
    %v2263 = vadd.f32 %v2209, %v2261
    %s2264 = sld [smem:[#allocation3 + $0xdb]]
    %v2265 = vstv %s2264
    %v2266 = vmul.f32 %v2265, %v2250
    %v2267 = vmul.f32 %v2265, %v2251
    %v2268 = vadd.f32 %v2222, %v2266
    %v2269 = vadd.f32 %v2223, %v2267
    %s2270 = sld [smem:[#allocation3 + $0xff]]
    %v2271 = vstv %s2270
    %v2272 = vmul.f32 %v2271, %v2250
    %v2273 = vmul.f32 %v2271, %v2251
    %v2274 = vadd.f32 %v2236, %v2272
    %v2275 = vadd.f32 %v2237, %v2273
    %s2276 = sld [smem:[#allocation3 + $0x94]]
    %v2277 = vstv %s2276
    %v2278 = vmul.f32 %v2277, %v2238
    %v2279 = vmul.f32 %v2277, %v2239
    %2282 = vrot.lane.b32.xlu0 %v2278, 35
    %v2283 = vpop.permute.xlu0 %2282
    %2284 = vrot.lane.b32.xlu0 %v2279, 35
    %v2285 = vpop.permute.xlu0 %2284
    %v2288 = vadd.f32 %v2256, %v2283
    %v2289 = vadd.f32 %v2257, %v2285
    %s2290 = sld [smem:[#allocation3 + $0xb8]]
    %v2291 = vstv %s2290
    %v2292 = vmul.f32 %v2291, %v2238
    %v2293 = vmul.f32 %v2291, %v2239
    %2296 = vrot.lane.b32.xlu0 %v2292, 35
    %v2297 = vpop.permute.xlu0 %2296
    %2298 = vrot.lane.b32.xlu0 %v2293, 35
    %v2299 = vpop.permute.xlu0 %2298
    %v2302 = vadd.f32 %v2262, %v2297
    %v2303 = vadd.f32 %v2263, %v2299
    %s2304 = sld [smem:[#allocation3 + $0xdc]]
    %v2305 = vstv %s2304
    %v2306 = vmul.f32 %v2305, %v2238
    %v2307 = vmul.f32 %v2305, %v2239
    %2310 = vrot.lane.b32.xlu0 %v2306, 35
    %v2311 = vpop.permute.xlu0 %2310
    %2312 = vrot.lane.b32.xlu0 %v2307, 35
    %v2313 = vpop.permute.xlu0 %2312
    %v2316 = vadd.f32 %v2268, %v2311
    %v2317 = vadd.f32 %v2269, %v2313
    %s2318 = sld [smem:[#allocation3 + $0x100]]
    %v2319 = vstv %s2318
    %v2320 = vmul.f32 %v2319, %v2238
    %v2321 = vmul.f32 %v2319, %v2239
    %2324 = vrot.lane.b32.xlu0 %v2320, 35
    %v2325 = vpop.permute.xlu0 %2324
    %2326 = vrot.lane.b32.xlu0 %v2321, 35
    %v2327 = vpop.permute.xlu0 %2326
    %v2330 = vadd.f32 %v2274, %v2325
    %v2331 = vadd.f32 %v2275, %v2327
    %s2332 = sld [smem:[#allocation3 + $0x95]]
    %v2333 = vstv %s2332
    %v2334 = vmul.f32 %v2333, %v2250
    %v2335 = vmul.f32 %v2333, %v2251
    %2338 = vrot.lane.b32.xlu0 %v2334, 34
    %v2339 = vpop.permute.xlu0 %2338
    %2340 = vrot.lane.b32.xlu0 %v2335, 34
    %v2341 = vpop.permute.xlu0 %2340
    %v2344 = vadd.f32 %v2288, %v2339
    %v2345 = vadd.f32 %v2289, %v2341
    %s2346 = sld [smem:[#allocation3 + $0xb9]]
    %v2347 = vstv %s2346
    %v2348 = vmul.f32 %v2347, %v2250
    %v2349 = vmul.f32 %v2347, %v2251
    %2352 = vrot.lane.b32.xlu0 %v2348, 34
    %v2353 = vpop.permute.xlu0 %2352
    %2354 = vrot.lane.b32.xlu0 %v2349, 34
    %v2355 = vpop.permute.xlu0 %2354
    %v2358 = vadd.f32 %v2302, %v2353
    %v2359 = vadd.f32 %v2303, %v2355
    %s2360 = sld [smem:[#allocation3 + $0xdd]]
    %v2361 = vstv %s2360
    %v2362 = vmul.f32 %v2361, %v2250
    %v2363 = vmul.f32 %v2361, %v2251
    %2366 = vrot.lane.b32.xlu0 %v2362, 34
    %v2367 = vpop.permute.xlu0 %2366
    %2368 = vrot.lane.b32.xlu0 %v2363, 34
    %v2369 = vpop.permute.xlu0 %2368
    %v2372 = vadd.f32 %v2316, %v2367
    %v2373 = vadd.f32 %v2317, %v2369
    %s2374 = sld [smem:[#allocation3 + $0x101]]
    %v2375 = vstv %s2374
    %v2376 = vmul.f32 %v2375, %v2250
    %v2377 = vmul.f32 %v2375, %v2251
    %2380 = vrot.lane.b32.xlu0 %v2376, 34
    %v2381 = vpop.permute.xlu0 %2380
    %2382 = vrot.lane.b32.xlu0 %v2377, 34
    %v2383 = vpop.permute.xlu0 %2382
    %v2386 = vadd.f32 %v2330, %v2381
    %v2387 = vadd.f32 %v2331, %v2383
    %v2388 = vld [vmem:[#allocation2 + $0x2] sm:$0xff]
    %v2389 = vld [vmem:[#allocation2 + $0xa] sm:$0xff]
    %2390 = vrot.lane.b32.xlu0 %v2388, 36
    %v2391 = vpop.permute.xlu0 %2390
    %v2392 = vsel %vm205, %v2391, %v2388
    %2393 = vrot.lane.b32.xlu0 %v2389, 36
    %v2394 = vpop.permute.xlu0 %2393
    %v2395 = vsel %vm205, %v2394, %v2389
    %2396 = vrot.lane.b32.xlu0 %v2392, 36
    %v2397 = vpop.permute.xlu0 %2396
    %2398 = vrot.lane.b32.xlu0 %v2395, 36
    %v2399 = vpop.permute.xlu0 %2398
    %v2400 = vsel %vm205, %v2397, %v2388
    %v2401 = vsel %vm205, %v2399, %v2389
    %s2402 = sld [smem:[#allocation3 + $0x96]]
    %v2403 = vstv %s2402
    %v2404 = vmul.f32 %v2403, %v2400
    %v2405 = vmul.f32 %v2403, %v2401
    %v2406 = vadd.f32 %v2344, %v2404
    %v2407 = vadd.f32 %v2345, %v2405
    %s2408 = sld [smem:[#allocation3 + $0xba]]
    %v2409 = vstv %s2408
    %v2410 = vmul.f32 %v2409, %v2400
    %v2411 = vmul.f32 %v2409, %v2401
    %v2412 = vadd.f32 %v2358, %v2410
    %v2413 = vadd.f32 %v2359, %v2411
    %s2414 = sld [smem:[#allocation3 + $0xde]]
    %v2415 = vstv %s2414
    %v2416 = vmul.f32 %v2415, %v2400
    %v2417 = vmul.f32 %v2415, %v2401
    %v2418 = vadd.f32 %v2372, %v2416
    %v2419 = vadd.f32 %v2373, %v2417
    %s2420 = sld [smem:[#allocation3 + $0x102]]
    %v2421 = vstv %s2420
    %v2422 = vmul.f32 %v2421, %v2400
    %v2423 = vmul.f32 %v2421, %v2401
    %v2424 = vadd.f32 %v2386, %v2422
    %v2425 = vadd.f32 %v2387, %v2423
    %s2426 = sld [smem:[#allocation3 + $0x97]]
    %v2427 = vstv %s2426
    %v2428 = vmul.f32 %v2427, %v2388
    %v2429 = vmul.f32 %v2427, %v2389
    %2432 = vrot.lane.b32.xlu0 %v2428, 35
    %v2433 = vpop.permute.xlu0 %2432
    %2434 = vrot.lane.b32.xlu0 %v2429, 35
    %v2435 = vpop.permute.xlu0 %2434
    %v2438 = vadd.f32 %v2406, %v2433
    %v2439 = vadd.f32 %v2407, %v2435
    %s2440 = sld [smem:[#allocation3 + $0xbb]]
    %v2441 = vstv %s2440
    %v2442 = vmul.f32 %v2441, %v2388
    %v2443 = vmul.f32 %v2441, %v2389
    %2446 = vrot.lane.b32.xlu0 %v2442, 35
    %v2447 = vpop.permute.xlu0 %2446
    %2448 = vrot.lane.b32.xlu0 %v2443, 35
    %v2449 = vpop.permute.xlu0 %2448
    %v2452 = vadd.f32 %v2412, %v2447
    %v2453 = vadd.f32 %v2413, %v2449
    %s2454 = sld [smem:[#allocation3 + $0xdf]]
    %v2455 = vstv %s2454
    %v2456 = vmul.f32 %v2455, %v2388
    %v2457 = vmul.f32 %v2455, %v2389
    %2460 = vrot.lane.b32.xlu0 %v2456, 35
    %v2461 = vpop.permute.xlu0 %2460
    %2462 = vrot.lane.b32.xlu0 %v2457, 35
    %v2463 = vpop.permute.xlu0 %2462
    %v2466 = vadd.f32 %v2418, %v2461
    %v2467 = vadd.f32 %v2419, %v2463
    %s2468 = sld [smem:[#allocation3 + $0x103]]
    %v2469 = vstv %s2468
    %v2470 = vmul.f32 %v2469, %v2388
    %v2471 = vmul.f32 %v2469, %v2389
    %2474 = vrot.lane.b32.xlu0 %v2470, 35
    %v2475 = vpop.permute.xlu0 %2474
    %2476 = vrot.lane.b32.xlu0 %v2471, 35
    %v2477 = vpop.permute.xlu0 %2476
    %v2480 = vadd.f32 %v2424, %v2475
    %v2481 = vadd.f32 %v2425, %v2477
    %s2482 = sld [smem:[#allocation3 + $0x98]]
    %v2483 = vstv %s2482
    %v2484 = vmul.f32 %v2483, %v2400
    %v2485 = vmul.f32 %v2483, %v2401
    %2488 = vrot.lane.b32.xlu0 %v2484, 34
    %v2489 = vpop.permute.xlu0 %2488
    %2490 = vrot.lane.b32.xlu0 %v2485, 34
    %v2491 = vpop.permute.xlu0 %2490
    %v2494 = vadd.f32 %v2438, %v2489
    %v2495 = vadd.f32 %v2439, %v2491
    %s2496 = sld [smem:[#allocation3 + $0xbc]]
    %v2497 = vstv %s2496
    %v2498 = vmul.f32 %v2497, %v2400
    %v2499 = vmul.f32 %v2497, %v2401
    %2502 = vrot.lane.b32.xlu0 %v2498, 34
    %v2503 = vpop.permute.xlu0 %2502
    %2504 = vrot.lane.b32.xlu0 %v2499, 34
    %v2505 = vpop.permute.xlu0 %2504
    %v2508 = vadd.f32 %v2452, %v2503
    %v2509 = vadd.f32 %v2453, %v2505
    %s2510 = sld [smem:[#allocation3 + $0xe0]]
    %v2511 = vstv %s2510
    %v2512 = vmul.f32 %v2511, %v2400
    %v2513 = vmul.f32 %v2511, %v2401
    %2516 = vrot.lane.b32.xlu0 %v2512, 34
    %v2517 = vpop.permute.xlu0 %2516
    %2518 = vrot.lane.b32.xlu0 %v2513, 34
    %v2519 = vpop.permute.xlu0 %2518
    %v2522 = vadd.f32 %v2466, %v2517
    %v2523 = vadd.f32 %v2467, %v2519
    %s2524 = sld [smem:[#allocation3 + $0x104]]
    %v2525 = vstv %s2524
    %v2526 = vmul.f32 %v2525, %v2400
    %v2527 = vmul.f32 %v2525, %v2401
    %2530 = vrot.lane.b32.xlu0 %v2526, 34
    %v2531 = vpop.permute.xlu0 %2530
    %2532 = vrot.lane.b32.xlu0 %v2527, 34
    %v2533 = vpop.permute.xlu0 %2532
    %v2536 = vadd.f32 %v2480, %v2531
    %v2537 = vadd.f32 %v2481, %v2533
    %v2538 = vld [vmem:[%s646] sm:$0xff]
    %v2539 = vld [vmem:[%s646 + $0x8] sm:$0xff]
    %2540 = vrot.lane.b32.xlu0 %v2538, 36
    %v2541 = vpop.permute.xlu0 %2540
    %v2542 = vsel %vm205, %v2541, %v2538
    %2543 = vrot.lane.b32.xlu0 %v2539, 36
    %v2544 = vpop.permute.xlu0 %2543
    %v2545 = vsel %vm205, %v2544, %v2539
    %2546 = vrot.lane.b32.xlu0 %v2542, 36
    %v2547 = vpop.permute.xlu0 %2546
    %2548 = vrot.lane.b32.xlu0 %v2545, 36
    %v2549 = vpop.permute.xlu0 %2548
    %v2550 = vsel %vm205, %v2547, %v2538
    %v2551 = vsel %vm205, %v2549, %v2539
    %s2552 = sld [smem:[#allocation3 + $0x99]]
    %v2553 = vstv %s2552
    %v2554 = vmul.f32 %v2553, %v2550
    %v2555 = vmul.f32 %v2553, %v2551
    %v2556 = vadd.f32 %v2494, %v2554
    %v2557 = vadd.f32 %v2495, %v2555
    %s2558 = sld [smem:[#allocation3 + $0xbd]]
    %v2559 = vstv %s2558
    %v2560 = vmul.f32 %v2559, %v2550
    %v2561 = vmul.f32 %v2559, %v2551
    %v2562 = vadd.f32 %v2508, %v2560
    %v2563 = vadd.f32 %v2509, %v2561
    %s2564 = sld [smem:[#allocation3 + $0xe1]]
    %v2565 = vstv %s2564
    %v2566 = vmul.f32 %v2565, %v2550
    %v2567 = vmul.f32 %v2565, %v2551
    %v2568 = vadd.f32 %v2522, %v2566
    %v2569 = vadd.f32 %v2523, %v2567
    %s2570 = sld [smem:[#allocation3 + $0x105]]
    %v2571 = vstv %s2570
    %v2572 = vmul.f32 %v2571, %v2550
    %v2573 = vmul.f32 %v2571, %v2551
    %v2574 = vadd.f32 %v2536, %v2572
    %v2575 = vadd.f32 %v2537, %v2573
    %s2576 = sld [smem:[#allocation3 + $0x9a]]
    %v2577 = vstv %s2576
    %v2578 = vmul.f32 %v2577, %v2538
    %v2579 = vmul.f32 %v2577, %v2539
    %2582 = vrot.lane.b32.xlu0 %v2578, 35
    %v2583 = vpop.permute.xlu0 %2582
    %2584 = vrot.lane.b32.xlu0 %v2579, 35
    %v2585 = vpop.permute.xlu0 %2584
    %v2588 = vadd.f32 %v2556, %v2583
    %v2589 = vadd.f32 %v2557, %v2585
    %s2590 = sld [smem:[#allocation3 + $0xbe]]
    %v2591 = vstv %s2590
    %v2592 = vmul.f32 %v2591, %v2538
    %v2593 = vmul.f32 %v2591, %v2539
    %2596 = vrot.lane.b32.xlu0 %v2592, 35
    %v2597 = vpop.permute.xlu0 %2596
    %2598 = vrot.lane.b32.xlu0 %v2593, 35
    %v2599 = vpop.permute.xlu0 %2598
    %v2602 = vadd.f32 %v2562, %v2597
    %v2603 = vadd.f32 %v2563, %v2599
    %s2604 = sld [smem:[#allocation3 + $0xe2]]
    %v2605 = vstv %s2604
    %v2606 = vmul.f32 %v2605, %v2538
    %v2607 = vmul.f32 %v2605, %v2539
    %2610 = vrot.lane.b32.xlu0 %v2606, 35
    %v2611 = vpop.permute.xlu0 %2610
    %2612 = vrot.lane.b32.xlu0 %v2607, 35
    %v2613 = vpop.permute.xlu0 %2612
    %v2616 = vadd.f32 %v2568, %v2611
    %v2617 = vadd.f32 %v2569, %v2613
    %s2618 = sld [smem:[#allocation3 + $0x106]]
    %v2619 = vstv %s2618
    %v2620 = vmul.f32 %v2619, %v2538
    %v2621 = vmul.f32 %v2619, %v2539
    %2624 = vrot.lane.b32.xlu0 %v2620, 35
    %v2625 = vpop.permute.xlu0 %2624
    %2626 = vrot.lane.b32.xlu0 %v2621, 35
    %v2627 = vpop.permute.xlu0 %2626
    %v2630 = vadd.f32 %v2574, %v2625
    %v2631 = vadd.f32 %v2575, %v2627
    %s2632 = sld [smem:[#allocation3 + $0x9b]]
    %v2633 = vstv %s2632
    %v2634 = vmul.f32 %v2633, %v2550
    %v2635 = vmul.f32 %v2633, %v2551
    %2638 = vrot.lane.b32.xlu0 %v2634, 34
    %v2639 = vpop.permute.xlu0 %2638
    %2640 = vrot.lane.b32.xlu0 %v2635, 34
    %v2641 = vpop.permute.xlu0 %2640
    %v2644 = vadd.f32 %v2588, %v2639
    %v2645 = vadd.f32 %v2589, %v2641
    %s2646 = sld [smem:[#allocation3 + $0xbf]]
    %v2647 = vstv %s2646
    %v2648 = vmul.f32 %v2647, %v2550
    %v2649 = vmul.f32 %v2647, %v2551
    %2652 = vrot.lane.b32.xlu0 %v2648, 34
    %v2653 = vpop.permute.xlu0 %2652
    %2654 = vrot.lane.b32.xlu0 %v2649, 34
    %v2655 = vpop.permute.xlu0 %2654
    %v2658 = vadd.f32 %v2602, %v2653
    %v2659 = vadd.f32 %v2603, %v2655
    %s2660 = sld [smem:[#allocation3 + $0xe3]]
    %v2661 = vstv %s2660
    %v2662 = vmul.f32 %v2661, %v2550
    %v2663 = vmul.f32 %v2661, %v2551
    %2666 = vrot.lane.b32.xlu0 %v2662, 34
    %v2667 = vpop.permute.xlu0 %2666
    %2668 = vrot.lane.b32.xlu0 %v2663, 34
    %v2669 = vpop.permute.xlu0 %2668
    %v2672 = vadd.f32 %v2616, %v2667
    %v2673 = vadd.f32 %v2617, %v2669
    %s2674 = sld [smem:[#allocation3 + $0x107]]
    %v2675 = vstv %s2674
    %v2676 = vmul.f32 %v2675, %v2550
    %v2677 = vmul.f32 %v2675, %v2551
    %2680 = vrot.lane.b32.xlu0 %v2676, 34
    %v2681 = vpop.permute.xlu0 %2680
    %2682 = vrot.lane.b32.xlu0 %v2677, 34
    %v2683 = vpop.permute.xlu0 %2682
    %v2686 = vadd.f32 %v2630, %v2681
    %v2687 = vadd.f32 %v2631, %v2683
    %v2688 = vld [vmem:[%s646 + $0x1] sm:$0xff]
    %v2689 = vld [vmem:[%s646 + $0x9] sm:$0xff]
    %2690 = vrot.lane.b32.xlu0 %v2688, 36
    %v2691 = vpop.permute.xlu0 %2690
    %v2692 = vsel %vm205, %v2691, %v2688
    %2693 = vrot.lane.b32.xlu0 %v2689, 36
    %v2694 = vpop.permute.xlu0 %2693
    %v2695 = vsel %vm205, %v2694, %v2689
    %2696 = vrot.lane.b32.xlu0 %v2692, 36
    %v2697 = vpop.permute.xlu0 %2696
    %2698 = vrot.lane.b32.xlu0 %v2695, 36
    %v2699 = vpop.permute.xlu0 %2698
    %v2700 = vsel %vm205, %v2697, %v2688
    %v2701 = vsel %vm205, %v2699, %v2689
    %s2702 = sld [smem:[#allocation3 + $0x9c]]
    %v2703 = vstv %s2702
    %v2704 = vmul.f32 %v2703, %v2700
    %v2705 = vmul.f32 %v2703, %v2701
    %v2706 = vadd.f32 %v2644, %v2704
    %v2707 = vadd.f32 %v2645, %v2705
    %s2708 = sld [smem:[#allocation3 + $0xc0]]
    %v2709 = vstv %s2708
    %v2710 = vmul.f32 %v2709, %v2700
    %v2711 = vmul.f32 %v2709, %v2701
    %v2712 = vadd.f32 %v2658, %v2710
    %v2713 = vadd.f32 %v2659, %v2711
    %s2714 = sld [smem:[#allocation3 + $0xe4]]
    %v2715 = vstv %s2714
    %v2716 = vmul.f32 %v2715, %v2700
    %v2717 = vmul.f32 %v2715, %v2701
    %v2718 = vadd.f32 %v2672, %v2716
    %v2719 = vadd.f32 %v2673, %v2717
    %s2720 = sld [smem:[#allocation3 + $0x108]]
    %v2721 = vstv %s2720
    %v2722 = vmul.f32 %v2721, %v2700
    %v2723 = vmul.f32 %v2721, %v2701
    %v2724 = vadd.f32 %v2686, %v2722
    %v2725 = vadd.f32 %v2687, %v2723
    %s2726 = sld [smem:[#allocation3 + $0x9d]]
    %v2727 = vstv %s2726
    %v2728 = vmul.f32 %v2727, %v2688
    %v2729 = vmul.f32 %v2727, %v2689
    %2732 = vrot.lane.b32.xlu0 %v2728, 35
    %v2733 = vpop.permute.xlu0 %2732
    %2734 = vrot.lane.b32.xlu0 %v2729, 35
    %v2735 = vpop.permute.xlu0 %2734
    %v2738 = vadd.f32 %v2706, %v2733
    %v2739 = vadd.f32 %v2707, %v2735
    %s2740 = sld [smem:[#allocation3 + $0xc1]]
    %v2741 = vstv %s2740
    %v2742 = vmul.f32 %v2741, %v2688
    %v2743 = vmul.f32 %v2741, %v2689
    %2746 = vrot.lane.b32.xlu0 %v2742, 35
    %v2747 = vpop.permute.xlu0 %2746
    %2748 = vrot.lane.b32.xlu0 %v2743, 35
    %v2749 = vpop.permute.xlu0 %2748
    %v2752 = vadd.f32 %v2712, %v2747
    %v2753 = vadd.f32 %v2713, %v2749
    %s2754 = sld [smem:[#allocation3 + $0xe5]]
    %v2755 = vstv %s2754
    %v2756 = vmul.f32 %v2755, %v2688
    %v2757 = vmul.f32 %v2755, %v2689
    %2760 = vrot.lane.b32.xlu0 %v2756, 35
    %v2761 = vpop.permute.xlu0 %2760
    %2762 = vrot.lane.b32.xlu0 %v2757, 35
    %v2763 = vpop.permute.xlu0 %2762
    %v2766 = vadd.f32 %v2718, %v2761
    %v2767 = vadd.f32 %v2719, %v2763
    %s2768 = sld [smem:[#allocation3 + $0x109]]
    %v2769 = vstv %s2768
    %v2770 = vmul.f32 %v2769, %v2688
    %v2771 = vmul.f32 %v2769, %v2689
    %2774 = vrot.lane.b32.xlu0 %v2770, 35
    %v2775 = vpop.permute.xlu0 %2774
    %2776 = vrot.lane.b32.xlu0 %v2771, 35
    %v2777 = vpop.permute.xlu0 %2776
    %v2780 = vadd.f32 %v2724, %v2775
    %v2781 = vadd.f32 %v2725, %v2777
    %s2782 = sld [smem:[#allocation3 + $0x9e]]
    %v2783 = vstv %s2782
    %v2784 = vmul.f32 %v2783, %v2700
    %v2785 = vmul.f32 %v2783, %v2701
    %2788 = vrot.lane.b32.xlu0 %v2784, 34
    %v2789 = vpop.permute.xlu0 %2788
    %2790 = vrot.lane.b32.xlu0 %v2785, 34
    %v2791 = vpop.permute.xlu0 %2790
    %v2794 = vadd.f32 %v2738, %v2789
    %v2795 = vadd.f32 %v2739, %v2791
    %s2796 = sld [smem:[#allocation3 + $0xc2]]
    %v2797 = vstv %s2796
    %v2798 = vmul.f32 %v2797, %v2700
    %v2799 = vmul.f32 %v2797, %v2701
    %2802 = vrot.lane.b32.xlu0 %v2798, 34
    %v2803 = vpop.permute.xlu0 %2802
    %2804 = vrot.lane.b32.xlu0 %v2799, 34
    %v2805 = vpop.permute.xlu0 %2804
    %v2808 = vadd.f32 %v2752, %v2803
    %v2809 = vadd.f32 %v2753, %v2805
    %s2810 = sld [smem:[#allocation3 + $0xe6]]
    %v2811 = vstv %s2810
    %v2812 = vmul.f32 %v2811, %v2700
    %v2813 = vmul.f32 %v2811, %v2701
    %2816 = vrot.lane.b32.xlu0 %v2812, 34
    %v2817 = vpop.permute.xlu0 %2816
    %2818 = vrot.lane.b32.xlu0 %v2813, 34
    %v2819 = vpop.permute.xlu0 %2818
    %v2822 = vadd.f32 %v2766, %v2817
    %v2823 = vadd.f32 %v2767, %v2819
    %s2824 = sld [smem:[#allocation3 + $0x10a]]
    %v2825 = vstv %s2824
    %v2826 = vmul.f32 %v2825, %v2700
    %v2827 = vmul.f32 %v2825, %v2701
    %2830 = vrot.lane.b32.xlu0 %v2826, 34
    %v2831 = vpop.permute.xlu0 %2830
    %2832 = vrot.lane.b32.xlu0 %v2827, 34
    %v2833 = vpop.permute.xlu0 %2832
    %v2836 = vadd.f32 %v2780, %v2831
    %v2837 = vadd.f32 %v2781, %v2833
    %v2838 = vld [vmem:[%s646 + $0x2] sm:$0xff]
    %v2839 = vld [vmem:[%s646 + $0xa] sm:$0xff]
    %2840 = vrot.lane.b32.xlu0 %v2838, 36
    %v2841 = vpop.permute.xlu0 %2840
    %v2842 = vsel %vm205, %v2841, %v2838
    %2843 = vrot.lane.b32.xlu0 %v2839, 36
    %v2844 = vpop.permute.xlu0 %2843
    %v2845 = vsel %vm205, %v2844, %v2839
    %2846 = vrot.lane.b32.xlu0 %v2842, 36
    %v2847 = vpop.permute.xlu0 %2846
    %2848 = vrot.lane.b32.xlu0 %v2845, 36
    %v2849 = vpop.permute.xlu0 %2848
    %v2850 = vsel %vm205, %v2847, %v2838
    %v2851 = vsel %vm205, %v2849, %v2839
    %s2852 = sld [smem:[#allocation3 + $0x9f]]
    %v2853 = vstv %s2852
    %v2854 = vmul.f32 %v2853, %v2850
    %v2855 = vmul.f32 %v2853, %v2851
    %v2856 = vadd.f32 %v2794, %v2854
    %v2857 = vadd.f32 %v2795, %v2855
    %s2858 = sld [smem:[#allocation3 + $0xc3]]
    %v2859 = vstv %s2858
    %v2860 = vmul.f32 %v2859, %v2850
    %v2861 = vmul.f32 %v2859, %v2851
    %v2862 = vadd.f32 %v2808, %v2860
    %v2863 = vadd.f32 %v2809, %v2861
    %s2864 = sld [smem:[#allocation3 + $0xe7]]
    %v2865 = vstv %s2864
    %v2866 = vmul.f32 %v2865, %v2850
    %v2867 = vmul.f32 %v2865, %v2851
    %v2868 = vadd.f32 %v2822, %v2866
    %v2869 = vadd.f32 %v2823, %v2867
    %s2870 = sld [smem:[#allocation3 + $0x10b]]
    %v2871 = vstv %s2870
    %v2872 = vmul.f32 %v2871, %v2850
    %v2873 = vmul.f32 %v2871, %v2851
    %v2874 = vadd.f32 %v2836, %v2872
    %v2875 = vadd.f32 %v2837, %v2873
    %s2876 = sld [smem:[#allocation3 + $0xa0]]
    %v2877 = vstv %s2876
    %v2878 = vmul.f32 %v2877, %v2838
    %v2879 = vmul.f32 %v2877, %v2839
    %2882 = vrot.lane.b32.xlu0 %v2878, 35
    %v2883 = vpop.permute.xlu0 %2882
    %2884 = vrot.lane.b32.xlu0 %v2879, 35
    %v2885 = vpop.permute.xlu0 %2884
    %v2888 = vadd.f32 %v2856, %v2883
    %v2889 = vadd.f32 %v2857, %v2885
    %s2890 = sld [smem:[#allocation3 + $0xc4]]
    %v2891 = vstv %s2890
    %v2892 = vmul.f32 %v2891, %v2838
    %v2893 = vmul.f32 %v2891, %v2839
    %2896 = vrot.lane.b32.xlu0 %v2892, 35
    %v2897 = vpop.permute.xlu0 %2896
    %2898 = vrot.lane.b32.xlu0 %v2893, 35
    %v2899 = vpop.permute.xlu0 %2898
    %v2902 = vadd.f32 %v2862, %v2897
    %v2903 = vadd.f32 %v2863, %v2899
    %s2904 = sld [smem:[#allocation3 + $0xe8]]
    %v2905 = vstv %s2904
    %v2906 = vmul.f32 %v2905, %v2838
    %v2907 = vmul.f32 %v2905, %v2839
    %2910 = vrot.lane.b32.xlu0 %v2906, 35
    %v2911 = vpop.permute.xlu0 %2910
    %2912 = vrot.lane.b32.xlu0 %v2907, 35
    %v2913 = vpop.permute.xlu0 %2912
    %v2916 = vadd.f32 %v2868, %v2911
    %v2917 = vadd.f32 %v2869, %v2913
    %s2918 = sld [smem:[#allocation3 + $0x10c]]
    %v2919 = vstv %s2918
    %v2920 = vmul.f32 %v2919, %v2838
    %v2921 = vmul.f32 %v2919, %v2839
    %2924 = vrot.lane.b32.xlu0 %v2920, 35
    %v2925 = vpop.permute.xlu0 %2924
    %2926 = vrot.lane.b32.xlu0 %v2921, 35
    %v2927 = vpop.permute.xlu0 %2926
    %v2930 = vadd.f32 %v2874, %v2925
    %v2931 = vadd.f32 %v2875, %v2927
    %s2932 = sld [smem:[#allocation3 + $0xa1]]
    %v2933 = vstv %s2932
    %v2934 = vmul.f32 %v2933, %v2850
    %v2935 = vmul.f32 %v2933, %v2851
    %2938 = vrot.lane.b32.xlu0 %v2934, 34
    %v2939 = vpop.permute.xlu0 %2938
    %2940 = vrot.lane.b32.xlu0 %v2935, 34
    %v2941 = vpop.permute.xlu0 %2940
    %v2944 = vadd.f32 %v2888, %v2939
    %v2945 = vadd.f32 %v2889, %v2941
    %s2946 = sld [smem:[#allocation3 + $0xc5]]
    %v2947 = vstv %s2946
    %v2948 = vmul.f32 %v2947, %v2850
    %v2949 = vmul.f32 %v2947, %v2851
    %2952 = vrot.lane.b32.xlu0 %v2948, 34
    %v2953 = vpop.permute.xlu0 %2952
    %2954 = vrot.lane.b32.xlu0 %v2949, 34
    %v2955 = vpop.permute.xlu0 %2954
    %v2958 = vadd.f32 %v2902, %v2953
    %v2959 = vadd.f32 %v2903, %v2955
    %s2960 = sld [smem:[#allocation3 + $0xe9]]
    %v2961 = vstv %s2960
    %v2962 = vmul.f32 %v2961, %v2850
    %v2963 = vmul.f32 %v2961, %v2851
    %2966 = vrot.lane.b32.xlu0 %v2962, 34
    %v2967 = vpop.permute.xlu0 %2966
    %2968 = vrot.lane.b32.xlu0 %v2963, 34
    %v2969 = vpop.permute.xlu0 %2968
    %v2972 = vadd.f32 %v2916, %v2967
    %v2973 = vadd.f32 %v2917, %v2969
    %s2974 = sld [smem:[#allocation3 + $0x10d]]
    %v2975 = vstv %s2974
    %v2976 = vmul.f32 %v2975, %v2850
    %v2977 = vmul.f32 %v2975, %v2851
    %2980 = vrot.lane.b32.xlu0 %v2976, 34
    %v2981 = vpop.permute.xlu0 %2980
    %2982 = vrot.lane.b32.xlu0 %v2977, 34
    %v2983 = vpop.permute.xlu0 %2982
    %v2986 = vadd.f32 %v2930, %v2981
    %v2987 = vadd.f32 %v2931, %v2983
    %v2988 = vld [vmem:[%s1097] sm:$0xff]
    %v2989 = vld [vmem:[%s1097 + $0x8] sm:$0xff]
    %2990 = vrot.lane.b32.xlu0 %v2988, 36
    %v2991 = vpop.permute.xlu0 %2990
    %v2992 = vsel %vm205, %v2991, %v2988
    %2993 = vrot.lane.b32.xlu0 %v2989, 36
    %v2994 = vpop.permute.xlu0 %2993
    %v2995 = vsel %vm205, %v2994, %v2989
    %2996 = vrot.lane.b32.xlu0 %v2992, 36
    %v2997 = vpop.permute.xlu0 %2996
    %2998 = vrot.lane.b32.xlu0 %v2995, 36
    %v2999 = vpop.permute.xlu0 %2998
    %v3000 = vsel %vm205, %v2997, %v2988
    %v3001 = vsel %vm205, %v2999, %v2989
    %s3002 = sld [smem:[#allocation3 + $0xa2]]
    %v3003 = vstv %s3002
    %v3004 = vmul.f32 %v3003, %v3000
    %v3005 = vmul.f32 %v3003, %v3001
    %v3006 = vadd.f32 %v2944, %v3004
    %v3007 = vadd.f32 %v2945, %v3005
    %s3008 = sld [smem:[#allocation3 + $0xc6]]
    %v3009 = vstv %s3008
    %v3010 = vmul.f32 %v3009, %v3000
    %v3011 = vmul.f32 %v3009, %v3001
    %v3012 = vadd.f32 %v2958, %v3010
    %v3013 = vadd.f32 %v2959, %v3011
    %s3014 = sld [smem:[#allocation3 + $0xea]]
    %v3015 = vstv %s3014
    %v3016 = vmul.f32 %v3015, %v3000
    %v3017 = vmul.f32 %v3015, %v3001
    %v3018 = vadd.f32 %v2972, %v3016
    %v3019 = vadd.f32 %v2973, %v3017
    %s3020 = sld [smem:[#allocation3 + $0x10e]]
    %v3021 = vstv %s3020
    %v3022 = vmul.f32 %v3021, %v3000
    %v3023 = vmul.f32 %v3021, %v3001
    %v3024 = vadd.f32 %v2986, %v3022
    %v3025 = vadd.f32 %v2987, %v3023
    %s3026 = sld [smem:[#allocation3 + $0xa3]]
    %v3027 = vstv %s3026
    %v3028 = vmul.f32 %v3027, %v2988
    %v3029 = vmul.f32 %v3027, %v2989
    %3032 = vrot.lane.b32.xlu0 %v3028, 35
    %v3033 = vpop.permute.xlu0 %3032
    %3034 = vrot.lane.b32.xlu0 %v3029, 35
    %v3035 = vpop.permute.xlu0 %3034
    %v3038 = vadd.f32 %v3006, %v3033
    %v3039 = vadd.f32 %v3007, %v3035
    %s3040 = sld [smem:[#allocation3 + $0xc7]]
    %v3041 = vstv %s3040
    %v3042 = vmul.f32 %v3041, %v2988
    %v3043 = vmul.f32 %v3041, %v2989
    %3046 = vrot.lane.b32.xlu0 %v3042, 35
    %v3047 = vpop.permute.xlu0 %3046
    %3048 = vrot.lane.b32.xlu0 %v3043, 35
    %v3049 = vpop.permute.xlu0 %3048
    %v3052 = vadd.f32 %v3012, %v3047
    %v3053 = vadd.f32 %v3013, %v3049
    %s3054 = sld [smem:[#allocation3 + $0xeb]]
    %v3055 = vstv %s3054
    %v3056 = vmul.f32 %v3055, %v2988
    %v3057 = vmul.f32 %v3055, %v2989
    %3060 = vrot.lane.b32.xlu0 %v3056, 35
    %v3061 = vpop.permute.xlu0 %3060
    %3062 = vrot.lane.b32.xlu0 %v3057, 35
    %v3063 = vpop.permute.xlu0 %3062
    %v3066 = vadd.f32 %v3018, %v3061
    %v3067 = vadd.f32 %v3019, %v3063
    %s3068 = sld [smem:[#allocation3 + $0x10f]]
    %v3069 = vstv %s3068
    %v3070 = vmul.f32 %v3069, %v2988
    %v3071 = vmul.f32 %v3069, %v2989
    %3074 = vrot.lane.b32.xlu0 %v3070, 35
    %v3075 = vpop.permute.xlu0 %3074
    %3076 = vrot.lane.b32.xlu0 %v3071, 35
    %v3077 = vpop.permute.xlu0 %3076
    %v3080 = vadd.f32 %v3024, %v3075
    %v3081 = vadd.f32 %v3025, %v3077
    %s3082 = sld [smem:[#allocation3 + $0xa4]]
    %v3083 = vstv %s3082
    %v3084 = vmul.f32 %v3083, %v3000
    %v3085 = vmul.f32 %v3083, %v3001
    %3088 = vrot.lane.b32.xlu0 %v3084, 34
    %v3089 = vpop.permute.xlu0 %3088
    %3090 = vrot.lane.b32.xlu0 %v3085, 34
    %v3091 = vpop.permute.xlu0 %3090
    %v3094 = vadd.f32 %v3038, %v3089
    %v3095 = vadd.f32 %v3039, %v3091
    %s3096 = sld [smem:[#allocation3 + $0xc8]]
    %v3097 = vstv %s3096
    %v3098 = vmul.f32 %v3097, %v3000
    %v3099 = vmul.f32 %v3097, %v3001
    %3102 = vrot.lane.b32.xlu0 %v3098, 34
    %v3103 = vpop.permute.xlu0 %3102
    %3104 = vrot.lane.b32.xlu0 %v3099, 34
    %v3105 = vpop.permute.xlu0 %3104
    %v3108 = vadd.f32 %v3052, %v3103
    %v3109 = vadd.f32 %v3053, %v3105
    %s3110 = sld [smem:[#allocation3 + $0xec]]
    %v3111 = vstv %s3110
    %v3112 = vmul.f32 %v3111, %v3000
    %v3113 = vmul.f32 %v3111, %v3001
    %3116 = vrot.lane.b32.xlu0 %v3112, 34
    %v3117 = vpop.permute.xlu0 %3116
    %3118 = vrot.lane.b32.xlu0 %v3113, 34
    %v3119 = vpop.permute.xlu0 %3118
    %v3122 = vadd.f32 %v3066, %v3117
    %v3123 = vadd.f32 %v3067, %v3119
    %s3124 = sld [smem:[#allocation3 + $0x110]]
    %v3125 = vstv %s3124
    %v3126 = vmul.f32 %v3125, %v3000
    %v3127 = vmul.f32 %v3125, %v3001
    %3130 = vrot.lane.b32.xlu0 %v3126, 34
    %v3131 = vpop.permute.xlu0 %3130
    %3132 = vrot.lane.b32.xlu0 %v3127, 34
    %v3133 = vpop.permute.xlu0 %3132
    %v3136 = vadd.f32 %v3080, %v3131
    %v3137 = vadd.f32 %v3081, %v3133
    %v3138 = vld [vmem:[%s1097 + $0x1] sm:$0xff]
    %v3139 = vld [vmem:[%s1097 + $0x9] sm:$0xff]
    %3140 = vrot.lane.b32.xlu0 %v3138, 36
    %v3141 = vpop.permute.xlu0 %3140
    %v3142 = vsel %vm205, %v3141, %v3138
    %3143 = vrot.lane.b32.xlu0 %v3139, 36
    %v3144 = vpop.permute.xlu0 %3143
    %v3145 = vsel %vm205, %v3144, %v3139
    %3146 = vrot.lane.b32.xlu0 %v3142, 36
    %v3147 = vpop.permute.xlu0 %3146
    %3148 = vrot.lane.b32.xlu0 %v3145, 36
    %v3149 = vpop.permute.xlu0 %3148
    %v3150 = vsel %vm205, %v3147, %v3138
    %v3151 = vsel %vm205, %v3149, %v3139
    %s3152 = sld [smem:[#allocation3 + $0xa5]]
    %v3153 = vstv %s3152
    %v3154 = vmul.f32 %v3153, %v3150
    %v3155 = vmul.f32 %v3153, %v3151
    %v3156 = vadd.f32 %v3094, %v3154
    %v3157 = vadd.f32 %v3095, %v3155
    %s3158 = sld [smem:[#allocation3 + $0xc9]]
    %v3159 = vstv %s3158
    %v3160 = vmul.f32 %v3159, %v3150
    %v3161 = vmul.f32 %v3159, %v3151
    %v3162 = vadd.f32 %v3108, %v3160
    %v3163 = vadd.f32 %v3109, %v3161
    %s3164 = sld [smem:[#allocation3 + $0xed]]
    %v3165 = vstv %s3164
    %v3166 = vmul.f32 %v3165, %v3150
    %v3167 = vmul.f32 %v3165, %v3151
    %v3168 = vadd.f32 %v3122, %v3166
    %v3169 = vadd.f32 %v3123, %v3167
    %s3170 = sld [smem:[#allocation3 + $0x111]]
    %v3171 = vstv %s3170
    %v3172 = vmul.f32 %v3171, %v3150
    %v3173 = vmul.f32 %v3171, %v3151
    %v3174 = vadd.f32 %v3136, %v3172
    %v3175 = vadd.f32 %v3137, %v3173
    %s3176 = sld [smem:[#allocation3 + $0xa6]]
    %v3177 = vstv %s3176
    %v3178 = vmul.f32 %v3177, %v3138
    %v3179 = vmul.f32 %v3177, %v3139
    %3182 = vrot.lane.b32.xlu0 %v3178, 35
    %v3183 = vpop.permute.xlu0 %3182
    %3184 = vrot.lane.b32.xlu0 %v3179, 35
    %v3185 = vpop.permute.xlu0 %3184
    %v3188 = vadd.f32 %v3156, %v3183
    %v3189 = vadd.f32 %v3157, %v3185
    %s3190 = sld [smem:[#allocation3 + $0xca]]
    %v3191 = vstv %s3190
    %v3192 = vmul.f32 %v3191, %v3138
    %v3193 = vmul.f32 %v3191, %v3139
    %3196 = vrot.lane.b32.xlu0 %v3192, 35
    %v3197 = vpop.permute.xlu0 %3196
    %3198 = vrot.lane.b32.xlu0 %v3193, 35
    %v3199 = vpop.permute.xlu0 %3198
    %v3202 = vadd.f32 %v3162, %v3197
    %v3203 = vadd.f32 %v3163, %v3199
    %s3204 = sld [smem:[#allocation3 + $0xee]]
    %v3205 = vstv %s3204
    %v3206 = vmul.f32 %v3205, %v3138
    %v3207 = vmul.f32 %v3205, %v3139
    %3210 = vrot.lane.b32.xlu0 %v3206, 35
    %v3211 = vpop.permute.xlu0 %3210
    %3212 = vrot.lane.b32.xlu0 %v3207, 35
    %v3213 = vpop.permute.xlu0 %3212
    %v3216 = vadd.f32 %v3168, %v3211
    %v3217 = vadd.f32 %v3169, %v3213
    %s3218 = sld [smem:[#allocation3 + $0x112]]
    %v3219 = vstv %s3218
    %v3220 = vmul.f32 %v3219, %v3138
    %v3221 = vmul.f32 %v3219, %v3139
    %3224 = vrot.lane.b32.xlu0 %v3220, 35
    %v3225 = vpop.permute.xlu0 %3224
    %3226 = vrot.lane.b32.xlu0 %v3221, 35
    %v3227 = vpop.permute.xlu0 %3226
    %v3230 = vadd.f32 %v3174, %v3225
    %v3231 = vadd.f32 %v3175, %v3227
    %s3232 = sld [smem:[#allocation3 + $0xa7]]
    %v3233 = vstv %s3232
    %v3234 = vmul.f32 %v3233, %v3150
    %v3235 = vmul.f32 %v3233, %v3151
    %3238 = vrot.lane.b32.xlu0 %v3234, 34
    %v3239 = vpop.permute.xlu0 %3238
    %3240 = vrot.lane.b32.xlu0 %v3235, 34
    %v3241 = vpop.permute.xlu0 %3240
    %v3244 = vadd.f32 %v3188, %v3239
    %v3245 = vadd.f32 %v3189, %v3241
    %s3246 = sld [smem:[#allocation3 + $0xcb]]
    %v3247 = vstv %s3246
    %v3248 = vmul.f32 %v3247, %v3150
    %v3249 = vmul.f32 %v3247, %v3151
    %3252 = vrot.lane.b32.xlu0 %v3248, 34
    %v3253 = vpop.permute.xlu0 %3252
    %3254 = vrot.lane.b32.xlu0 %v3249, 34
    %v3255 = vpop.permute.xlu0 %3254
    %v3258 = vadd.f32 %v3202, %v3253
    %v3259 = vadd.f32 %v3203, %v3255
    %s3260 = sld [smem:[#allocation3 + $0xef]]
    %v3261 = vstv %s3260
    %v3262 = vmul.f32 %v3261, %v3150
    %v3263 = vmul.f32 %v3261, %v3151
    %3266 = vrot.lane.b32.xlu0 %v3262, 34
    %v3267 = vpop.permute.xlu0 %3266
    %3268 = vrot.lane.b32.xlu0 %v3263, 34
    %v3269 = vpop.permute.xlu0 %3268
    %v3272 = vadd.f32 %v3216, %v3267
    %v3273 = vadd.f32 %v3217, %v3269
    %s3274 = sld [smem:[#allocation3 + $0x113]]
    %v3275 = vstv %s3274
    %v3276 = vmul.f32 %v3275, %v3150
    %v3277 = vmul.f32 %v3275, %v3151
    %3280 = vrot.lane.b32.xlu0 %v3276, 34
    %v3281 = vpop.permute.xlu0 %3280
    %3282 = vrot.lane.b32.xlu0 %v3277, 34
    %v3283 = vpop.permute.xlu0 %3282
    %v3286 = vadd.f32 %v3230, %v3281
    %v3287 = vadd.f32 %v3231, %v3283
    %v3288 = vld [vmem:[%s1097 + $0x2] sm:$0xff]
    %v3289 = vld [vmem:[%s1097 + $0xa] sm:$0xff]
    %3290 = vrot.lane.b32.xlu0 %v3288, 36
    %v3291 = vpop.permute.xlu0 %3290
    %v3292 = vsel %vm205, %v3291, %v3288
    %3293 = vrot.lane.b32.xlu0 %v3289, 36
    %v3294 = vpop.permute.xlu0 %3293
    %v3295 = vsel %vm205, %v3294, %v3289
    %3296 = vrot.lane.b32.xlu0 %v3292, 36
    %v3297 = vpop.permute.xlu0 %3296
    %3298 = vrot.lane.b32.xlu0 %v3295, 36
    %v3299 = vpop.permute.xlu0 %3298
    %v3300 = vsel %vm205, %v3297, %v3288
    %v3301 = vsel %vm205, %v3299, %v3289
    %s3302 = sld [smem:[#allocation3 + $0xa8]]
    %v3303 = vstv %s3302
    %v3304 = vmul.f32 %v3303, %v3300
    %v3305 = vmul.f32 %v3303, %v3301
    %v3306 = vadd.f32 %v3244, %v3304
    %v3307 = vadd.f32 %v3245, %v3305
    %s3308 = sld [smem:[#allocation3 + $0xcc]]
    %v3309 = vstv %s3308
    %v3310 = vmul.f32 %v3309, %v3300
    %v3311 = vmul.f32 %v3309, %v3301
    %v3312 = vadd.f32 %v3258, %v3310
    %v3313 = vadd.f32 %v3259, %v3311
    %s3314 = sld [smem:[#allocation3 + $0xf0]]
    %v3315 = vstv %s3314
    %v3316 = vmul.f32 %v3315, %v3300
    %v3317 = vmul.f32 %v3315, %v3301
    %v3318 = vadd.f32 %v3272, %v3316
    %v3319 = vadd.f32 %v3273, %v3317
    %s3320 = sld [smem:[#allocation3 + $0x114]]
    %v3321 = vstv %s3320
    %v3322 = vmul.f32 %v3321, %v3300
    %v3323 = vmul.f32 %v3321, %v3301
    %v3324 = vadd.f32 %v3286, %v3322
    %v3325 = vadd.f32 %v3287, %v3323
    %s3326 = sld [smem:[#allocation3 + $0xa9]]
    %v3327 = vstv %s3326
    %v3328 = vmul.f32 %v3327, %v3288
    %v3329 = vmul.f32 %v3327, %v3289
    %3332 = vrot.lane.b32.xlu0 %v3328, 35
    %v3333 = vpop.permute.xlu0 %3332
    %3334 = vrot.lane.b32.xlu0 %v3329, 35
    %v3335 = vpop.permute.xlu0 %3334
    %v3338 = vadd.f32 %v3306, %v3333
    %v3339 = vadd.f32 %v3307, %v3335
    %s3340 = sld [smem:[#allocation3 + $0xcd]]
    %v3341 = vstv %s3340
    %v3342 = vmul.f32 %v3341, %v3288
    %v3343 = vmul.f32 %v3341, %v3289
    %3346 = vrot.lane.b32.xlu0 %v3342, 35
    %v3347 = vpop.permute.xlu0 %3346
    %3348 = vrot.lane.b32.xlu0 %v3343, 35
    %v3349 = vpop.permute.xlu0 %3348
    %v3352 = vadd.f32 %v3312, %v3347
    %v3353 = vadd.f32 %v3313, %v3349
    %s3354 = sld [smem:[#allocation3 + $0xf1]]
    %v3355 = vstv %s3354
    %v3356 = vmul.f32 %v3355, %v3288
    %v3357 = vmul.f32 %v3355, %v3289
    %3360 = vrot.lane.b32.xlu0 %v3356, 35
    %v3361 = vpop.permute.xlu0 %3360
    %3362 = vrot.lane.b32.xlu0 %v3357, 35
    %v3363 = vpop.permute.xlu0 %3362
    %v3366 = vadd.f32 %v3318, %v3361
    %v3367 = vadd.f32 %v3319, %v3363
    %s3368 = sld [smem:[#allocation3 + $0x115]]
    %v3369 = vstv %s3368
    %v3370 = vmul.f32 %v3369, %v3288
    %v3371 = vmul.f32 %v3369, %v3289
    %3374 = vrot.lane.b32.xlu0 %v3370, 35
    %v3375 = vpop.permute.xlu0 %3374
    %3376 = vrot.lane.b32.xlu0 %v3371, 35
    %v3377 = vpop.permute.xlu0 %3376
    %v3380 = vadd.f32 %v3324, %v3375
    %v3381 = vadd.f32 %v3325, %v3377
    %s3382 = sld [smem:[#allocation3 + $0xaa]]
    %v3383 = vstv %s3382
    %v3384 = vmul.f32 %v3383, %v3300
    %v3385 = vmul.f32 %v3383, %v3301
    %3388 = vrot.lane.b32.xlu0 %v3384, 34
    %v3389 = vpop.permute.xlu0 %3388
    %3390 = vrot.lane.b32.xlu0 %v3385, 34
    %v3391 = vpop.permute.xlu0 %3390
    %v3394 = vadd.f32 %v3338, %v3389
    %v3395 = vadd.f32 %v3339, %v3391
    %s3396 = sld [smem:[#allocation3 + $0xce]]
    %v3397 = vstv %s3396
    %v3398 = vmul.f32 %v3397, %v3300
    %v3399 = vmul.f32 %v3397, %v3301
    %3402 = vrot.lane.b32.xlu0 %v3398, 34
    %v3403 = vpop.permute.xlu0 %3402
    %3404 = vrot.lane.b32.xlu0 %v3399, 34
    %v3405 = vpop.permute.xlu0 %3404
    %v3408 = vadd.f32 %v3352, %v3403
    %v3409 = vadd.f32 %v3353, %v3405
    %s3410 = sld [smem:[#allocation3 + $0xf2]]
    %v3411 = vstv %s3410
    %v3412 = vmul.f32 %v3411, %v3300
    %v3413 = vmul.f32 %v3411, %v3301
    %3416 = vrot.lane.b32.xlu0 %v3412, 34
    %v3417 = vpop.permute.xlu0 %3416
    %3418 = vrot.lane.b32.xlu0 %v3413, 34
    %v3419 = vpop.permute.xlu0 %3418
    %v3422 = vadd.f32 %v3366, %v3417
    %v3423 = vadd.f32 %v3367, %v3419
    %s3424 = sld [smem:[#allocation3 + $0x116]]
    %v3425 = vstv %s3424
    %v3426 = vmul.f32 %v3425, %v3300
    %v3427 = vmul.f32 %v3425, %v3301
    %3430 = vrot.lane.b32.xlu0 %v3426, 34
    %v3431 = vpop.permute.xlu0 %3430
    %3432 = vrot.lane.b32.xlu0 %v3427, 34
    %v3433 = vpop.permute.xlu0 %3432
    %v3436 = vadd.f32 %v3380, %v3431
    %v3437 = vadd.f32 %v3381, %v3433
    %v3438 = vld [vmem:[%s1548] sm:$0xff]
    %v3439 = vld [vmem:[%s1548 + $0x8] sm:$0xff]
    %3440 = vrot.lane.b32.xlu0 %v3438, 36
    %v3441 = vpop.permute.xlu0 %3440
    %v3442 = vsel %vm205, %v3441, %v3438
    %3443 = vrot.lane.b32.xlu0 %v3439, 36
    %v3444 = vpop.permute.xlu0 %3443
    %v3445 = vsel %vm205, %v3444, %v3439
    %3446 = vrot.lane.b32.xlu0 %v3442, 36
    %v3447 = vpop.permute.xlu0 %3446
    %3448 = vrot.lane.b32.xlu0 %v3445, 36
    %v3449 = vpop.permute.xlu0 %3448
    %v3450 = vsel %vm205, %v3447, %v3438
    %v3451 = vsel %vm205, %v3449, %v3439
    %s3452 = sld [smem:[#allocation3 + $0xab]]
    %v3453 = vstv %s3452
    %v3454 = vmul.f32 %v3453, %v3450
    %v3455 = vmul.f32 %v3453, %v3451
    %v3456 = vadd.f32 %v3394, %v3454
    %v3457 = vadd.f32 %v3395, %v3455
    %s3458 = sld [smem:[#allocation3 + $0xcf]]
    %v3459 = vstv %s3458
    %v3460 = vmul.f32 %v3459, %v3450
    %v3461 = vmul.f32 %v3459, %v3451
    %v3462 = vadd.f32 %v3408, %v3460
    %v3463 = vadd.f32 %v3409, %v3461
    %s3464 = sld [smem:[#allocation3 + $0xf3]]
    %v3465 = vstv %s3464
    %v3466 = vmul.f32 %v3465, %v3450
    %v3467 = vmul.f32 %v3465, %v3451
    %v3468 = vadd.f32 %v3422, %v3466
    %v3469 = vadd.f32 %v3423, %v3467
    %s3470 = sld [smem:[#allocation3 + $0x117]]
    %v3471 = vstv %s3470
    %v3472 = vmul.f32 %v3471, %v3450
    %v3473 = vmul.f32 %v3471, %v3451
    %v3474 = vadd.f32 %v3436, %v3472
    %v3475 = vadd.f32 %v3437, %v3473
    %s3476 = sld [smem:[#allocation3 + $0xac]]
    %v3477 = vstv %s3476
    %v3478 = vmul.f32 %v3477, %v3438
    %v3479 = vmul.f32 %v3477, %v3439
    %3482 = vrot.lane.b32.xlu0 %v3478, 35
    %v3483 = vpop.permute.xlu0 %3482
    %3484 = vrot.lane.b32.xlu0 %v3479, 35
    %v3485 = vpop.permute.xlu0 %3484
    %v3488 = vadd.f32 %v3456, %v3483
    %v3489 = vadd.f32 %v3457, %v3485
    %s3490 = sld [smem:[#allocation3 + $0xd0]]
    %v3491 = vstv %s3490
    %v3492 = vmul.f32 %v3491, %v3438
    %v3493 = vmul.f32 %v3491, %v3439
    %3496 = vrot.lane.b32.xlu0 %v3492, 35
    %v3497 = vpop.permute.xlu0 %3496
    %3498 = vrot.lane.b32.xlu0 %v3493, 35
    %v3499 = vpop.permute.xlu0 %3498
    %v3502 = vadd.f32 %v3462, %v3497
    %v3503 = vadd.f32 %v3463, %v3499
    %s3504 = sld [smem:[#allocation3 + $0xf4]]
    %v3505 = vstv %s3504
    %v3506 = vmul.f32 %v3505, %v3438
    %v3507 = vmul.f32 %v3505, %v3439
    %3510 = vrot.lane.b32.xlu0 %v3506, 35
    %v3511 = vpop.permute.xlu0 %3510
    %3512 = vrot.lane.b32.xlu0 %v3507, 35
    %v3513 = vpop.permute.xlu0 %3512
    %v3516 = vadd.f32 %v3468, %v3511
    %v3517 = vadd.f32 %v3469, %v3513
    %s3518 = sld [smem:[#allocation3 + $0x118]]
    %v3519 = vstv %s3518
    %v3520 = vmul.f32 %v3519, %v3438
    %v3521 = vmul.f32 %v3519, %v3439
    %3524 = vrot.lane.b32.xlu0 %v3520, 35
    %v3525 = vpop.permute.xlu0 %3524
    %3526 = vrot.lane.b32.xlu0 %v3521, 35
    %v3527 = vpop.permute.xlu0 %3526
    %v3530 = vadd.f32 %v3474, %v3525
    %v3531 = vadd.f32 %v3475, %v3527
    %s3532 = sld [smem:[#allocation3 + $0xad]]
    %v3533 = vstv %s3532
    %v3534 = vmul.f32 %v3533, %v3450
    %v3535 = vmul.f32 %v3533, %v3451
    %3538 = vrot.lane.b32.xlu0 %v3534, 34
    %v3539 = vpop.permute.xlu0 %3538
    %3540 = vrot.lane.b32.xlu0 %v3535, 34
    %v3541 = vpop.permute.xlu0 %3540
    %v3544 = vadd.f32 %v3488, %v3539
    %v3545 = vadd.f32 %v3489, %v3541
    %s3546 = sld [smem:[#allocation3 + $0xd1]]
    %v3547 = vstv %s3546
    %v3548 = vmul.f32 %v3547, %v3450
    %v3549 = vmul.f32 %v3547, %v3451
    %3552 = vrot.lane.b32.xlu0 %v3548, 34
    %v3553 = vpop.permute.xlu0 %3552
    %3554 = vrot.lane.b32.xlu0 %v3549, 34
    %v3555 = vpop.permute.xlu0 %3554
    %v3558 = vadd.f32 %v3502, %v3553
    %v3559 = vadd.f32 %v3503, %v3555
    %s3560 = sld [smem:[#allocation3 + $0xf5]]
    %v3561 = vstv %s3560
    %v3562 = vmul.f32 %v3561, %v3450
    %v3563 = vmul.f32 %v3561, %v3451
    %3566 = vrot.lane.b32.xlu0 %v3562, 34
    %v3567 = vpop.permute.xlu0 %3566
    %3568 = vrot.lane.b32.xlu0 %v3563, 34
    %v3569 = vpop.permute.xlu0 %3568
    %v3572 = vadd.f32 %v3516, %v3567
    %v3573 = vadd.f32 %v3517, %v3569
    %s3574 = sld [smem:[#allocation3 + $0x119]]
    %v3575 = vstv %s3574
    %v3576 = vmul.f32 %v3575, %v3450
    %v3577 = vmul.f32 %v3575, %v3451
    %3580 = vrot.lane.b32.xlu0 %v3576, 34
    %v3581 = vpop.permute.xlu0 %3580
    %3582 = vrot.lane.b32.xlu0 %v3577, 34
    %v3583 = vpop.permute.xlu0 %3582
    %v3586 = vadd.f32 %v3530, %v3581
    %v3587 = vadd.f32 %v3531, %v3583
    %v3588 = vld [vmem:[%s1548 + $0x1] sm:$0xff]
    %v3589 = vld [vmem:[%s1548 + $0x9] sm:$0xff]
    %3590 = vrot.lane.b32.xlu0 %v3588, 36
    %v3591 = vpop.permute.xlu0 %3590
    %v3592 = vsel %vm205, %v3591, %v3588
    %3593 = vrot.lane.b32.xlu0 %v3589, 36
    %v3594 = vpop.permute.xlu0 %3593
    %v3595 = vsel %vm205, %v3594, %v3589
    %3596 = vrot.lane.b32.xlu0 %v3592, 36
    %v3597 = vpop.permute.xlu0 %3596
    %3598 = vrot.lane.b32.xlu0 %v3595, 36
    %v3599 = vpop.permute.xlu0 %3598
    %v3600 = vsel %vm205, %v3597, %v3588
    %v3601 = vsel %vm205, %v3599, %v3589
    %s3602 = sld [smem:[#allocation3 + $0xae]]
    %v3603 = vstv %s3602
    %v3604 = vmul.f32 %v3603, %v3600
    %v3605 = vmul.f32 %v3603, %v3601
    %v3606 = vadd.f32 %v3544, %v3604
    %v3607 = vadd.f32 %v3545, %v3605
    %s3608 = sld [smem:[#allocation3 + $0xd2]]
    %v3609 = vstv %s3608
    %v3610 = vmul.f32 %v3609, %v3600
    %v3611 = vmul.f32 %v3609, %v3601
    %v3612 = vadd.f32 %v3558, %v3610
    %v3613 = vadd.f32 %v3559, %v3611
    %s3614 = sld [smem:[#allocation3 + $0xf6]]
    %v3615 = vstv %s3614
    %v3616 = vmul.f32 %v3615, %v3600
    %v3617 = vmul.f32 %v3615, %v3601
    %v3618 = vadd.f32 %v3572, %v3616
    %v3619 = vadd.f32 %v3573, %v3617
    %s3620 = sld [smem:[#allocation3 + $0x11a]]
    %v3621 = vstv %s3620
    %v3622 = vmul.f32 %v3621, %v3600
    %v3623 = vmul.f32 %v3621, %v3601
    %v3624 = vadd.f32 %v3586, %v3622
    %v3625 = vadd.f32 %v3587, %v3623
    %s3626 = sld [smem:[#allocation3 + $0xaf]]
    %v3627 = vstv %s3626
    %v3628 = vmul.f32 %v3627, %v3588
    %v3629 = vmul.f32 %v3627, %v3589
    %3632 = vrot.lane.b32.xlu0 %v3628, 35
    %v3633 = vpop.permute.xlu0 %3632
    %3634 = vrot.lane.b32.xlu0 %v3629, 35
    %v3635 = vpop.permute.xlu0 %3634
    %v3638 = vadd.f32 %v3606, %v3633
    %v3639 = vadd.f32 %v3607, %v3635
    %s3640 = sld [smem:[#allocation3 + $0xd3]]
    %v3641 = vstv %s3640
    %v3642 = vmul.f32 %v3641, %v3588
    %v3643 = vmul.f32 %v3641, %v3589
    %3646 = vrot.lane.b32.xlu0 %v3642, 35
    %v3647 = vpop.permute.xlu0 %3646
    %3648 = vrot.lane.b32.xlu0 %v3643, 35
    %v3649 = vpop.permute.xlu0 %3648
    %v3652 = vadd.f32 %v3612, %v3647
    %v3653 = vadd.f32 %v3613, %v3649
    %s3654 = sld [smem:[#allocation3 + $0xf7]]
    %v3655 = vstv %s3654
    %v3656 = vmul.f32 %v3655, %v3588
    %v3657 = vmul.f32 %v3655, %v3589
    %3660 = vrot.lane.b32.xlu0 %v3656, 35
    %v3661 = vpop.permute.xlu0 %3660
    %3662 = vrot.lane.b32.xlu0 %v3657, 35
    %v3663 = vpop.permute.xlu0 %3662
    %v3666 = vadd.f32 %v3618, %v3661
    %v3667 = vadd.f32 %v3619, %v3663
    %s3668 = sld [smem:[#allocation3 + $0x11b]]
    %v3669 = vstv %s3668
    %v3670 = vmul.f32 %v3669, %v3588
    %v3671 = vmul.f32 %v3669, %v3589
    %3674 = vrot.lane.b32.xlu0 %v3670, 35
    %v3675 = vpop.permute.xlu0 %3674
    %3676 = vrot.lane.b32.xlu0 %v3671, 35
    %v3677 = vpop.permute.xlu0 %3676
    %v3680 = vadd.f32 %v3624, %v3675
    %v3681 = vadd.f32 %v3625, %v3677
    %s3682 = sld [smem:[#allocation3 + $0xb0]]
    %v3683 = vstv %s3682
    %v3684 = vmul.f32 %v3683, %v3600
    %v3685 = vmul.f32 %v3683, %v3601
    %3688 = vrot.lane.b32.xlu0 %v3684, 34
    %v3689 = vpop.permute.xlu0 %3688
    %3690 = vrot.lane.b32.xlu0 %v3685, 34
    %v3691 = vpop.permute.xlu0 %3690
    %v3694 = vadd.f32 %v3638, %v3689
    %v3695 = vadd.f32 %v3639, %v3691
    %s3696 = sld [smem:[#allocation3 + $0xd4]]
    %v3697 = vstv %s3696
    %v3698 = vmul.f32 %v3697, %v3600
    %v3699 = vmul.f32 %v3697, %v3601
    %3702 = vrot.lane.b32.xlu0 %v3698, 34
    %v3703 = vpop.permute.xlu0 %3702
    %3704 = vrot.lane.b32.xlu0 %v3699, 34
    %v3705 = vpop.permute.xlu0 %3704
    %v3708 = vadd.f32 %v3652, %v3703
    %v3709 = vadd.f32 %v3653, %v3705
    %s3710 = sld [smem:[#allocation3 + $0xf8]]
    %v3711 = vstv %s3710
    %v3712 = vmul.f32 %v3711, %v3600
    %v3713 = vmul.f32 %v3711, %v3601
    %3716 = vrot.lane.b32.xlu0 %v3712, 34
    %v3717 = vpop.permute.xlu0 %3716
    %3718 = vrot.lane.b32.xlu0 %v3713, 34
    %v3719 = vpop.permute.xlu0 %3718
    %v3722 = vadd.f32 %v3666, %v3717
    %v3723 = vadd.f32 %v3667, %v3719
    %s3724 = sld [smem:[#allocation3 + $0x11c]]
    %v3725 = vstv %s3724
    %v3726 = vmul.f32 %v3725, %v3600
    %v3727 = vmul.f32 %v3725, %v3601
    %3730 = vrot.lane.b32.xlu0 %v3726, 34
    %v3731 = vpop.permute.xlu0 %3730
    %3732 = vrot.lane.b32.xlu0 %v3727, 34
    %v3733 = vpop.permute.xlu0 %3732
    %v3736 = vadd.f32 %v3680, %v3731
    %v3737 = vadd.f32 %v3681, %v3733
    %v3738 = vld [vmem:[%s1548 + $0x2] sm:$0xff]
    %v3739 = vld [vmem:[%s1548 + $0xa] sm:$0xff]
    %3740 = vrot.lane.b32.xlu0 %v3738, 36
    %v3741 = vpop.permute.xlu0 %3740
    %v3742 = vsel %vm205, %v3741, %v3738
    %3743 = vrot.lane.b32.xlu0 %v3739, 36
    %v3744 = vpop.permute.xlu0 %3743
    %v3745 = vsel %vm205, %v3744, %v3739
    %3746 = vrot.lane.b32.xlu0 %v3742, 36
    %v3747 = vpop.permute.xlu0 %3746
    %3748 = vrot.lane.b32.xlu0 %v3745, 36
    %v3749 = vpop.permute.xlu0 %3748
    %v3750 = vsel %vm205, %v3747, %v3738
    %v3751 = vsel %vm205, %v3749, %v3739
    %s3752 = sld [smem:[#allocation3 + $0xb1]]
    %v3753 = vstv %s3752
    %v3754 = vmul.f32 %v3753, %v3750
    %v3755 = vmul.f32 %v3753, %v3751
    %v3756 = vadd.f32 %v3694, %v3754
    %v3757 = vadd.f32 %v3695, %v3755
    %s3758 = sld [smem:[#allocation3 + $0xd5]]
    %v3759 = vstv %s3758
    %v3760 = vmul.f32 %v3759, %v3750
    %v3761 = vmul.f32 %v3759, %v3751
    %v3762 = vadd.f32 %v3708, %v3760
    %v3763 = vadd.f32 %v3709, %v3761
    %s3764 = sld [smem:[#allocation3 + $0xf9]]
    %v3765 = vstv %s3764
    %v3766 = vmul.f32 %v3765, %v3750
    %v3767 = vmul.f32 %v3765, %v3751
    %v3768 = vadd.f32 %v3722, %v3766
    %v3769 = vadd.f32 %v3723, %v3767
    %s3770 = sld [smem:[#allocation3 + $0x11d]]
    %v3771 = vstv %s3770
    %v3772 = vmul.f32 %v3771, %v3750
    %v3773 = vmul.f32 %v3771, %v3751
    %v3774 = vadd.f32 %v3736, %v3772
    %v3775 = vadd.f32 %v3737, %v3773
    %s3776 = sld [smem:[#allocation3 + $0xb2]]
    %v3777 = vstv %s3776
    %v3778 = vmul.f32 %v3777, %v3738
    %v3779 = vmul.f32 %v3777, %v3739
    %3782 = vrot.lane.b32.xlu0 %v3778, 35
    %v3783 = vpop.permute.xlu0 %3782
    %3784 = vrot.lane.b32.xlu0 %v3779, 35
    %v3785 = vpop.permute.xlu0 %3784
    %v3788 = vadd.f32 %v3756, %v3783
    %v3789 = vadd.f32 %v3757, %v3785
    %s3790 = sld [smem:[#allocation3 + $0xd6]]
    %v3791 = vstv %s3790
    %v3792 = vmul.f32 %v3791, %v3738
    %v3793 = vmul.f32 %v3791, %v3739
    %3796 = vrot.lane.b32.xlu0 %v3792, 35
    %v3797 = vpop.permute.xlu0 %3796
    %3798 = vrot.lane.b32.xlu0 %v3793, 35
    %v3799 = vpop.permute.xlu0 %3798
    %v3802 = vadd.f32 %v3762, %v3797
    %v3803 = vadd.f32 %v3763, %v3799
    %s3804 = sld [smem:[#allocation3 + $0xfa]]
    %v3805 = vstv %s3804
    %v3806 = vmul.f32 %v3805, %v3738
    %v3807 = vmul.f32 %v3805, %v3739
    %3810 = vrot.lane.b32.xlu0 %v3806, 35
    %v3811 = vpop.permute.xlu0 %3810
    %3812 = vrot.lane.b32.xlu0 %v3807, 35
    %v3813 = vpop.permute.xlu0 %3812
    %v3816 = vadd.f32 %v3768, %v3811
    %v3817 = vadd.f32 %v3769, %v3813
    %s3818 = sld [smem:[#allocation3 + $0x11e]]
    %v3819 = vstv %s3818
    %v3820 = vmul.f32 %v3819, %v3738
    %v3821 = vmul.f32 %v3819, %v3739
    %3824 = vrot.lane.b32.xlu0 %v3820, 35
    %v3825 = vpop.permute.xlu0 %3824
    %3826 = vrot.lane.b32.xlu0 %v3821, 35
    %v3827 = vpop.permute.xlu0 %3826
    %v3830 = vadd.f32 %v3774, %v3825
    %v3831 = vadd.f32 %v3775, %v3827
    %s3832 = sld [smem:[#allocation3 + $0xb3]]
    %v3833 = vstv %s3832
    %v3834 = vmul.f32 %v3833, %v3750
    %v3835 = vmul.f32 %v3833, %v3751
    %3838 = vrot.lane.b32.xlu0 %v3834, 34
    %v3839 = vpop.permute.xlu0 %3838
    %3840 = vrot.lane.b32.xlu0 %v3835, 34
    %v3841 = vpop.permute.xlu0 %3840
    %v3844 = vadd.f32 %v3788, %v3839
    %v3845 = vadd.f32 %v3789, %v3841
    %s3846 = sld [smem:[#allocation3 + $0xd7]]
    %v3847 = vstv %s3846
    %v3848 = vmul.f32 %v3847, %v3750
    %v3849 = vmul.f32 %v3847, %v3751
    %3852 = vrot.lane.b32.xlu0 %v3848, 34
    %v3853 = vpop.permute.xlu0 %3852
    %3854 = vrot.lane.b32.xlu0 %v3849, 34
    %v3855 = vpop.permute.xlu0 %3854
    %v3858 = vadd.f32 %v3802, %v3853
    %v3859 = vadd.f32 %v3803, %v3855
    %s3860 = sld [smem:[#allocation3 + $0xfb]]
    %v3861 = vstv %s3860
    %v3862 = vmul.f32 %v3861, %v3750
    %v3863 = vmul.f32 %v3861, %v3751
    %3866 = vrot.lane.b32.xlu0 %v3862, 34
    %v3867 = vpop.permute.xlu0 %3866
    %3868 = vrot.lane.b32.xlu0 %v3863, 34
    %v3869 = vpop.permute.xlu0 %3868
    %v3872 = vadd.f32 %v3816, %v3867
    %v3873 = vadd.f32 %v3817, %v3869
    %s3874 = sld [smem:[#allocation3 + $0x11f]]
    %v3875 = vstv %s3874
    %v3876 = vmul.f32 %v3875, %v3750
    %v3877 = vmul.f32 %v3875, %v3751
    %3880 = vrot.lane.b32.xlu0 %v3876, 34
    %v3881 = vpop.permute.xlu0 %3880
    %3882 = vrot.lane.b32.xlu0 %v3877, 34
    %v3883 = vpop.permute.xlu0 %3882
    %v3886 = vadd.f32 %v3830, %v3881
    %v3887 = vadd.f32 %v3831, %v3883
    %s3888 = sld [smem:[#allocation5 + $0x4]]
    %v3889 = vstv %s3888
    %v3890 = vadd.f32 %v3844, %v3889
    %v3891 = vadd.f32 %v3845, %v3889
    %v3892 = vmax.f32 %v3890, 0.0
    %v3893 = vmax.f32 %v3891, 0.0
    %s3894 = sld [smem:[#allocation5 + $0x5]]
    %v3895 = vstv %s3894
    %v3896 = vadd.f32 %v3858, %v3895
    %v3897 = vadd.f32 %v3859, %v3895
    %v3898 = vmax.f32 %v3896, 0.0
    %v3899 = vmax.f32 %v3897, 0.0
    %s3900 = sld [smem:[#allocation5 + $0x6]]
    %v3901 = vstv %s3900
    %v3902 = vadd.f32 %v3872, %v3901
    %v3903 = vadd.f32 %v3873, %v3901
    %v3904 = vmax.f32 %v3902, 0.0
    %v3905 = vmax.f32 %v3903, 0.0
    %s3906 = sld [smem:[#allocation5 + $0x7]]
    %v3907 = vstv %s3906
    %v3908 = vadd.f32 %v3886, %v3907
    %v3909 = vadd.f32 %v3887, %v3907
    %v3910 = vmax.f32 %v3908, 0.0
    %v3911 = vmax.f32 %v3909, 0.0
    %3914 = vrot.lane.b32.xlu0 %v3892, 93
    %v3915 = vpop.permute.xlu0 %3914
    %3916 = vrot.lane.b32.xlu0 %v3893, 93
    %v3917 = vpop.permute.xlu0 %3916
    %3920 = vst.msk [vmem:[%s3] sm:$0xff] %vm2031, %v3915
    %3921 = vst.msk [vmem:[%s3 + $0x8] sm:$0xff] %vm2031, %v3917
    %3924 = vrot.lane.b32.xlu0 %v3898, 93
    %v3925 = vpop.permute.xlu0 %3924
    %3926 = vrot.lane.b32.xlu0 %v3899, 93
    %v3927 = vpop.permute.xlu0 %3926
    %s3930 = scalar_lea.vmem %s3, 16
    %3931 = vst.msk [vmem:[%s3930] sm:$0xff] %vm2031, %v3925
    %3932 = vst.msk [vmem:[%s3930 + $0x8] sm:$0xff] %vm2031, %v3927
    %3935 = vrot.lane.b32.xlu0 %v3904, 93
    %v3936 = vpop.permute.xlu0 %3935
    %3937 = vrot.lane.b32.xlu0 %v3905, 93
    %v3938 = vpop.permute.xlu0 %3937
    %s3941 = scalar_lea.vmem %s3, 32
    %3942 = vst.msk [vmem:[%s3941] sm:$0xff] %vm2031, %v3936
    %3943 = vst.msk [vmem:[%s3941 + $0x8] sm:$0xff] %vm2031, %v3938
    %3946 = vrot.lane.b32.xlu0 %v3910, 93
    %v3947 = vpop.permute.xlu0 %3946
    %3948 = vrot.lane.b32.xlu0 %v3911, 93
    %v3949 = vpop.permute.xlu0 %3948
    %s3952 = scalar_lea.vmem %s3, 48
    %3953 = vst.msk [vmem:[%s3952] sm:$0xff] %vm2031, %v3947
    %3954 = vst.msk [vmem:[%s3952 + $0x8] sm:$0xff] %vm2031, %v3949
    // Predicated region
    $region22: #{recurrent_block.1} parent=1 // pred_check
      _
    $region23: #{recurrent_block.1} parent=1 // pred_check_branch
      %3956 = sbr.rel (0) target = $region25
    $region24: #{recurrent_block.1} parent=1 // pred_region
      _
    $region25: #{recurrent_block.1} parent=1 // pred_fallthru
      _
    // Predicated region
    $region26: #{recurrent_block.1} parent=1 // pred_check
      _
    $region27: #{recurrent_block.1} parent=1 // pred_check_branch
      %3958 = sbr.rel (0) target = $region29
    $region28: #{recurrent_block.1} parent=1 // pred_region
      _
    $region29: #{recurrent_block.1} parent=1 // pred_fallthru
      _
    %3959 = vsyncpa [#allocation4], 1
    %3960 = vsyncpa [#allocation6], 1

</llo_original>
